<compile_context>
chip_gen: v7x
topology: tpu7x:2x2x1
jax: 0.10.0
libtpu: 0.0.40
codegen_flags: <defaults>
</compile_context>

<pallas_src>
import math
import functools

import jax
import jax.numpy as jnp
from jax import lax
from jax.experimental import pallas as pl
from jax.experimental.pallas import tpu as pltpu

_NEG = -1e9  # stand-in for -inf; exp(_NEG - max) underflows to exactly 0 in f32


# --------------------------- fused whole-model kernel ---------------------------

def _fused_decoder_kernel(
        # inputs constant across layers
        x0_ref, mem_ref, self_bias_ref, cross_bias_ref,
        # per-layer stacked parameters (leading dim = layer, selected by grid)
        sa_in_w_ref, sa_in_b_ref, sa_out_w_ref, sa_out_b_ref, ln1_g_ref, ln1_b_ref,
        ca_in_w_ref, ca_in_b_ref, ca_out_w_ref, ca_out_b_ref, ln2_g_ref, ln2_b_ref,
        ff_w1_ref, ff_b1_ref, ff_w2_ref, ff_b2_ref, ln3_g_ref, ln3_b_ref,
        # outputs
        x_out_ref, attw_ref,
        # scratch
        x_scr,
        *, S, B, Mk, H, eps):
    layer = pl.program_id(0)
    D = x_out_ref.shape[-1]
    Dh = D // H
    scale = 1.0 / math.sqrt(Dh)

    @pl.when(layer == 0)
    def _():
        x_scr[...] = x0_ref[...].astype(jnp.float32)

    x = x_scr[...]                               # [B*S, D]  (batch-major rows)
    mem = mem_ref[...].astype(jnp.float32)       # [B*Mk, D]
    self_bias = self_bias_ref[...]               # [B*S, B*S]  additive
    cross_bias = cross_bias_ref[...]             # [B*S, B*Mk] additive

    def layer_norm(v, g_ref, b_ref):
        mu = jnp.mean(v, axis=-1, keepdims=True)
        var = jnp.mean((v - mu) ** 2, axis=-1, keepdims=True)
        return (v - mu) * lax.rsqrt(var + eps) * g_ref[0] + b_ref[0]

    def heads_attention(q, k, v, bias, want_probs):
        # q: [Rq, D], k/v: [Rk, D].  bias already encodes the per-batch
        # block-diagonal structure plus causal / key-padding masks, so all
        # batches and heads run through full-width 2-D matmuls.
        head_outs = []
        p_sum = None
        for h in range(H):
            sl = slice(h * Dh, (h + 1) * Dh)
            sc = lax.dot_general(q[:, sl], k[:, sl],
                                 (((1,), (1,)), ((), ())),
                                 preferred_element_type=jnp.float32)
            sc = sc * scale + bias
            sc = sc - jnp.max(sc, axis=-1, keepdims=True)
            e = jnp.exp(sc)
            p = e / jnp.sum(e, axis=-1, keepdims=True)
            head_outs.append(jnp.dot(p, v[:, sl],
                                     preferred_element_type=jnp.float32))
            if want_probs:
                p_sum = p if p_sum is None else p_sum + p
        out = jnp.concatenate(head_outs, axis=-1)          # [Rq, D]
        probs = None if p_sum is None else p_sum * (1.0 / H)
        return out, probs

    # ---------------- self-attention + residual + LayerNorm1 ----------------
    qkv = jnp.dot(x, sa_in_w_ref[0],
                  preferred_element_type=jnp.float32) + sa_in_b_ref[0]   # [B*S, 3D]
    sa_heads, _ = heads_attention(qkv[:, :D], qkv[:, D:2 * D], qkv[:, 2 * D:],
                                  self_bias, want_probs=False)
    sa = jnp.dot(sa_heads, sa_out_w_ref[0],
                 preferred_element_type=jnp.float32) + sa_out_b_ref[0]
    x = layer_norm(x + sa, ln1_g_ref, ln1_b_ref)

    # ---------------- cross-attention + residual + LayerNorm2 ----------------
    ca_w = ca_in_w_ref[0]
    ca_b = ca_in_b_ref[0]
    q = jnp.dot(x, ca_w[:, :D], preferred_element_type=jnp.float32) + ca_b[:, :D]
    kv = jnp.dot(mem, ca_w[:, D:], preferred_element_type=jnp.float32) + ca_b[:, D:]
    ca_heads, p_avg = heads_attention(q, kv[:, :D], kv[:, D:], cross_bias,
                                      want_probs=True)
    ca = jnp.dot(ca_heads, ca_out_w_ref[0],
                 preferred_element_type=jnp.float32) + ca_out_b_ref[0]
    x = layer_norm(x + ca, ln2_g_ref, ln2_b_ref)

    # head-averaged cross-attention weights: per-batch diagonal blocks of p_avg
    for b in range(B):
        attw_ref[0, b, :, :] = p_avg[b * S:(b + 1) * S,
                                     b * Mk:(b + 1) * Mk].astype(attw_ref.dtype)

    # ---------------- feed-forward + residual + LayerNorm3 ----------------
    h1 = jnp.dot(x, ff_w1_ref[0], preferred_element_type=jnp.float32) + ff_b1_ref[0]
    h1 = jnp.maximum(h1, 0.0)
    ff = jnp.dot(h1, ff_w2_ref[0], preferred_element_type=jnp.float32) + ff_b2_ref[0]
    x = layer_norm(x + ff, ln3_g_ref, ln3_b_ref)

    x_scr[...] = x                                # carry to next layer (VMEM)
    x_out_ref[...] = x.astype(x_out_ref.dtype)    # resident output block


# ------------------------------ parameter packing ------------------------------

_PARAM_ORDER = ('sa_in_w', 'sa_in_b', 'sa_out_w', 'sa_out_b', 'ln1_g', 'ln1_b',
                'ca_in_w', 'ca_in_b', 'ca_out_w', 'ca_out_b', 'ln2_g', 'ln2_b',
                'ff_w1', 'ff_b1', 'ff_w2', 'ff_b2', 'ln3_g', 'ln3_b')


def pack_params(layer_params):
    """One-time conversion of per-layer PyTorch-layout params: stack over layers,
    pre-transpose weights to [K, N], reshape 1-D params to [1, N]."""
    def t(key):   # nn.Linear weight [N, K] -> [K, N]
        return jnp.stack([jnp.asarray(p[key]).T for p in layer_params], axis=0)

    def r(key):   # bias / LN param [N] -> [1, N]
        return jnp.stack([jnp.asarray(p[key]).reshape(1, -1) for p in layer_params],
                         axis=0)

    return {
        'sa_in_w': t('sa_in_w'), 'sa_in_b': r('sa_in_b'),
        'sa_out_w': t('sa_out_w'), 'sa_out_b': r('sa_out_b'),
        'ln1_g': r('ln1_g'), 'ln1_b': r('ln1_b'),
        'ca_in_w': t('ca_in_w'), 'ca_in_b': r('ca_in_b'),
        'ca_out_w': t('ca_out_w'), 'ca_out_b': r('ca_out_b'),
        'ln2_g': r('ln2_g'), 'ln2_b': r('ln2_b'),
        'ff_w1': t('ff_w1'), 'ff_b1': r('ff_b1'),
        'ff_w2': t('ff_w2'), 'ff_b2': r('ff_b2'),
        'ln3_g': r('ln3_g'), 'ln3_b': r('ln3_b'),
    }


# ------------------------------ model forward (glue) ------------------------------

def positional_encoding(x, d_model):
    """PositionalEncoding.forward (dropout = identity in eval)."""
    S = x.shape[0]
    position = jnp.arange(S, dtype=jnp.float32)[:, None]
    div_term = jnp.exp(jnp.arange(0, d_model, 2, dtype=jnp.float32)
                       * (-math.log(10000.0) / d_model))
    pe = jnp.zeros((S, 1, d_model), jnp.float32)
    pe = pe.at[:, 0, 0::2].set(jnp.sin(position * div_term))
    pe = pe.at[:, 0, 1::2].set(jnp.cos(position * div_term))
    return x + pe


def transformer_model_decoder(packed, decoder_input, encoder_output,
                              tgt_mask=None, memory_key_padding_mask=None,
                              *, nhead, need_weights=True, eps=1e-5):
    S, B, D = decoder_input.shape
    Mk = encoder_output.shape[0]
    L = packed['sa_in_w'].shape[0]

    # Positional encoding, then relayout [S,B,D] -> batch-major [B*S, D] so the
    # fused kernel only touches 2-D lane-contiguous tiles.
    x = positional_encoding(decoder_input.astype(jnp.float32), D)
    x2d = x.transpose(1, 0, 2).reshape(B * S, D)
    mem2d = encoder_output.astype(jnp.float32).transpose(1, 0, 2).reshape(B * Mk, D)

    # Compact additive biases, built once per forward (not per B*H grid step):
    # batch block-diagonal structure + causal mask + key-padding mask.
    if tgt_mask is None:
        tgt_mask = jnp.zeros((S, S), jnp.float32)
    tgt_mask = tgt_mask.astype(jnp.float32)
    row_b = jnp.repeat(jnp.arange(B), S)                       # [B*S]
    self_bias = jnp.where(row_b[:, None] == row_b[None, :],
                          jnp.tile(tgt_mask, (B, B)), _NEG)    # [B*S, B*S]

    if memory_key_padding_mask is None:
        pad_bias = jnp.zeros((B, Mk), jnp.float32)
    else:
        pad_bias = jnp.where(memory_key_padding_mask, _NEG, 0.0).astype(jnp.float32)
    col_b = jnp.repeat(jnp.arange(B), Mk)                      # [B*Mk]
    cross_bias = jnp.where(row_b[:, None] == col_b[None, :],
                           pad_bias.reshape(-1)[None, :], _NEG)  # [B*S, B*Mk]

    ordered = [packed[k] for k in _PARAM_ORDER]

    def const_spec(shape):
        return pl.BlockSpec(shape, lambda l: (0,) * len(shape))

    def layer_spec(arr):
        bs = (1,) + tuple(arr.shape[1:])
        zeros = (0,) * (len(bs) - 1)
        return pl.BlockSpec(bs, lambda l: (l,) + zeros)

    grid_spec = pltpu.PrefetchScalarGridSpec(
        num_scalar_prefetch=0,
        grid=(L,),
        in_specs=[const_spec((B * S, D)),
                  const_spec((B * Mk, D)),
                  const_spec((B * S, B * S)),
                  const_spec((B * S, B * Mk))]
                 + [layer_spec(a) for a in ordered],
        out_specs=(pl.BlockSpec((B * S, D), lambda l: (0, 0)),
                   pl.BlockSpec((1, B, S, Mk), lambda l: (l, 0, 0, 0))),
        scratch_shapes=[pltpu.VMEM((B * S, D), jnp.float32)],
    )

    kernel = functools.partial(_fused_decoder_kernel,
                               S=S, B=B, Mk=Mk, H=nhead, eps=eps)
    x_out, attw = pl.pallas_call(
        kernel,
        out_shape=(jax.ShapeDtypeStruct((B * S, D), jnp.float32),
                   jax.ShapeDtypeStruct((L, B, S, Mk), jnp.float32)),
        grid_spec=grid_spec,
        compiler_params=pltpu.CompilerParams(
            dimension_semantics=("arbitrary",)),   # layers are sequential
    )(x2d, mem2d, self_bias, cross_bias, *ordered)

    out = x_out.reshape(B, S, D).transpose(1, 0, 2)   # back to [S, B, D]
    # TODO(synk): TransformerDecoderCustom source is not provided; we return the
    # per-layer head-averaged cross-attention weights when need_weights, else None.
    if need_weights:
        return out, attw
    return out, None


# ---------------------------------- param init ----------------------------------

def init_params(key, d_model, nhead, d_hid, nlayers):
    def dense(k, shape, scale=0.02):
        return scale * jax.random.normal(k, shape, dtype=jnp.float32)

    params = []
    for _ in range(nlayers):
        key, *ks = jax.random.split(key, 7)
        params.append({
            # self-attention (nn.MultiheadAttention parameter shapes)
            'sa_in_w': dense(ks[0], (3 * d_model, d_model)),
            'sa_in_b': jnp.zeros((3 * d_model,), jnp.float32),
            'sa_out_w': dense(ks[1], (d_model, d_model)),
            'sa_out_b': jnp.zeros((d_model,), jnp.float32),
            # cross-attention
            'ca_in_w': dense(ks[2], (3 * d_model, d_model)),
            'ca_in_b': jnp.zeros((3 * d_model,), jnp.float32),
            'ca_out_w': dense(ks[3], (d_model, d_model)),
            'ca_out_b': jnp.zeros((d_model,), jnp.float32),
            # feed-forward
            'ff_w1': dense(ks[4], (d_hid, d_model)),
            'ff_b1': jnp.zeros((d_hid,), jnp.float32),
            'ff_w2': dense(ks[5], (d_model, d_hid)),
            'ff_b2': jnp.zeros((d_model,), jnp.float32),
            # layer norms
            'ln1_g': jnp.ones((d_model,), jnp.float32),
            'ln1_b': jnp.zeros((d_model,), jnp.float32),
            'ln2_g': jnp.ones((d_model,), jnp.float32),
            'ln2_b': jnp.zeros((d_model,), jnp.float32),
            'ln3_g': jnp.ones((d_model,), jnp.float32),
            'ln3_b': jnp.zeros((d_model,), jnp.float32),
        })
    return params


# ------------------------------------- main -------------------------------------

if __name__ == "__main__":
    d_model, nhead, d_hid, nlayers = 32, 4, 64, 2
    S, B, Mk = 8, 2, 12

    key = jax.random.PRNGKey(0)
    k1, k2, k3 = jax.random.split(key, 3)
    decoder_input = jax.random.normal(k1, (S, B, d_model), jnp.float32)
    encoder_output = jax.random.normal(k2, (Mk, B, d_model), jnp.float32)

    # causal additive mask (like nn.Transformer.generate_square_subsequent_mask)
    tgt_mask = jnp.where(jnp.triu(jnp.ones((S, S), bool), k=1),
                         _NEG, 0.0).astype(jnp.float32)
    # memory padding: batch 0 unpadded, batch 1 has its last 3 memory slots padded
    memory_key_padding_mask = jnp.array(
        [[False] * Mk, [False] * (Mk - 3) + [True] * 3])

    params = init_params(k3, d_model, nhead, d_hid, nlayers)
    packed = pack_params(params)   # one-time transpose/stack, outside the hot path

    fwd = jax.jit(functools.partial(transformer_model_decoder,
                                    nhead=nhead, need_weights=True))
    out, att = fwd(packed, decoder_input, encoder_output,
                   tgt_mask=tgt_mask,
                   memory_key_padding_mask=memory_key_padding_mask)
    jax.block_until_ready((out, att))

    assert out.shape == (S, B, d_model)
    assert att.shape == (nlayers, B, S, Mk)
    assert bool(jnp.all(jnp.isfinite(out))) and bool(jnp.all(jnp.isfinite(att)))
    # attention rows are probability distributions
    assert bool(jnp.allclose(jnp.sum(att, axis=-1), 1.0, atol=1e-4))
    print("KERNEL_OK")
</pallas_src>

<mosaic_0001>
module attributes {stable_mosaic.version = 11 : i64} {
  func.func @_fused_decoder_kernel(%arg0: i32, %arg1: memref<16x32xf32, #tpu.memory_space<vmem>>, %arg2: memref<24x32xf32, #tpu.memory_space<vmem>>, %arg3: memref<16x16xf32, #tpu.memory_space<vmem>>, %arg4: memref<16x24xf32, #tpu.memory_space<vmem>>, %arg5: memref<1x32x96xf32, #tpu.memory_space<vmem>>, %arg6: memref<1x1x96xf32, #tpu.memory_space<vmem>>, %arg7: memref<1x32x32xf32, #tpu.memory_space<vmem>>, %arg8: memref<1x1x32xf32, #tpu.memory_space<vmem>>, %arg9: memref<1x1x32xf32, #tpu.memory_space<vmem>>, %arg10: memref<1x1x32xf32, #tpu.memory_space<vmem>>, %arg11: memref<1x32x96xf32, #tpu.memory_space<vmem>>, %arg12: memref<1x1x96xf32, #tpu.memory_space<vmem>>, %arg13: memref<1x32x32xf32, #tpu.memory_space<vmem>>, %arg14: memref<1x1x32xf32, #tpu.memory_space<vmem>>, %arg15: memref<1x1x32xf32, #tpu.memory_space<vmem>>, %arg16: memref<1x1x32xf32, #tpu.memory_space<vmem>>, %arg17: memref<1x32x64xf32, #tpu.memory_space<vmem>>, %arg18: memref<1x1x64xf32, #tpu.memory_space<vmem>>, %arg19: memref<1x64x32xf32, #tpu.memory_space<vmem>>, %arg20: memref<1x1x32xf32, #tpu.memory_space<vmem>>, %arg21: memref<1x1x32xf32, #tpu.memory_space<vmem>>, %arg22: memref<1x1x32xf32, #tpu.memory_space<vmem>>, %arg23: memref<16x32xf32, #tpu.memory_space<vmem>>, %arg24: memref<1x2x8x12xf32, #tpu.memory_space<vmem>>, %arg25: memref<16x32xf32, #tpu.memory_space<vmem>>) attributes {dimension_semantics = [#tpu.dimension_semantics<arbitrary>], iteration_bounds = array<i64: 2>, scalar_prefetch = 0 : i64, scratch_operands = 1 : i64, tpu.core_type = #tpu.core_type<tc>, window_params = [{pipeline_mode = #tpu.pipeline_mode<synchronous>, transform_indices = @transform_0, window_bounds = array<i64: 16, 32>}, {pipeline_mode = #tpu.pipeline_mode<synchronous>, transform_indices = @transform_1, window_bounds = array<i64: 24, 32>}, {pipeline_mode = #tpu.pipeline_mode<synchronous>, transform_indices = @transform_2, window_bounds = array<i64: 16, 16>}, {pipeline_mode = #tpu.pipeline_mode<synchronous>, transform_indices = @transform_3, window_bounds = array<i64: 16, 24>}, {transform_indices = @transform_4, window_bounds = array<i64: 1, 32, 96>}, {transform_indices = @transform_5, window_bounds = array<i64: 1, 1, 96>}, {transform_indices = @transform_6, window_bounds = array<i64: 1, 32, 32>}, {transform_indices = @transform_7, window_bounds = array<i64: 1, 1, 32>}, {transform_indices = @transform_8, window_bounds = array<i64: 1, 1, 32>}, {transform_indices = @transform_9, window_bounds = array<i64: 1, 1, 32>}, {transform_indices = @transform_10, window_bounds = array<i64: 1, 32, 96>}, {transform_indices = @transform_11, window_bounds = array<i64: 1, 1, 96>}, {transform_indices = @transform_12, window_bounds = array<i64: 1, 32, 32>}, {transform_indices = @transform_13, window_bounds = array<i64: 1, 1, 32>}, {transform_indices = @transform_14, window_bounds = array<i64: 1, 1, 32>}, {transform_indices = @transform_15, window_bounds = array<i64: 1, 1, 32>}, {transform_indices = @transform_16, window_bounds = array<i64: 1, 32, 64>}, {transform_indices = @transform_17, window_bounds = array<i64: 1, 1, 64>}, {transform_indices = @transform_18, window_bounds = array<i64: 1, 64, 32>}, {transform_indices = @transform_19, window_bounds = array<i64: 1, 1, 32>}, {transform_indices = @transform_20, window_bounds = array<i64: 1, 1, 32>}, {transform_indices = @transform_21, window_bounds = array<i64: 1, 1, 32>}, {pipeline_mode = #tpu.pipeline_mode<synchronous>, transform_indices = @transform_22, window_bounds = array<i64: 16, 32>}, {transform_indices = @transform_23, window_bounds = array<i64: 1, 2, 8, 12>}]} {
    %c0_i32 = arith.constant 0 : i32
    %0 = arith.cmpi eq, %arg0, %c0_i32 : i32
    %1 = arith.extui %0 : i1 to i32
    %c0_i32_0 = arith.constant 0 : i32
    %2 = arith.cmpi ne, %1, %c0_i32_0 : i32
    scf.if %2 {
      %c0_136 = arith.constant 0 : index
      %c0_137 = arith.constant 0 : index
      %297 = vector.load %arg1[%c0_136, %c0_137] : memref<16x32xf32, #tpu.memory_space<vmem>>, vector<16x32xf32>
      %c0_138 = arith.constant 0 : index
      %c0_139 = arith.constant 0 : index
      %298 = vector.load %arg25[%c0_138, %c0_139] : memref<16x32xf32, #tpu.memory_space<vmem>>, vector<16x32xf32>
      tpu.vector_store %arg25[%c0_138, %c0_139], %297 {strides = array<i32>} : memref<16x32xf32, #tpu.memory_space<vmem>>, vector<16x32xf32>,
    } else {
    }
    %c0 = arith.constant 0 : index
    %c0_1 = arith.constant 0 : index
    %3 = vector.load %arg25[%c0, %c0_1] : memref<16x32xf32, #tpu.memory_space<vmem>>, vector<16x32xf32>
    %c0_2 = arith.constant 0 : index
    %c0_3 = arith.constant 0 : index
    %4 = vector.load %arg2[%c0_2, %c0_3] : memref<24x32xf32, #tpu.memory_space<vmem>>, vector<24x32xf32>
    %c0_4 = arith.constant 0 : index
    %c0_5 = arith.constant 0 : index
    %5 = vector.load %arg3[%c0_4, %c0_5] : memref<16x16xf32, #tpu.memory_space<vmem>>, vector<16x16xf32>
    %c0_6 = arith.constant 0 : index
    %c0_7 = arith.constant 0 : index
    %6 = vector.load %arg4[%c0_6, %c0_7] : memref<16x24xf32, #tpu.memory_space<vmem>>, vector<16x24xf32>
    %c0_8 = arith.constant 0 : index
    %c0_9 = arith.constant 0 : index
    %c0_10 = arith.constant 0 : index
    %7 = vector.load %arg5[%c0_8, %c0_9, %c0_10] : memref<1x32x96xf32, #tpu.memory_space<vmem>>, vector<1x32x96xf32>
    %8 = vector.shape_cast %7 : vector<1x32x96xf32> to vector<32x96xf32>
    %cst = arith.constant dense<0.000000e+00> : vector<16x96xf32>
    %9 = tpu.matmul %3, %8, %cst {dimension_numbers = #tpu.dot_dimension_numbers<[1], [0], [0], [1], [0, 0, 1, 1], [], []>} : vector<16x32xf32>, vector<32x96xf32>, vector<16x96xf32> -> vector<16x96xf32>
    %c0_11 = arith.constant 0 : index
    %c0_12 = arith.constant 0 : index
    %c0_13 = arith.constant 0 : index
    %10 = vector.load %arg6[%c0_11, %c0_12, %c0_13] : memref<1x1x96xf32, #tpu.memory_space<vmem>>, vector<1x1x96xf32>
    %11 = vector.shape_cast %10 : vector<1x1x96xf32> to vector<1x96xf32>
    %12 = vector.broadcast %11 : vector<1x96xf32> to vector<16x96xf32>
    %13 = arith.addf %9, %12 : vector<16x96xf32>
    %14 = vector.extract_strided_slice %13 {offsets = [0, 0], sizes = [16, 32], strides = [1, 1]} : vector<16x96xf32> to vector<16x32xf32>
    %15 = vector.extract_strided_slice %13 {offsets = [0, 32], sizes = [16, 32], strides = [1, 1]} : vector<16x96xf32> to vector<16x32xf32>
    %16 = vector.extract_strided_slice %13 {offsets = [0, 64], sizes = [16, 32], strides = [1, 1]} : vector<16x96xf32> to vector<16x32xf32>
    %17 = vector.extract_strided_slice %14 {offsets = [0, 0], sizes = [16, 8], strides = [1, 1]} : vector<16x32xf32> to vector<16x8xf32>
    %18 = vector.extract_strided_slice %15 {offsets = [0, 0], sizes = [16, 8], strides = [1, 1]} : vector<16x32xf32> to vector<16x8xf32>
    %cst_14 = arith.constant dense<0.000000e+00> : vector<16x16xf32>
    %19 = tpu.matmul %17, %18, %cst_14 {dimension_numbers = #tpu.dot_dimension_numbers<[1], [1], [0], [0], [0, 0, 1, 0], [], []>} : vector<16x8xf32>, vector<16x8xf32>, vector<16x16xf32> -> vector<16x16xf32>
    %cst_15 = arith.constant 0.353553385 : f32
    %20 = vector.broadcast %cst_15 : f32 to vector<16x16xf32>
    %21 = arith.mulf %19, %20 : vector<16x16xf32>
    %22 = arith.addf %21, %5 : vector<16x16xf32>
    %cst_16 = arith.constant dense<0xFF800000> : vector<16xf32>
    %23 = vector.multi_reduction <maximumf>, %22, %cst_16 [1] : vector<16x16xf32> to vector<16xf32>
    %24 = vector.shape_cast %23 : vector<16xf32> to vector<16x1xf32>
    %25 = vector.broadcast %24 : vector<16x1xf32> to vector<16x16xf32>
    %26 = arith.subf %22, %25 : vector<16x16xf32>
    %27 = math.exp %26 : vector<16x16xf32>
    %cst_17 = arith.constant dense<0.000000e+00> : vector<16xf32>
    %28 = vector.multi_reduction <add>, %27, %cst_17 [1] : vector<16x16xf32> to vector<16xf32>
    %29 = vector.shape_cast %28 : vector<16xf32> to vector<16x1xf32>
    %30 = vector.broadcast %29 : vector<16x1xf32> to vector<16x16xf32>
    %31 = arith.divf %27, %30 : vector<16x16xf32>
    %32 = vector.extract_strided_slice %16 {offsets = [0, 0], sizes = [16, 8], strides = [1, 1]} : vector<16x32xf32> to vector<16x8xf32>
    %cst_18 = arith.constant dense<0.000000e+00> : vector<16x8xf32>
    %33 = tpu.matmul %31, %32, %cst_18 {dimension_numbers = #tpu.dot_dimension_numbers<[1], [0], [0], [1], [0, 0, 1, 1], [], []>} : vector<16x16xf32>, vector<16x8xf32>, vector<16x8xf32> -> vector<16x8xf32>
    %34 = vector.extract_strided_slice %14 {offsets = [0, 8], sizes = [16, 8], strides = [1, 1]} : vector<16x32xf32> to vector<16x8xf32>
    %35 = vector.extract_strided_slice %15 {offsets = [0, 8], sizes = [16, 8], strides = [1, 1]} : vector<16x32xf32> to vector<16x8xf32>
    %cst_19 = arith.constant dense<0.000000e+00> : vector<16x16xf32>
    %36 = tpu.matmul %34, %35, %cst_19 {dimension_numbers = #tpu.dot_dimension_numbers<[1], [1], [0], [0], [0, 0, 1, 0], [], []>} : vector<16x8xf32>, vector<16x8xf32>, vector<16x16xf32> -> vector<16x16xf32>
    %cst_20 = arith.constant 0.353553385 : f32
    %37 = vector.broadcast %cst_20 : f32 to vector<16x16xf32>
    %38 = arith.mulf %36, %37 : vector<16x16xf32>
    %39 = arith.addf %38, %5 : vector<16x16xf32>
    %cst_21 = arith.constant dense<0xFF800000> : vector<16xf32>
    %40 = vector.multi_reduction <maximumf>, %39, %cst_21 [1] : vector<16x16xf32> to vector<16xf32>
    %41 = vector.shape_cast %40 : vector<16xf32> to vector<16x1xf32>
    %42 = vector.broadcast %41 : vector<16x1xf32> to vector<16x16xf32>
    %43 = arith.subf %39, %42 : vector<16x16xf32>
    %44 = math.exp %43 : vector<16x16xf32>
    %cst_22 = arith.constant dense<0.000000e+00> : vector<16xf32>
    %45 = vector.multi_reduction <add>, %44, %cst_22 [1] : vector<16x16xf32> to vector<16xf32>
    %46 = vector.shape_cast %45 : vector<16xf32> to vector<16x1xf32>
    %47 = vector.broadcast %46 : vector<16x1xf32> to vector<16x16xf32>
    %48 = arith.divf %44, %47 : vector<16x16xf32>
    %49 = vector.extract_strided_slice %16 {offsets = [0, 8], sizes = [16, 8], strides = [1, 1]} : vector<16x32xf32> to vector<16x8xf32>
    %cst_23 = arith.constant dense<0.000000e+00> : vector<16x8xf32>
    %50 = tpu.matmul %48, %49, %cst_23 {dimension_numbers = #tpu.dot_dimension_numbers<[1], [0], [0], [1], [0, 0, 1, 1], [], []>} : vector<16x16xf32>, vector<16x8xf32>, vector<16x8xf32> -> vector<16x8xf32>
    %51 = vector.extract_strided_slice %14 {offsets = [0, 16], sizes = [16, 8], strides = [1, 1]} : vector<16x32xf32> to vector<16x8xf32>
    %52 = vector.extract_strided_slice %15 {offsets = [0, 16], sizes = [16, 8], strides = [1, 1]} : vector<16x32xf32> to vector<16x8xf32>
    %cst_24 = arith.constant dense<0.000000e+00> : vector<16x16xf32>
    %53 = tpu.matmul %51, %52, %cst_24 {dimension_numbers = #tpu.dot_dimension_numbers<[1], [1], [0], [0], [0, 0, 1, 0], [], []>} : vector<16x8xf32>, vector<16x8xf32>, vector<16x16xf32> -> vector<16x16xf32>
    %cst_25 = arith.constant 0.353553385 : f32
    %54 = vector.broadcast %cst_25 : f32 to vector<16x16xf32>
    %55 = arith.mulf %53, %54 : vector<16x16xf32>
    %56 = arith.addf %55, %5 : vector<16x16xf32>
    %cst_26 = arith.constant dense<0xFF800000> : vector<16xf32>
    %57 = vector.multi_reduction <maximumf>, %56, %cst_26 [1] : vector<16x16xf32> to vector<16xf32>
    %58 = vector.shape_cast %57 : vector<16xf32> to vector<16x1xf32>
    %59 = vector.broadcast %58 : vector<16x1xf32> to vector<16x16xf32>
    %60 = arith.subf %56, %59 : vector<16x16xf32>
    %61 = math.exp %60 : vector<16x16xf32>
    %cst_27 = arith.constant dense<0.000000e+00> : vector<16xf32>
    %62 = vector.multi_reduction <add>, %61, %cst_27 [1] : vector<16x16xf32> to vector<16xf32>
    %63 = vector.shape_cast %62 : vector<16xf32> to vector<16x1xf32>
    %64 = vector.broadcast %63 : vector<16x1xf32> to vector<16x16xf32>
    %65 = arith.divf %61, %64 : vector<16x16xf32>
    %66 = vector.extract_strided_slice %16 {offsets = [0, 16], sizes = [16, 8], strides = [1, 1]} : vector<16x32xf32> to vector<16x8xf32>
    %cst_28 = arith.constant dense<0.000000e+00> : vector<16x8xf32>
    %67 = tpu.matmul %65, %66, %cst_28 {dimension_numbers = #tpu.dot_dimension_numbers<[1], [0], [0], [1], [0, 0, 1, 1], [], []>} : vector<16x16xf32>, vector<16x8xf32>, vector<16x8xf32> -> vector<16x8xf32>
    %68 = vector.extract_strided_slice %14 {offsets = [0, 24], sizes = [16, 8], strides = [1, 1]} : vector<16x32xf32> to vector<16x8xf32>
    %69 = vector.extract_strided_slice %15 {offsets = [0, 24], sizes = [16, 8], strides = [1, 1]} : vector<16x32xf32> to vector<16x8xf32>
    %cst_29 = arith.constant dense<0.000000e+00> : vector<16x16xf32>
    %70 = tpu.matmul %68, %69, %cst_29 {dimension_numbers = #tpu.dot_dimension_numbers<[1], [1], [0], [0], [0, 0, 1, 0], [], []>} : vector<16x8xf32>, vector<16x8xf32>, vector<16x16xf32> -> vector<16x16xf32>
    %cst_30 = arith.constant 0.353553385 : f32
    %71 = vector.broadcast %cst_30 : f32 to vector<16x16xf32>
    %72 = arith.mulf %70, %71 : vector<16x16xf32>
    %73 = arith.addf %72, %5 : vector<16x16xf32>
    %cst_31 = arith.constant dense<0xFF800000> : vector<16xf32>
    %74 = vector.multi_reduction <maximumf>, %73, %cst_31 [1] : vector<16x16xf32> to vector<16xf32>
    %75 = vector.shape_cast %74 : vector<16xf32> to vector<16x1xf32>
    %76 = vector.broadcast %75 : vector<16x1xf32> to vector<16x16xf32>
    %77 = arith.subf %73, %76 : vector<16x16xf32>
    %78 = math.exp %77 : vector<16x16xf32>
    %cst_32 = arith.constant dense<0.000000e+00> : vector<16xf32>
    %79 = vector.multi_reduction <add>, %78, %cst_32 [1] : vector<16x16xf32> to vector<16xf32>
    %80 = vector.shape_cast %79 : vector<16xf32> to vector<16x1xf32>
    %81 = vector.broadcast %80 : vector<16x1xf32> to vector<16x16xf32>
    %82 = arith.divf %78, %81 : vector<16x16xf32>
    %83 = vector.extract_strided_slice %16 {offsets = [0, 24], sizes = [16, 8], strides = [1, 1]} : vector<16x32xf32> to vector<16x8xf32>
    %cst_33 = arith.constant dense<0.000000e+00> : vector<16x8xf32>
    %84 = tpu.matmul %82, %83, %cst_33 {dimension_numbers = #tpu.dot_dimension_numbers<[1], [0], [0], [1], [0, 0, 1, 1], [], []>} : vector<16x16xf32>, vector<16x8xf32>, vector<16x8xf32> -> vector<16x8xf32>
    %85 = tpu.concatenate %33, %50, %67, %84 in 1 : vector<16x8xf32>, vector<16x8xf32>, vector<16x8xf32>, vector<16x8xf32> -> vector<16x32xf32>
    %c0_34 = arith.constant 0 : index
    %c0_35 = arith.constant 0 : index
    %c0_36 = arith.constant 0 : index
    %86 = vector.load %arg7[%c0_34, %c0_35, %c0_36] : memref<1x32x32xf32, #tpu.memory_space<vmem>>, vector<1x32x32xf32>
    %87 = vector.shape_cast %86 : vector<1x32x32xf32> to vector<32x32xf32>
    %cst_37 = arith.constant dense<0.000000e+00> : vector<16x32xf32>
    %88 = tpu.matmul %85, %87, %cst_37 {dimension_numbers = #tpu.dot_dimension_numbers<[1], [0], [0], [1], [0, 0, 1, 1], [], []>} : vector<16x32xf32>, vector<32x32xf32>, vector<16x32xf32> -> vector<16x32xf32>
    %c0_38 = arith.constant 0 : index
    %c0_39 = arith.constant 0 : index
    %c0_40 = arith.constant 0 : index
    %89 = vector.load %arg8[%c0_38, %c0_39, %c0_40] : memref<1x1x32xf32, #tpu.memory_space<vmem>>, vector<1x1x32xf32>
    %90 = vector.shape_cast %89 : vector<1x1x32xf32> to vector<1x32xf32>
    %91 = vector.broadcast %90 : vector<1x32xf32> to vector<16x32xf32>
    %92 = arith.addf %88, %91 : vector<16x32xf32>
    %93 = arith.addf %3, %92 : vector<16x32xf32>
    %cst_41 = arith.constant dense<0.000000e+00> : vector<16xf32>
    %94 = vector.multi_reduction <add>, %93, %cst_41 [1] : vector<16x32xf32> to vector<16xf32>
    %95 = vector.shape_cast %94 : vector<16xf32> to vector<16x1xf32>
    %cst_42 = arith.constant 3.200000e+01 : f32
    %96 = vector.broadcast %cst_42 : f32 to vector<16x1xf32>
    %97 = arith.divf %95, %96 : vector<16x1xf32>
    %98 = vector.broadcast %97 : vector<16x1xf32> to vector<16x32xf32>
    %99 = arith.subf %93, %98 : vector<16x32xf32>
    %100 = arith.mulf %99, %99 : vector<16x32xf32>
    %cst_43 = arith.constant dense<0.000000e+00> : vector<16xf32>
    %101 = vector.multi_reduction <add>, %100, %cst_43 [1] : vector<16x32xf32> to vector<16xf32>
    %102 = vector.shape_cast %101 : vector<16xf32> to vector<16x1xf32>
    %cst_44 = arith.constant 3.200000e+01 : f32
    %103 = vector.broadcast %cst_44 : f32 to vector<16x1xf32>
    %104 = arith.divf %102, %103 : vector<16x1xf32>
    %105 = vector.broadcast %97 : vector<16x1xf32> to vector<16x32xf32>
    %106 = arith.subf %93, %105 : vector<16x32xf32>
    %cst_45 = arith.constant 9.99999974E-6 : f32
    %107 = vector.broadcast %cst_45 : f32 to vector<16x1xf32>
    %108 = arith.addf %104, %107 : vector<16x1xf32>
    %109 = math.rsqrt %108 : vector<16x1xf32>
    %110 = vector.broadcast %109 : vector<16x1xf32> to vector<16x32xf32>
    %111 = arith.mulf %106, %110 : vector<16x32xf32>
    %c0_46 = arith.constant 0 : index
    %c0_47 = arith.constant 0 : index
    %c0_48 = arith.constant 0 : index
    %112 = vector.load %arg9[%c0_46, %c0_47, %c0_48] : memref<1x1x32xf32, #tpu.memory_space<vmem>>, vector<1x1x32xf32>
    %113 = vector.shape_cast %112 : vector<1x1x32xf32> to vector<1x32xf32>
    %114 = vector.broadcast %113 : vector<1x32xf32> to vector<16x32xf32>
    %115 = arith.mulf %111, %114 : vector<16x32xf32>
    %c0_49 = arith.constant 0 : index
    %c0_50 = arith.constant 0 : index
    %c0_51 = arith.constant 0 : index
    %116 = vector.load %arg10[%c0_49, %c0_50, %c0_51] : memref<1x1x32xf32, #tpu.memory_space<vmem>>, vector<1x1x32xf32>
    %117 = vector.shape_cast %116 : vector<1x1x32xf32> to vector<1x32xf32>
    %118 = vector.broadcast %117 : vector<1x32xf32> to vector<16x32xf32>
    %119 = arith.addf %115, %118 : vector<16x32xf32>
    %c0_52 = arith.constant 0 : index
    %c0_53 = arith.constant 0 : index
    %c0_54 = arith.constant 0 : index
    %120 = vector.load %arg11[%c0_52, %c0_53, %c0_54] : memref<1x32x96xf32, #tpu.memory_space<vmem>>, vector<1x32x96xf32>
    %121 = vector.shape_cast %120 : vector<1x32x96xf32> to vector<32x96xf32>
    %c0_55 = arith.constant 0 : index
    %c0_56 = arith.constant 0 : index
    %c0_57 = arith.constant 0 : index
    %122 = vector.load %arg12[%c0_55, %c0_56, %c0_57] : memref<1x1x96xf32, #tpu.memory_space<vmem>>, vector<1x1x96xf32>
    %123 = vector.shape_cast %122 : vector<1x1x96xf32> to vector<1x96xf32>
    %124 = vector.extract_strided_slice %121 {offsets = [0, 0], sizes = [32, 32], strides = [1, 1]} : vector<32x96xf32> to vector<32x32xf32>
    %cst_58 = arith.constant dense<0.000000e+00> : vector<16x32xf32>
    %125 = tpu.matmul %119, %124, %cst_58 {dimension_numbers = #tpu.dot_dimension_numbers<[1], [0], [0], [1], [0, 0, 1, 1], [], []>} : vector<16x32xf32>, vector<32x32xf32>, vector<16x32xf32> -> vector<16x32xf32>
    %126 = vector.extract_strided_slice %123 {offsets = [0, 0], sizes = [1, 32], strides = [1, 1]} : vector<1x96xf32> to vector<1x32xf32>
    %127 = vector.broadcast %126 : vector<1x32xf32> to vector<16x32xf32>
    %128 = arith.addf %125, %127 : vector<16x32xf32>
    %129 = vector.extract_strided_slice %121 {offsets = [0, 32], sizes = [32, 64], strides = [1, 1]} : vector<32x96xf32> to vector<32x64xf32>
    %cst_59 = arith.constant dense<0.000000e+00> : vector<24x64xf32>
    %130 = tpu.matmul %4, %129, %cst_59 {dimension_numbers = #tpu.dot_dimension_numbers<[1], [0], [0], [1], [0, 0, 1, 1], [], []>} : vector<24x32xf32>, vector<32x64xf32>, vector<24x64xf32> -> vector<24x64xf32>
    %131 = vector.extract_strided_slice %123 {offsets = [0, 32], sizes = [1, 64], strides = [1, 1]} : vector<1x96xf32> to vector<1x64xf32>
    %132 = vector.broadcast %131 : vector<1x64xf32> to vector<24x64xf32>
    %133 = arith.addf %130, %132 : vector<24x64xf32>
    %134 = vector.extract_strided_slice %133 {offsets = [0, 0], sizes = [24, 32], strides = [1, 1]} : vector<24x64xf32> to vector<24x32xf32>
    %135 = vector.extract_strided_slice %133 {offsets = [0, 32], sizes = [24, 32], strides = [1, 1]} : vector<24x64xf32> to vector<24x32xf32>
    %136 = vector.extract_strided_slice %128 {offsets = [0, 0], sizes = [16, 8], strides = [1, 1]} : vector<16x32xf32> to vector<16x8xf32>
    %137 = vector.extract_strided_slice %134 {offsets = [0, 0], sizes = [24, 8], strides = [1, 1]} : vector<24x32xf32> to vector<24x8xf32>
    %cst_60 = arith.constant dense<0.000000e+00> : vector<16x24xf32>
    %138 = tpu.matmul %136, %137, %cst_60 {dimension_numbers = #tpu.dot_dimension_numbers<[1], [1], [0], [0], [0, 0, 1, 0], [], []>} : vector<16x8xf32>, vector<24x8xf32>, vector<16x24xf32> -> vector<16x24xf32>
    %cst_61 = arith.constant 0.353553385 : f32
    %139 = vector.broadcast %cst_61 : f32 to vector<16x24xf32>
    %140 = arith.mulf %138, %139 : vector<16x24xf32>
    %141 = arith.addf %140, %6 : vector<16x24xf32>
    %cst_62 = arith.constant dense<0xFF800000> : vector<16xf32>
    %142 = vector.multi_reduction <maximumf>, %141, %cst_62 [1] : vector<16x24xf32> to vector<16xf32>
    %143 = vector.shape_cast %142 : vector<16xf32> to vector<16x1xf32>
    %144 = vector.broadcast %143 : vector<16x1xf32> to vector<16x24xf32>
    %145 = arith.subf %141, %144 : vector<16x24xf32>
    %146 = math.exp %145 : vector<16x24xf32>
    %cst_63 = arith.constant dense<0.000000e+00> : vector<16xf32>
    %147 = vector.multi_reduction <add>, %146, %cst_63 [1] : vector<16x24xf32> to vector<16xf32>
    %148 = vector.shape_cast %147 : vector<16xf32> to vector<16x1xf32>
    %149 = vector.broadcast %148 : vector<16x1xf32> to vector<16x24xf32>
    %150 = arith.divf %146, %149 : vector<16x24xf32>
    %151 = vector.extract_strided_slice %135 {offsets = [0, 0], sizes = [24, 8], strides = [1, 1]} : vector<24x32xf32> to vector<24x8xf32>
    %cst_64 = arith.constant dense<0.000000e+00> : vector<16x8xf32>
    %152 = tpu.matmul %150, %151, %cst_64 {dimension_numbers = #tpu.dot_dimension_numbers<[1], [0], [0], [1], [0, 0, 1, 1], [], []>} : vector<16x24xf32>, vector<24x8xf32>, vector<16x8xf32> -> vector<16x8xf32>
    %153 = vector.extract_strided_slice %128 {offsets = [0, 8], sizes = [16, 8], strides = [1, 1]} : vector<16x32xf32> to vector<16x8xf32>
    %154 = vector.extract_strided_slice %134 {offsets = [0, 8], sizes = [24, 8], strides = [1, 1]} : vector<24x32xf32> to vector<24x8xf32>
    %cst_65 = arith.constant dense<0.000000e+00> : vector<16x24xf32>
    %155 = tpu.matmul %153, %154, %cst_65 {dimension_numbers = #tpu.dot_dimension_numbers<[1], [1], [0], [0], [0, 0, 1, 0], [], []>} : vector<16x8xf32>, vector<24x8xf32>, vector<16x24xf32> -> vector<16x24xf32>
    %cst_66 = arith.constant 0.353553385 : f32
    %156 = vector.broadcast %cst_66 : f32 to vector<16x24xf32>
    %157 = arith.mulf %155, %156 : vector<16x24xf32>
    %158 = arith.addf %157, %6 : vector<16x24xf32>
    %cst_67 = arith.constant dense<0xFF800000> : vector<16xf32>
    %159 = vector.multi_reduction <maximumf>, %158, %cst_67 [1] : vector<16x24xf32> to vector<16xf32>
    %160 = vector.shape_cast %159 : vector<16xf32> to vector<16x1xf32>
    %161 = vector.broadcast %160 : vector<16x1xf32> to vector<16x24xf32>
    %162 = arith.subf %158, %161 : vector<16x24xf32>
    %163 = math.exp %162 : vector<16x24xf32>
    %cst_68 = arith.constant dense<0.000000e+00> : vector<16xf32>
    %164 = vector.multi_reduction <add>, %163, %cst_68 [1] : vector<16x24xf32> to vector<16xf32>
    %165 = vector.shape_cast %164 : vector<16xf32> to vector<16x1xf32>
    %166 = vector.broadcast %165 : vector<16x1xf32> to vector<16x24xf32>
    %167 = arith.divf %163, %166 : vector<16x24xf32>
    %168 = vector.extract_strided_slice %135 {offsets = [0, 8], sizes = [24, 8], strides = [1, 1]} : vector<24x32xf32> to vector<24x8xf32>
    %cst_69 = arith.constant dense<0.000000e+00> : vector<16x8xf32>
    %169 = tpu.matmul %167, %168, %cst_69 {dimension_numbers = #tpu.dot_dimension_numbers<[1], [0], [0], [1], [0, 0, 1, 1], [], []>} : vector<16x24xf32>, vector<24x8xf32>, vector<16x8xf32> -> vector<16x8xf32>
    %170 = arith.addf %150, %167 : vector<16x24xf32>
    %171 = vector.extract_strided_slice %128 {offsets = [0, 16], sizes = [16, 8], strides = [1, 1]} : vector<16x32xf32> to vector<16x8xf32>
    %172 = vector.extract_strided_slice %134 {offsets = [0, 16], sizes = [24, 8], strides = [1, 1]} : vector<24x32xf32> to vector<24x8xf32>
    %cst_70 = arith.constant dense<0.000000e+00> : vector<16x24xf32>
    %173 = tpu.matmul %171, %172, %cst_70 {dimension_numbers = #tpu.dot_dimension_numbers<[1], [1], [0], [0], [0, 0, 1, 0], [], []>} : vector<16x8xf32>, vector<24x8xf32>, vector<16x24xf32> -> vector<16x24xf32>
    %cst_71 = arith.constant 0.353553385 : f32
    %174 = vector.broadcast %cst_71 : f32 to vector<16x24xf32>
    %175 = arith.mulf %173, %174 : vector<16x24xf32>
    %176 = arith.addf %175, %6 : vector<16x24xf32>
    %cst_72 = arith.constant dense<0xFF800000> : vector<16xf32>
    %177 = vector.multi_reduction <maximumf>, %176, %cst_72 [1] : vector<16x24xf32> to vector<16xf32>
    %178 = vector.shape_cast %177 : vector<16xf32> to vector<16x1xf32>
    %179 = vector.broadcast %178 : vector<16x1xf32> to vector<16x24xf32>
    %180 = arith.subf %176, %179 : vector<16x24xf32>
    %181 = math.exp %180 : vector<16x24xf32>
    %cst_73 = arith.constant dense<0.000000e+00> : vector<16xf32>
    %182 = vector.multi_reduction <add>, %181, %cst_73 [1] : vector<16x24xf32> to vector<16xf32>
    %183 = vector.shape_cast %182 : vector<16xf32> to vector<16x1xf32>
    %184 = vector.broadcast %183 : vector<16x1xf32> to vector<16x24xf32>
    %185 = arith.divf %181, %184 : vector<16x24xf32>
    %186 = vector.extract_strided_slice %135 {offsets = [0, 16], sizes = [24, 8], strides = [1, 1]} : vector<24x32xf32> to vector<24x8xf32>
    %cst_74 = arith.constant dense<0.000000e+00> : vector<16x8xf32>
    %187 = tpu.matmul %185, %186, %cst_74 {dimension_numbers = #tpu.dot_dimension_numbers<[1], [0], [0], [1], [0, 0, 1, 1], [], []>} : vector<16x24xf32>, vector<24x8xf32>, vector<16x8xf32> -> vector<16x8xf32>
    %188 = arith.addf %170, %185 : vector<16x24xf32>
    %189 = vector.extract_strided_slice %128 {offsets = [0, 24], sizes = [16, 8], strides = [1, 1]} : vector<16x32xf32> to vector<16x8xf32>
    %190 = vector.extract_strided_slice %134 {offsets = [0, 24], sizes = [24, 8], strides = [1, 1]} : vector<24x32xf32> to vector<24x8xf32>
    %cst_75 = arith.constant dense<0.000000e+00> : vector<16x24xf32>
    %191 = tpu.matmul %189, %190, %cst_75 {dimension_numbers = #tpu.dot_dimension_numbers<[1], [1], [0], [0], [0, 0, 1, 0], [], []>} : vector<16x8xf32>, vector<24x8xf32>, vector<16x24xf32> -> vector<16x24xf32>
    %cst_76 = arith.constant 0.353553385 : f32
    %192 = vector.broadcast %cst_76 : f32 to vector<16x24xf32>
    %193 = arith.mulf %191, %192 : vector<16x24xf32>
    %194 = arith.addf %193, %6 : vector<16x24xf32>
    %cst_77 = arith.constant dense<0xFF800000> : vector<16xf32>
    %195 = vector.multi_reduction <maximumf>, %194, %cst_77 [1] : vector<16x24xf32> to vector<16xf32>
    %196 = vector.shape_cast %195 : vector<16xf32> to vector<16x1xf32>
    %197 = vector.broadcast %196 : vector<16x1xf32> to vector<16x24xf32>
    %198 = arith.subf %194, %197 : vector<16x24xf32>
    %199 = math.exp %198 : vector<16x24xf32>
    %cst_78 = arith.constant dense<0.000000e+00> : vector<16xf32>
    %200 = vector.multi_reduction <add>, %199, %cst_78 [1] : vector<16x24xf32> to vector<16xf32>
    %201 = vector.shape_cast %200 : vector<16xf32> to vector<16x1xf32>
    %202 = vector.broadcast %201 : vector<16x1xf32> to vector<16x24xf32>
    %203 = arith.divf %199, %202 : vector<16x24xf32>
    %204 = vector.extract_strided_slice %135 {offsets = [0, 24], sizes = [24, 8], strides = [1, 1]} : vector<24x32xf32> to vector<24x8xf32>
    %cst_79 = arith.constant dense<0.000000e+00> : vector<16x8xf32>
    %205 = tpu.matmul %203, %204, %cst_79 {dimension_numbers = #tpu.dot_dimension_numbers<[1], [0], [0], [1], [0, 0, 1, 1], [], []>} : vector<16x24xf32>, vector<24x8xf32>, vector<16x8xf32> -> vector<16x8xf32>
    %206 = arith.addf %188, %203 : vector<16x24xf32>
    %207 = tpu.concatenate %152, %169, %187, %205 in 1 : vector<16x8xf32>, vector<16x8xf32>, vector<16x8xf32>, vector<16x8xf32> -> vector<16x32xf32>
    %cst_80 = arith.constant 2.500000e-01 : f32
    %208 = vector.broadcast %cst_80 : f32 to vector<16x24xf32>
    %209 = arith.mulf %206, %208 : vector<16x24xf32>
    %c0_81 = arith.constant 0 : index
    %c0_82 = arith.constant 0 : index
    %c0_83 = arith.constant 0 : index
    %210 = vector.load %arg13[%c0_81, %c0_82, %c0_83] : memref<1x32x32xf32, #tpu.memory_space<vmem>>, vector<1x32x32xf32>
    %211 = vector.shape_cast %210 : vector<1x32x32xf32> to vector<32x32xf32>
    %cst_84 = arith.constant dense<0.000000e+00> : vector<16x32xf32>
    %212 = tpu.matmul %207, %211, %cst_84 {dimension_numbers = #tpu.dot_dimension_numbers<[1], [0], [0], [1], [0, 0, 1, 1], [], []>} : vector<16x32xf32>, vector<32x32xf32>, vector<16x32xf32> -> vector<16x32xf32>
    %c0_85 = arith.constant 0 : index
    %c0_86 = arith.constant 0 : index
    %c0_87 = arith.constant 0 : index
    %213 = vector.load %arg14[%c0_85, %c0_86, %c0_87] : memref<1x1x32xf32, #tpu.memory_space<vmem>>, vector<1x1x32xf32>
    %214 = vector.shape_cast %213 : vector<1x1x32xf32> to vector<1x32xf32>
    %215 = vector.broadcast %214 : vector<1x32xf32> to vector<16x32xf32>
    %216 = arith.addf %212, %215 : vector<16x32xf32>
    %217 = arith.addf %119, %216 : vector<16x32xf32>
    %cst_88 = arith.constant dense<0.000000e+00> : vector<16xf32>
    %218 = vector.multi_reduction <add>, %217, %cst_88 [1] : vector<16x32xf32> to vector<16xf32>
    %219 = vector.shape_cast %218 : vector<16xf32> to vector<16x1xf32>
    %cst_89 = arith.constant 3.200000e+01 : f32
    %220 = vector.broadcast %cst_89 : f32 to vector<16x1xf32>
    %221 = arith.divf %219, %220 : vector<16x1xf32>
    %222 = vector.broadcast %221 : vector<16x1xf32> to vector<16x32xf32>
    %223 = arith.subf %217, %222 : vector<16x32xf32>
    %224 = arith.mulf %223, %223 : vector<16x32xf32>
    %cst_90 = arith.constant dense<0.000000e+00> : vector<16xf32>
    %225 = vector.multi_reduction <add>, %224, %cst_90 [1] : vector<16x32xf32> to vector<16xf32>
    %226 = vector.shape_cast %225 : vector<16xf32> to vector<16x1xf32>
    %cst_91 = arith.constant 3.200000e+01 : f32
    %227 = vector.broadcast %cst_91 : f32 to vector<16x1xf32>
    %228 = arith.divf %226, %227 : vector<16x1xf32>
    %229 = vector.broadcast %221 : vector<16x1xf32> to vector<16x32xf32>
    %230 = arith.subf %217, %229 : vector<16x32xf32>
    %cst_92 = arith.constant 9.99999974E-6 : f32
    %231 = vector.broadcast %cst_92 : f32 to vector<16x1xf32>
    %232 = arith.addf %228, %231 : vector<16x1xf32>
    %233 = math.rsqrt %232 : vector<16x1xf32>
    %234 = vector.broadcast %233 : vector<16x1xf32> to vector<16x32xf32>
    %235 = arith.mulf %230, %234 : vector<16x32xf32>
    %c0_93 = arith.constant 0 : index
    %c0_94 = arith.constant 0 : index
    %c0_95 = arith.constant 0 : index
    %236 = vector.load %arg15[%c0_93, %c0_94, %c0_95] : memref<1x1x32xf32, #tpu.memory_space<vmem>>, vector<1x1x32xf32>
    %237 = vector.shape_cast %236 : vector<1x1x32xf32> to vector<1x32xf32>
    %238 = vector.broadcast %237 : vector<1x32xf32> to vector<16x32xf32>
    %239 = arith.mulf %235, %238 : vector<16x32xf32>
    %c0_96 = arith.constant 0 : index
    %c0_97 = arith.constant 0 : index
    %c0_98 = arith.constant 0 : index
    %240 = vector.load %arg16[%c0_96, %c0_97, %c0_98] : memref<1x1x32xf32, #tpu.memory_space<vmem>>, vector<1x1x32xf32>
    %241 = vector.shape_cast %240 : vector<1x1x32xf32> to vector<1x32xf32>
    %242 = vector.broadcast %241 : vector<1x32xf32> to vector<16x32xf32>
    %243 = arith.addf %239, %242 : vector<16x32xf32>
    %244 = vector.extract_strided_slice %209 {offsets = [0, 0], sizes = [8, 12], strides = [1, 1]} : vector<16x24xf32> to vector<8x12xf32>
    %c0_99 = arith.constant 0 : index
    %c0_100 = arith.constant 0 : index
    %c0_101 = arith.constant 0 : index
    %c0_102 = arith.constant 0 : index
    %245 = vector.load %arg24[%c0_99, %c0_100, %c0_101, %c0_102] : memref<1x2x8x12xf32, #tpu.memory_space<vmem>>, vector<1x1x8x12xf32>
    %246 = vector.shape_cast %245 : vector<1x1x8x12xf32> to vector<8x12xf32>
    %247 = vector.shape_cast %244 : vector<8x12xf32> to vector<1x1x8x12xf32>
    tpu.vector_store %arg24[%c0_99, %c0_100, %c0_101, %c0_102], %247 {strides = array<i32>} : memref<1x2x8x12xf32, #tpu.memory_space<vmem>>, vector<1x1x8x12xf32>,
    %248 = vector.extract_strided_slice %209 {offsets = [8, 12], sizes = [8, 12], strides = [1, 1]} : vector<16x24xf32> to vector<8x12xf32>
    %c0_103 = arith.constant 0 : index
    %c1 = arith.constant 1 : index
    %c0_104 = arith.constant 0 : index
    %c0_105 = arith.constant 0 : index
    %249 = vector.load %arg24[%c0_103, %c1, %c0_104, %c0_105] : memref<1x2x8x12xf32, #tpu.memory_space<vmem>>, vector<1x1x8x12xf32>
    %250 = vector.shape_cast %249 : vector<1x1x8x12xf32> to vector<8x12xf32>
    %251 = vector.shape_cast %248 : vector<8x12xf32> to vector<1x1x8x12xf32>
    tpu.vector_store %arg24[%c0_103, %c1, %c0_104, %c0_105], %251 {strides = array<i32>} : memref<1x2x8x12xf32, #tpu.memory_space<vmem>>, vector<1x1x8x12xf32>,
    %c0_106 = arith.constant 0 : index
    %c0_107 = arith.constant 0 : index
    %c0_108 = arith.constant 0 : index
    %252 = vector.load %arg17[%c0_106, %c0_107, %c0_108] : memref<1x32x64xf32, #tpu.memory_space<vmem>>, vector<1x32x64xf32>
    %253 = vector.shape_cast %252 : vector<1x32x64xf32> to vector<32x64xf32>
    %cst_109 = arith.constant dense<0.000000e+00> : vector<16x64xf32>
    %254 = tpu.matmul %243, %253, %cst_109 {dimension_numbers = #tpu.dot_dimension_numbers<[1], [0], [0], [1], [0, 0, 1, 1], [], []>} : vector<16x32xf32>, vector<32x64xf32>, vector<16x64xf32> -> vector<16x64xf32>
    %c0_110 = arith.constant 0 : index
    %c0_111 = arith.constant 0 : index
    %c0_112 = arith.constant 0 : index
    %255 = vector.load %arg18[%c0_110, %c0_111, %c0_112] : memref<1x1x64xf32, #tpu.memory_space<vmem>>, vector<1x1x64xf32>
    %256 = vector.shape_cast %255 : vector<1x1x64xf32> to vector<1x64xf32>
    %257 = vector.broadcast %256 : vector<1x64xf32> to vector<16x64xf32>
    %258 = arith.addf %254, %257 : vector<16x64xf32>
    %cst_113 = arith.constant 0.000000e+00 : f32
    %259 = vector.broadcast %cst_113 : f32 to vector<16x64xf32>
    %260 = arith.maximumf %258, %259 : vector<16x64xf32>
    %c0_114 = arith.constant 0 : index
    %c0_115 = arith.constant 0 : index
    %c0_116 = arith.constant 0 : index
    %261 = vector.load %arg19[%c0_114, %c0_115, %c0_116] : memref<1x64x32xf32, #tpu.memory_space<vmem>>, vector<1x64x32xf32>
    %262 = vector.shape_cast %261 : vector<1x64x32xf32> to vector<64x32xf32>
    %cst_117 = arith.constant dense<0.000000e+00> : vector<16x32xf32>
    %263 = tpu.matmul %260, %262, %cst_117 {dimension_numbers = #tpu.dot_dimension_numbers<[1], [0], [0], [1], [0, 0, 1, 1], [], []>} : vector<16x64xf32>, vector<64x32xf32>, vector<16x32xf32> -> vector<16x32xf32>
    %c0_118 = arith.constant 0 : index
    %c0_119 = arith.constant 0 : index
    %c0_120 = arith.constant 0 : index
    %264 = vector.load %arg20[%c0_118, %c0_119, %c0_120] : memref<1x1x32xf32, #tpu.memory_space<vmem>>, vector<1x1x32xf32>
    %265 = vector.shape_cast %264 : vector<1x1x32xf32> to vector<1x32xf32>
    %266 = vector.broadcast %265 : vector<1x32xf32> to vector<16x32xf32>
    %267 = arith.addf %263, %266 : vector<16x32xf32>
    %268 = arith.addf %243, %267 : vector<16x32xf32>
    %cst_121 = arith.constant dense<0.000000e+00> : vector<16xf32>
    %269 = vector.multi_reduction <add>, %268, %cst_121 [1] : vector<16x32xf32> to vector<16xf32>
    %270 = vector.shape_cast %269 : vector<16xf32> to vector<16x1xf32>
    %cst_122 = arith.constant 3.200000e+01 : f32
    %271 = vector.broadcast %cst_122 : f32 to vector<16x1xf32>
    %272 = arith.divf %270, %271 : vector<16x1xf32>
    %273 = vector.broadcast %272 : vector<16x1xf32> to vector<16x32xf32>
    %274 = arith.subf %268, %273 : vector<16x32xf32>
    %275 = arith.mulf %274, %274 : vector<16x32xf32>
    %cst_123 = arith.constant dense<0.000000e+00> : vector<16xf32>
    %276 = vector.multi_reduction <add>, %275, %cst_123 [1] : vector<16x32xf32> to vector<16xf32>
    %277 = vector.shape_cast %276 : vector<16xf32> to vector<16x1xf32>
    %cst_124 = arith.constant 3.200000e+01 : f32
    %278 = vector.broadcast %cst_124 : f32 to vector<16x1xf32>
    %279 = arith.divf %277, %278 : vector<16x1xf32>
    %280 = vector.broadcast %272 : vector<16x1xf32> to vector<16x32xf32>
    %281 = arith.subf %268, %280 : vector<16x32xf32>
    %cst_125 = arith.constant 9.99999974E-6 : f32
    %282 = vector.broadcast %cst_125 : f32 to vector<16x1xf32>
    %283 = arith.addf %279, %282 : vector<16x1xf32>
    %284 = math.rsqrt %283 : vector<16x1xf32>
    %285 = vector.broadcast %284 : vector<16x1xf32> to vector<16x32xf32>
    %286 = arith.mulf %281, %285 : vector<16x32xf32>
    %c0_126 = arith.constant 0 : index
    %c0_127 = arith.constant 0 : index
    %c0_128 = arith.constant 0 : index
    %287 = vector.load %arg21[%c0_126, %c0_127, %c0_128] : memref<1x1x32xf32, #tpu.memory_space<vmem>>, vector<1x1x32xf32>
    %288 = vector.shape_cast %287 : vector<1x1x32xf32> to vector<1x32xf32>
    %289 = vector.broadcast %288 : vector<1x32xf32> to vector<16x32xf32>
    %290 = arith.mulf %286, %289 : vector<16x32xf32>
    %c0_129 = arith.constant 0 : index
    %c0_130 = arith.constant 0 : index
    %c0_131 = arith.constant 0 : index
    %291 = vector.load %arg22[%c0_129, %c0_130, %c0_131] : memref<1x1x32xf32, #tpu.memory_space<vmem>>, vector<1x1x32xf32>
    %292 = vector.shape_cast %291 : vector<1x1x32xf32> to vector<1x32xf32>
    %293 = vector.broadcast %292 : vector<1x32xf32> to vector<16x32xf32>
    %294 = arith.addf %290, %293 : vector<16x32xf32>
    %c0_132 = arith.constant 0 : index
    %c0_133 = arith.constant 0 : index
    %295 = vector.load %arg25[%c0_132, %c0_133] : memref<16x32xf32, #tpu.memory_space<vmem>>, vector<16x32xf32>
    tpu.vector_store %arg25[%c0_132, %c0_133], %294 {strides = array<i32>} : memref<16x32xf32, #tpu.memory_space<vmem>>, vector<16x32xf32>,
    %c0_134 = arith.constant 0 : index
    %c0_135 = arith.constant 0 : index
    %296 = vector.load %arg23[%c0_134, %c0_135] : memref<16x32xf32, #tpu.memory_space<vmem>>, vector<16x32xf32>
    tpu.vector_store %arg23[%c0_134, %c0_135], %294 {strides = array<i32>} : memref<16x32xf32, #tpu.memory_space<vmem>>, vector<16x32xf32>,
    return
  }
  func.func @transform_0(%arg0: i32) -> (i32, i32) {
    %c0_i32 = arith.constant 0 : i32
    %c0_i32_0 = arith.constant 0 : i32
    %c0_i32_1 = arith.constant 0 : i32
    return %c0_i32, %c0_i32_0 : i32, i32
  }
  func.func @transform_1(%arg0: i32) -> (i32, i32) {
    %c0_i32 = arith.constant 0 : i32
    %c0_i32_0 = arith.constant 0 : i32
    %c0_i32_1 = arith.constant 0 : i32
    return %c0_i32, %c0_i32_0 : i32, i32
  }
  func.func @transform_2(%arg0: i32) -> (i32, i32) {
    %c0_i32 = arith.constant 0 : i32
    %c0_i32_0 = arith.constant 0 : i32
    %c0_i32_1 = arith.constant 0 : i32
    return %c0_i32, %c0_i32_0 : i32, i32
  }
  func.func @transform_3(%arg0: i32) -> (i32, i32) {
    %c0_i32 = arith.constant 0 : i32
    %c0_i32_0 = arith.constant 0 : i32
    %c0_i32_1 = arith.constant 0 : i32
    return %c0_i32, %c0_i32_0 : i32, i32
  }
  func.func @transform_4(%arg0: i32) -> (i32, i32, i32) {
    %c0_i32 = arith.constant 0 : i32
    %c0_i32_0 = arith.constant 0 : i32
    %c0_i32_1 = arith.constant 0 : i32
    return %arg0, %c0_i32, %c0_i32_0 : i32, i32, i32
  }
  func.func @transform_5(%arg0: i32) -> (i32, i32, i32) {
    %c0_i32 = arith.constant 0 : i32
    %c0_i32_0 = arith.constant 0 : i32
    %c0_i32_1 = arith.constant 0 : i32
    return %arg0, %c0_i32, %c0_i32_0 : i32, i32, i32
  }
  func.func @transform_6(%arg0: i32) -> (i32, i32, i32) {
    %c0_i32 = arith.constant 0 : i32
    %c0_i32_0 = arith.constant 0 : i32
    %c0_i32_1 = arith.constant 0 : i32
    return %arg0, %c0_i32, %c0_i32_0 : i32, i32, i32
  }
  func.func @transform_7(%arg0: i32) -> (i32, i32, i32) {
    %c0_i32 = arith.constant 0 : i32
    %c0_i32_0 = arith.constant 0 : i32
    %c0_i32_1 = arith.constant 0 : i32
    return %arg0, %c0_i32, %c0_i32_0 : i32, i32, i32
  }
  func.func @transform_8(%arg0: i32) -> (i32, i32, i32) {
    %c0_i32 = arith.constant 0 : i32
    %c0_i32_0 = arith.constant 0 : i32
    %c0_i32_1 = arith.constant 0 : i32
    return %arg0, %c0_i32, %c0_i32_0 : i32, i32, i32
  }
  func.func @transform_9(%arg0: i32) -> (i32, i32, i32) {
    %c0_i32 = arith.constant 0 : i32
    %c0_i32_0 = arith.constant 0 : i32
    %c0_i32_1 = arith.constant 0 : i32
    return %arg0, %c0_i32, %c0_i32_0 : i32, i32, i32
  }
  func.func @transform_10(%arg0: i32) -> (i32, i32, i32) {
    %c0_i32 = arith.constant 0 : i32
    %c0_i32_0 = arith.constant 0 : i32
    %c0_i32_1 = arith.constant 0 : i32
    return %arg0, %c0_i32, %c0_i32_0 : i32, i32, i32
  }
  func.func @transform_11(%arg0: i32) -> (i32, i32, i32) {
    %c0_i32 = arith.constant 0 : i32
    %c0_i32_0 = arith.constant 0 : i32
    %c0_i32_1 = arith.constant 0 : i32
    return %arg0, %c0_i32, %c0_i32_0 : i32, i32, i32
  }
  func.func @transform_12(%arg0: i32) -> (i32, i32, i32) {
    %c0_i32 = arith.constant 0 : i32
    %c0_i32_0 = arith.constant 0 : i32
    %c0_i32_1 = arith.constant 0 : i32
    return %arg0, %c0_i32, %c0_i32_0 : i32, i32, i32
  }
  func.func @transform_13(%arg0: i32) -> (i32, i32, i32) {
    %c0_i32 = arith.constant 0 : i32
    %c0_i32_0 = arith.constant 0 : i32
    %c0_i32_1 = arith.constant 0 : i32
    return %arg0, %c0_i32, %c0_i32_0 : i32, i32, i32
  }
  func.func @transform_14(%arg0: i32) -> (i32, i32, i32) {
    %c0_i32 = arith.constant 0 : i32
    %c0_i32_0 = arith.constant 0 : i32
    %c0_i32_1 = arith.constant 0 : i32
    return %arg0, %c0_i32, %c0_i32_0 : i32, i32, i32
  }
  func.func @transform_15(%arg0: i32) -> (i32, i32, i32) {
    %c0_i32 = arith.constant 0 : i32
    %c0_i32_0 = arith.constant 0 : i32
    %c0_i32_1 = arith.constant 0 : i32
    return %arg0, %c0_i32, %c0_i32_0 : i32, i32, i32
  }
  func.func @transform_16(%arg0: i32) -> (i32, i32, i32) {
    %c0_i32 = arith.constant 0 : i32
    %c0_i32_0 = arith.constant 0 : i32
    %c0_i32_1 = arith.constant 0 : i32
    return %arg0, %c0_i32, %c0_i32_0 : i32, i32, i32
  }
  func.func @transform_17(%arg0: i32) -> (i32, i32, i32) {
    %c0_i32 = arith.constant 0 : i32
    %c0_i32_0 = arith.constant 0 : i32
    %c0_i32_1 = arith.constant 0 : i32
    return %arg0, %c0_i32, %c0_i32_0 : i32, i32, i32
  }
  func.func @transform_18(%arg0: i32) -> (i32, i32, i32) {
    %c0_i32 = arith.constant 0 : i32
    %c0_i32_0 = arith.constant 0 : i32
    %c0_i32_1 = arith.constant 0 : i32
    return %arg0, %c0_i32, %c0_i32_0 : i32, i32, i32
  }
  func.func @transform_19(%arg0: i32) -> (i32, i32, i32) {
    %c0_i32 = arith.constant 0 : i32
    %c0_i32_0 = arith.constant 0 : i32
    %c0_i32_1 = arith.constant 0 : i32
    return %arg0, %c0_i32, %c0_i32_0 : i32, i32, i32
  }
  func.func @transform_20(%arg0: i32) -> (i32, i32, i32) {
    %c0_i32 = arith.constant 0 : i32
    %c0_i32_0 = arith.constant 0 : i32
    %c0_i32_1 = arith.constant 0 : i32
    return %arg0, %c0_i32, %c0_i32_0 : i32, i32, i32
  }
  func.func @transform_21(%arg0: i32) -> (i32, i32, i32) {
    %c0_i32 = arith.constant 0 : i32
    %c0_i32_0 = arith.constant 0 : i32
    %c0_i32_1 = arith.constant 0 : i32
    return %arg0, %c0_i32, %c0_i32_0 : i32, i32, i32
  }
  func.func @transform_22(%arg0: i32) -> (i32, i32) {
    %c0_i32 = arith.constant 0 : i32
    %c0_i32_0 = arith.constant 0 : i32
    %c0_i32_1 = arith.constant 0 : i32
    return %c0_i32, %c0_i32_0 : i32, i32
  }
  func.func @transform_23(%arg0: i32) -> (i32, i32, i32, i32) {
    %c0_i32 = arith.constant 0 : i32
    %c0_i32_0 = arith.constant 0 : i32
    %c0_i32_1 = arith.constant 0 : i32
    %c0_i32_2 = arith.constant 0 : i32
    return %arg0, %c0_i32, %c0_i32_0, %c0_i32_1 : i32, i32, i32, i32
  }
}

</mosaic_0001>

<llo_original>
// kernel: eq.25
$region0: #{eq.25}
  %s0 = inlined_call_operand.vmem [shape: s32[2,12], index: 0, kind: input, shape index: {}]
  %s1 = inlined_call_operand.vmem [shape: s32[24], index: 1, kind: output, shape index: {}]
  $region1: #{eq.25} parent=0
    #allocation0 [shape = 'u8[4096]{0}', space=vmem, size = 0x1000, scoped, tag = 'scoped mem for output reshape']
    #allocation1 [shape = 'u8[4096]{0}', space=vmem, size = 0x1000, scoped, tag = 'scoped mem for input reshape']
    %s3 = sshllo.u32 0, 2
    %v4 = vld [vmem:[%s0] sm:%s3]
    %5 = vst [vmem:[#allocation1] sm:%s3] %v4
    %v6 = vld [vmem:[#allocation1] sm:$0x1]
    %vm7 = vcmask 97280
    %8 = vst.msk [vmem:[#allocation0] sm:$0x1] %vm7, %v6
    %s9 = scalar_lea.vmem [#allocation1], 1
    %v10 = vld [vmem:[%s9] sm:$0x1]
    %11 = vrot.lane.b32.xlu0 %v10, 12
    %v12 = vpop.permute.xlu0 %11
    %vm13 = vcmask 195680
    %14 = vst.msk [vmem:[#allocation0] sm:$0x1] %vm13, %v12
    %s16 = sshllo.u32 0, 1
    %v18 = vld [vmem:[#allocation0] sm:%s16]
    %s19 = sshllo.u32 0, 1
    %20 = vst [vmem:[%s1] sm:%s19] %v18

// kernel: eq.15
$region0: #{eq.15}
  %s0 = inlined_call_operand.vmem [shape: s32[2,8], index: 0, kind: input, shape index: {}]
  %s1 = inlined_call_operand.vmem [shape: s32[16], index: 1, kind: output, shape index: {}]
  $region1: #{eq.15} parent=0
    #allocation0 [shape = 'u8[4096]{0}', space=vmem, size = 0x1000, scoped, tag = 'scoped mem for output reshape']
    #allocation1 [shape = 'u8[4096]{0}', space=vmem, size = 0x1000, scoped, tag = 'scoped mem for input reshape']
    %s3 = sshllo.u32 0, 2
    %v4 = vld [vmem:[%s0] sm:%s3]
    %5 = vst [vmem:[#allocation1] sm:%s3] %v4
    %v6 = vld [vmem:[#allocation1] sm:$0x1]
    %vm7 = vcmask 64512
    %8 = vst.msk [vmem:[#allocation0] sm:$0x1] %vm7, %v6
    %s9 = scalar_lea.vmem [#allocation1], 1
    %v10 = vld [vmem:[%s9] sm:$0x1]
    %11 = vrot.lane.b32.xlu0 %v10, 8
    %v12 = vpop.permute.xlu0 %11
    %vm13 = vcmask 130112
    %14 = vst.msk [vmem:[#allocation0] sm:$0x1] %vm13, %v12
    %s16 = sshllo.u32 0, 1
    %v18 = vld [vmem:[#allocation0] sm:%s16]
    %s19 = sshllo.u32 0, 1
    %20 = vst [vmem:[%s1] sm:%s19] %v18

// kernel: tile.8
$region0: #{tile.8}
  #allocation0 [shape = 's32[1]{0}', space=sflag, size = 0x4, scoped, tag = 'scoped memory for tile.8']
  %s0 = inlined_call_operand.vmem [shape: f32[8,8], index: 0, kind: input, shape index: {}]
  %s1 = inlined_call_operand.vmem [shape: f32[2,8,2,8], index: 1, kind: output, shape index: {}]
  // Predicated region
  $region2: #{tile.8} parent=0 // pred_check
    _
  $region3: #{tile.8} parent=0 // pred_check_branch
    %3 = sbr.rel (0) target = $region5
  $region4: #{tile.8} parent=0 // pred_region
    _
  $region5: #{tile.8} parent=0 // pred_fallthru
    _
  %v4 = vld [vmem:[%s0] ss:$0 sm:$0xff]
  %5 = vst [vmem:[%s1] sm:$0x3] %v4
  %s6 = scalar_lea.vmem %s1, 16
  %7 = vst [vmem:[%s6] sm:$0x3] %v4
  %s8 = scalar_lea.vmem %s0, 1
  %v9 = vld [vmem:[%s8] ss:$0 sm:$0xff]
  %s10 = scalar_lea.vmem %s1, 2
  %11 = vst [vmem:[%s10] sm:$0x3] %v9
  %s12 = scalar_lea.vmem %s1, 18
  %13 = vst [vmem:[%s12] sm:$0x3] %v9
  %s14 = scalar_lea.vmem %s0, 2
  %v15 = vld [vmem:[%s14] ss:$0 sm:$0xff]
  %s16 = scalar_lea.vmem %s1, 4
  %17 = vst [vmem:[%s16] sm:$0x3] %v15
  %s18 = scalar_lea.vmem %s1, 20
  %19 = vst [vmem:[%s18] sm:$0x3] %v15
  %s20 = scalar_lea.vmem %s0, 3
  %v21 = vld [vmem:[%s20] ss:$0 sm:$0xff]
  %s22 = scalar_lea.vmem %s1, 6
  %23 = vst [vmem:[%s22] sm:$0x3] %v21
  %s24 = scalar_lea.vmem %s1, 22
  %25 = vst [vmem:[%s24] sm:$0x3] %v21
  %s26 = scalar_lea.vmem %s0, 4
  %v27 = vld [vmem:[%s26] ss:$0 sm:$0xff]
  %s28 = scalar_lea.vmem %s1, 8
  %29 = vst [vmem:[%s28] sm:$0x3] %v27
  %s30 = scalar_lea.vmem %s1, 24
  %31 = vst [vmem:[%s30] sm:$0x3] %v27
  %s32 = scalar_lea.vmem %s0, 5
  %v33 = vld [vmem:[%s32] ss:$0 sm:$0xff]
  %s34 = scalar_lea.vmem %s1, 10
  %35 = vst [vmem:[%s34] sm:$0x3] %v33
  %s36 = scalar_lea.vmem %s1, 26
  %37 = vst [vmem:[%s36] sm:$0x3] %v33
  %s38 = scalar_lea.vmem %s0, 6
  %v39 = vld [vmem:[%s38] ss:$0 sm:$0xff]
  %s40 = scalar_lea.vmem %s1, 12
  %41 = vst [vmem:[%s40] sm:$0x3] %v39
  %s42 = scalar_lea.vmem %s1, 28
  %43 = vst [vmem:[%s42] sm:$0x3] %v39
  %s44 = scalar_lea.vmem %s0, 7
  %v45 = vld [vmem:[%s44] ss:$0 sm:$0xff]
  %s46 = scalar_lea.vmem %s1, 14
  %47 = vst [vmem:[%s46] sm:$0x3] %v45
  %s48 = scalar_lea.vmem %s1, 30
  %49 = vst [vmem:[%s48] sm:$0x3] %v45

// kernel: tile.9
$region0: #{tile.9}
  %s0 = inlined_call_operand.vmem [shape: f32[2,8,2,8], index: 0, kind: input, shape index: {}]
  %s1 = inlined_call_operand.vmem [shape: f32[16,16], index: 1, kind: output, shape index: {}]
  $region1: #{tile.9} parent=0
    #allocation0 [shape = 'u8[65536]{0}', space=vmem, size = 0x10000, scoped, tag = 'scoped mem for input reshape']
    %s3 = sshllo.u32 0, 2
    %s4 = smul.addr 2, 15
    %s5 = scalar_lea.vmem %s0, %s4
    %v6 = vld [vmem:[%s5] sm:%s3]
    %s7 = scalar_lea.vmem [#allocation0], 120
    %8 = vst [vmem:[%s7] sm:%s3] %v6
    %s9 = smul.addr 2, 14
    %s10 = scalar_lea.vmem %s0, %s9
    %v11 = vld [vmem:[%s10] sm:%s3]
    %s12 = scalar_lea.vmem [#allocation0], 112
    %13 = vst [vmem:[%s12] sm:%s3] %v11
    %s14 = smul.addr 2, 13
    %s15 = scalar_lea.vmem %s0, %s14
    %v16 = vld [vmem:[%s15] sm:%s3]
    %s17 = scalar_lea.vmem [#allocation0], 104
    %18 = vst [vmem:[%s17] sm:%s3] %v16
    %s19 = smul.addr 2, 12
    %s20 = scalar_lea.vmem %s0, %s19
    %v21 = vld [vmem:[%s20] sm:%s3]
    %s22 = scalar_lea.vmem [#allocation0], 96
    %23 = vst [vmem:[%s22] sm:%s3] %v21
    %s24 = smul.addr 2, 11
    %s25 = scalar_lea.vmem %s0, %s24
    %v26 = vld [vmem:[%s25] sm:%s3]
    %s27 = scalar_lea.vmem [#allocation0], 88
    %28 = vst [vmem:[%s27] sm:%s3] %v26
    %s29 = smul.addr 2, 10
    %s30 = scalar_lea.vmem %s0, %s29
    %v31 = vld [vmem:[%s30] sm:%s3]
    %s32 = scalar_lea.vmem [#allocation0], 80
    %33 = vst [vmem:[%s32] sm:%s3] %v31
    %s34 = smul.addr 2, 9
    %s35 = scalar_lea.vmem %s0, %s34
    %v36 = vld [vmem:[%s35] sm:%s3]
    %s37 = scalar_lea.vmem [#allocation0], 72
    %38 = vst [vmem:[%s37] sm:%s3] %v36
    %s39 = smul.addr 2, 8
    %s40 = scalar_lea.vmem %s0, %s39
    %v41 = vld [vmem:[%s40] sm:%s3]
    %s42 = scalar_lea.vmem [#allocation0], 64
    %43 = vst [vmem:[%s42] sm:%s3] %v41
    %s44 = smul.addr 2, 7
    %s45 = scalar_lea.vmem %s0, %s44
    %v46 = vld [vmem:[%s45] sm:%s3]
    %s47 = scalar_lea.vmem [#allocation0], 56
    %48 = vst [vmem:[%s47] sm:%s3] %v46
    %s49 = smul.addr 2, 6
    %s50 = scalar_lea.vmem %s0, %s49
    %v51 = vld [vmem:[%s50] sm:%s3]
    %s52 = scalar_lea.vmem [#allocation0], 48
    %53 = vst [vmem:[%s52] sm:%s3] %v51
    %s54 = smul.addr 2, 5
    %s55 = scalar_lea.vmem %s0, %s54
    %v56 = vld [vmem:[%s55] sm:%s3]
    %s57 = scalar_lea.vmem [#allocation0], 40
    %58 = vst [vmem:[%s57] sm:%s3] %v56
    %s59 = smul.addr 2, 4
    %s60 = scalar_lea.vmem %s0, %s59
    %v61 = vld [vmem:[%s60] sm:%s3]
    %s62 = scalar_lea.vmem [#allocation0], 32
    %63 = vst [vmem:[%s62] sm:%s3] %v61
    %s64 = smul.addr 2, 3
    %s65 = scalar_lea.vmem %s0, %s64
    %v66 = vld [vmem:[%s65] sm:%s3]
    %s67 = scalar_lea.vmem [#allocation0], 24
    %68 = vst [vmem:[%s67] sm:%s3] %v66
    %s69 = smul.addr 2, 2
    %s70 = scalar_lea.vmem %s0, %s69
    %v71 = vld [vmem:[%s70] sm:%s3]
    %s72 = scalar_lea.vmem [#allocation0], 16
    %73 = vst [vmem:[%s72] sm:%s3] %v71
    %s74 = scalar_lea.vmem %s0, 2
    %v75 = vld [vmem:[%s74] sm:%s3]
    %s76 = scalar_lea.vmem [#allocation0], 8
    %77 = vst [vmem:[%s76] sm:%s3] %v75
    %v78 = vld [vmem:[%s0] sm:%s3]
    %79 = vst [vmem:[#allocation0] sm:%s3] %v78
    %v80 = vld [vmem:[#allocation0] ss:$8 sm:$0xf]
    %v81 = vld [vmem:[#allocation0] ss:$8 sm:$0xf0]
    %vm82 = vcmask 1047556
    %v83 = vsel %vm82, %v81, %v80
    %vm84 = vcmask 64512
    %85 = vst.msk [vmem:[%s1] sm:$0xff] %vm84, %v83
    %s86 = scalar_lea.vmem [#allocation0], 64
    %v87 = vld [vmem:[%s86] ss:$8 sm:$0xf]
    %s88 = scalar_lea.vmem [#allocation0], 64
    %v89 = vld [vmem:[%s88] ss:$8 sm:$0xf0]
    %vm90 = vcmask 1047556
    %v91 = vsel %vm90, %v89, %v87
    %vm92 = vcmask 64512
    %s93 = scalar_lea.vmem %s1, 8
    %94 = vst.msk [vmem:[%s93] sm:$0xff] %vm92, %v91
    %s95 = scalar_lea.vmem [#allocation0], 1
    %v96 = vld [vmem:[%s95] ss:$8 sm:$0xf]
    %s97 = scalar_lea.vmem [#allocation0], 1
    %v98 = vld [vmem:[%s97] ss:$8 sm:$0xf0]
    %vm99 = vcmask 1047556
    %v100 = vsel %vm99, %v98, %v96
    %101 = vrot.lane.b32.xlu0 %v100, 8
    %v102 = vpop.permute.xlu0 %101
    %vm103 = vcmask 130112
    %104 = vst.msk [vmem:[%s1] sm:$0xff] %vm103, %v102
    %s105 = scalar_lea.vmem [#allocation0], 65
    %v106 = vld [vmem:[%s105] ss:$8 sm:$0xf]
    %s107 = scalar_lea.vmem [#allocation0], 65
    %v108 = vld [vmem:[%s107] ss:$8 sm:$0xf0]
    %vm109 = vcmask 1047556
    %v110 = vsel %vm109, %v108, %v106
    %111 = vrot.lane.b32.xlu0 %v110, 8
    %v112 = vpop.permute.xlu0 %111
    %vm113 = vcmask 130112
    %s114 = scalar_lea.vmem %s1, 8
    %115 = vst.msk [vmem:[%s114] sm:$0xff] %vm113, %v112

// kernel: transformer_model_decoder.1
$region0: #{transformer_model_decoder.1}
  #allocation0 [shape = 'u32[]', space=smem, size = 0x4, offset = 0x4, fixed_abs, tag = 'smem constant byte address 0x4 - core index']
  #allocation1 [shape = 'u32[144,128]{1,0:T(1,128)}', space=vmem, size = 0x12000, scoped, tag = 'internal scratch']
  #allocation2 [shape = 'f32[16,32]{1,0:T(8,128)}', space=vmem, size = 0x2000, scoped, tag = 'scratch operand']
  %s0 = inlined_call_operand.vmem [shape: f32[16,32], index: 0, kind: input, shape index: {}]
  %s1 = inlined_call_operand.vmem [shape: f32[24,32], index: 1, kind: input, shape index: {}]
  %s2 = inlined_call_operand.vmem [shape: f32[16,16], index: 2, kind: input, shape index: {}]
  %s3 = inlined_call_operand.vmem [shape: f32[16,24], index: 3, kind: input, shape index: {}]
  %s4 = inlined_call_operand.vmem [shape: f32[2,32,96], index: 4, kind: input, shape index: {}]
  %s5 = inlined_call_operand.vmem [shape: f32[2,1,96], index: 5, kind: input, shape index: {}]
  %s6 = inlined_call_operand.vmem [shape: f32[2,32,32], index: 6, kind: input, shape index: {}]
  %s7 = inlined_call_operand.vmem [shape: f32[2,1,32], index: 7, kind: input, shape index: {}]
  %s8 = inlined_call_operand.vmem [shape: f32[2,1,32], index: 8, kind: input, shape index: {}]
  %s9 = inlined_call_operand.vmem [shape: f32[2,1,32], index: 9, kind: input, shape index: {}]
  %s10 = inlined_call_operand.vmem [shape: f32[2,32,96], index: 10, kind: input, shape index: {}]
  %s11 = inlined_call_operand.vmem [shape: f32[2,1,96], index: 11, kind: input, shape index: {}]
  %s12 = inlined_call_operand.vmem [shape: f32[2,32,32], index: 12, kind: input, shape index: {}]
  %s13 = inlined_call_operand.vmem [shape: f32[2,1,32], index: 13, kind: input, shape index: {}]
  %s14 = inlined_call_operand.vmem [shape: f32[2,1,32], index: 14, kind: input, shape index: {}]
  %s15 = inlined_call_operand.vmem [shape: f32[2,1,32], index: 15, kind: input, shape index: {}]
  %s16 = inlined_call_operand.vmem [shape: f32[2,32,64], index: 16, kind: input, shape index: {}]
  %s17 = inlined_call_operand.vmem [shape: f32[2,1,64], index: 17, kind: input, shape index: {}]
  %s18 = inlined_call_operand.vmem [shape: f32[2,64,32], index: 18, kind: input, shape index: {}]
  %s19 = inlined_call_operand.vmem [shape: f32[2,1,32], index: 19, kind: input, shape index: {}]
  %s20 = inlined_call_operand.vmem [shape: f32[2,1,32], index: 20, kind: input, shape index: {}]
  %s21 = inlined_call_operand.vmem [shape: f32[2,1,32], index: 21, kind: input, shape index: {}]
  %s22 = inlined_call_operand.vmem [shape: f32[16,32], index: 22, kind: output, shape index: {0}]
  %s23 = inlined_call_operand.hbm [shape: f32[2,2,8,12], index: 23, kind: output, shape index: {1}]
  %24 = xla_tuple %s22, %s23
  %s25 = sld [smem:[#allocation0]]
  $region133: #{transformer_model_decoder.1} parent=0
    _
  %s27 = ssub.s32 1, %s25
  %s28 = scalar_select 0, %s27, %s25
  $region1: #{transformer_model_decoder.1} parent=0
    #allocation3 [shape = 'u8[16384]{0}', space=vmem, size = 0x4000, scoped, tag = 'output window, operand 1']
    #allocation4 [shape = 's32[2]{0}', space=sflag, size = 0x8, scoped, tag = 'scoped memory for transformer_model_decoder.1']
    %29 = vsyncpa [#allocation4], 0
    %s30 = scalar_lea.sflag [#allocation4], 1
    %31 = vsyncpa %s30, 0
    loop: start=0, step=1, limit=4
    $region2: #{transformer_model_decoder.1} parent=1 // loop_pre_header
      _
    $region3: #{transformer_model_decoder.1} parent=1 // loop_header
      %s33 = sphi 0, %s37
      %p34 = scmp.ge.s32.totalorder %s33, 4
      %s41 = sphi 0, %s41
      %s43 = sphi 0, %s41
      %s44 = sphi 0, %s43
      %s58 = sphi 0, %s44
      %s62 = sphi 0, %s62
      %s64 = sphi 0, %s62
      %s65 = sphi 0, %s64
      %s79 = sphi 0, %s65
      %s83 = sphi 0, %s83
      %s85 = sphi 0, %s83
      %s86 = sphi 0, %s85
      %s100 = sphi 0, %s86
      %s104 = sphi 0, %s104
      %s106 = sphi 0, %s104
      %s107 = sphi 0, %s106
      %s121 = sphi 0, %s107
      %s127 = sphi 0, %s129
      %s130 = sphi 0, %s127
      %s131 = sphi 0, %s130
      %s147 = sphi 0, %s131
      %s153 = sphi 0, %s155
      %s156 = sphi 0, %s153
      %s157 = sphi 0, %s156
      %s173 = sphi 0, %s157
      %s179 = sphi 0, %s181
      %s182 = sphi 0, %s179
      %s183 = sphi 0, %s182
      %s199 = sphi 0, %s183
      %s205 = sphi 0, %s207
      %s208 = sphi 0, %s205
      %s209 = sphi 0, %s208
      %s225 = sphi 0, %s209
      %s231 = sphi 0, %s233
      %s234 = sphi 0, %s231
      %s235 = sphi 0, %s234
      %s251 = sphi 0, %s235
      %s257 = sphi 0, %s259
      %s260 = sphi 0, %s257
      %s261 = sphi 0, %s260
      %s277 = sphi 0, %s261
      %s283 = sphi 0, %s285
      %s286 = sphi 0, %s283
      %s287 = sphi 0, %s286
      %s303 = sphi 0, %s287
      %s309 = sphi 0, %s311
      %s312 = sphi 0, %s309
      %s313 = sphi 0, %s312
      %s329 = sphi 0, %s313
      %s335 = sphi 0, %s337
      %s338 = sphi 0, %s335
      %s339 = sphi 0, %s338
      %s355 = sphi 0, %s339
      %s361 = sphi 0, %s363
      %s364 = sphi 0, %s361
      %s365 = sphi 0, %s364
      %s381 = sphi 0, %s365
      %s387 = sphi 0, %s389
      %s390 = sphi 0, %s387
      %s391 = sphi 0, %s390
      %s407 = sphi 0, %s391
      %s413 = sphi 0, %s415
      %s416 = sphi 0, %s413
      %s417 = sphi 0, %s416
      %s433 = sphi 0, %s417
      %s439 = sphi 0, %s441
      %s442 = sphi 0, %s439
      %s443 = sphi 0, %s442
      %s459 = sphi 0, %s443
      %s465 = sphi 0, %s467
      %s468 = sphi 0, %s465
      %s469 = sphi 0, %s468
      %s485 = sphi 0, %s469
      %s491 = sphi 0, %s493
      %s494 = sphi 0, %s491
      %s495 = sphi 0, %s494
      %s511 = sphi 0, %s495
      %s517 = sphi 0, %s519
      %s520 = sphi 0, %s517
      %s521 = sphi 0, %s520
      %s537 = sphi 0, %s521
      %s543 = sphi 0, %s545
      %s546 = sphi 0, %s543
      %s547 = sphi 0, %s546
      %s563 = sphi 0, %s547
      %s569 = sphi 0, %s571
      %s572 = sphi 0, %s569
      %s573 = sphi 0, %s572
      %s589 = sphi 0, %s573
      %s593 = sphi 0, %s593
      %s595 = sphi 0, %s593
      %s596 = sphi 0, %s595
      %s610 = sphi 0, %s596
      %s616 = sphi 0, %s618
      %s619 = sphi 0, %s616
      %s620 = sphi 0, %s619
      %s636 = sphi 0, %s620
    $region4: #{transformer_model_decoder.1} parent=1 // loop_header_branch
      %36 = sbr.rel (%p34) target = $region8
    $region5: #{transformer_model_decoder.1} parent=1 // loop_body
      %s38 = ssub.s32 %s33, 1
      %s39 = ssub.s32 %s33, 2
      %s40 = sadd.s32 %s33, 1
      %s42 = sadd.s32 %s41, 1
      %p45 = scmp.eq.s32.totalorder %s33, 1
      %p46 = scmp.ne.s32.totalorder %s41, %s43
      %p47 = scmp.eq.s32.totalorder %s33, 0
      %p48 = por %p46, %p47
      %p49 = scmp.ne.s32.totalorder %s41, %s43
      %p50 = scmp.eq.s32.totalorder %s38, 1
      %p51 = por %p49, %p50
      %p52 = scmp.ne.s32.totalorder %s43, %s44
      %p53 = scmp.eq.s32.totalorder %s38, 0
      %p54 = por %p52, %p53
      %p55 = scmp.ne.s32.totalorder %s43, %s44
      %p56 = scmp.eq.s32.totalorder %s39, 1
      %p57 = por %p55, %p56
      %p59 = scmp.ne.s32.totalorder %s44, %s58
      %p60 = scmp.eq.s32.totalorder %s39, 0
      %p61 = por %p59, %p60
      %s63 = sadd.s32 %s62, 1
      %p66 = scmp.eq.s32.totalorder %s33, 1
      %p67 = scmp.ne.s32.totalorder %s62, %s64
      %p68 = scmp.eq.s32.totalorder %s33, 0
      %p69 = por %p67, %p68
      %p70 = scmp.ne.s32.totalorder %s62, %s64
      %p71 = scmp.eq.s32.totalorder %s38, 1
      %p72 = por %p70, %p71
      %p73 = scmp.ne.s32.totalorder %s64, %s65
      %p74 = scmp.eq.s32.totalorder %s38, 0
      %p75 = por %p73, %p74
      %p76 = scmp.ne.s32.totalorder %s64, %s65
      %p77 = scmp.eq.s32.totalorder %s39, 1
      %p78 = por %p76, %p77
      %p80 = scmp.ne.s32.totalorder %s65, %s79
      %p81 = scmp.eq.s32.totalorder %s39, 0
      %p82 = por %p80, %p81
      %s84 = sadd.s32 %s83, 1
      %p87 = scmp.eq.s32.totalorder %s33, 1
      %p88 = scmp.ne.s32.totalorder %s83, %s85
      %p89 = scmp.eq.s32.totalorder %s33, 0
      %p90 = por %p88, %p89
      %p91 = scmp.ne.s32.totalorder %s83, %s85
      %p92 = scmp.eq.s32.totalorder %s38, 1
      %p93 = por %p91, %p92
      %p94 = scmp.ne.s32.totalorder %s85, %s86
      %p95 = scmp.eq.s32.totalorder %s38, 0
      %p96 = por %p94, %p95
      %p97 = scmp.ne.s32.totalorder %s85, %s86
      %p98 = scmp.eq.s32.totalorder %s39, 1
      %p99 = por %p97, %p98
      %p101 = scmp.ne.s32.totalorder %s86, %s100
      %p102 = scmp.eq.s32.totalorder %s39, 0
      %p103 = por %p101, %p102
      %s105 = sadd.s32 %s104, 1
      %p108 = scmp.eq.s32.totalorder %s33, 1
      %p109 = scmp.ne.s32.totalorder %s104, %s106
      %p110 = scmp.eq.s32.totalorder %s33, 0
      %p111 = por %p109, %p110
      %p112 = scmp.ne.s32.totalorder %s104, %s106
      %p113 = scmp.eq.s32.totalorder %s38, 1
      %p114 = por %p112, %p113
      %p115 = scmp.ne.s32.totalorder %s106, %s107
      %p116 = scmp.eq.s32.totalorder %s38, 0
      %p117 = por %p115, %p116
      %p118 = scmp.ne.s32.totalorder %s106, %s107
      %p119 = scmp.eq.s32.totalorder %s39, 1
      %p120 = por %p118, %p119
      %p122 = scmp.ne.s32.totalorder %s107, %s121
      %p123 = scmp.eq.s32.totalorder %s39, 0
      %p124 = por %p122, %p123
      %s125 = ssub.s32 %s33, %s40
      %p126 = scmp.eq.s32.totalorder %s125, 0
      %s128 = sadd.s32 %s127, 1
      %s129 = scalar_select %p126, %s127, %s128
      %p132 = pneg %p126
      %p133 = scmp.eq.s32.totalorder %s33, 1
      %p134 = por %p132, %p133
      %p135 = scmp.ne.s32.totalorder %s127, %s130
      %p136 = scmp.eq.s32.totalorder %s33, 0
      %p137 = por %p135, %p136
      %p138 = scmp.ne.s32.totalorder %s127, %s130
      %p139 = scmp.eq.s32.totalorder %s38, 1
      %p140 = por %p138, %p139
      %p141 = scmp.ne.s32.totalorder %s130, %s131
      %p142 = scmp.eq.s32.totalorder %s38, 0
      %p143 = por %p141, %p142
      %p144 = scmp.ne.s32.totalorder %s130, %s131
      %p145 = scmp.eq.s32.totalorder %s39, 1
      %p146 = por %p144, %p145
      %p148 = scmp.ne.s32.totalorder %s131, %s147
      %p149 = scmp.eq.s32.totalorder %s39, 0
      %p150 = por %p148, %p149
      %s151 = ssub.s32 %s33, %s40
      %p152 = scmp.eq.s32.totalorder %s151, 0
      %s154 = sadd.s32 %s153, 1
      %s155 = scalar_select %p152, %s153, %s154
      %p158 = pneg %p152
      %p159 = scmp.eq.s32.totalorder %s33, 1
      %p160 = por %p158, %p159
      %p161 = scmp.ne.s32.totalorder %s153, %s156
      %p162 = scmp.eq.s32.totalorder %s33, 0
      %p163 = por %p161, %p162
      %p164 = scmp.ne.s32.totalorder %s153, %s156
      %p165 = scmp.eq.s32.totalorder %s38, 1
      %p166 = por %p164, %p165
      %p167 = scmp.ne.s32.totalorder %s156, %s157
      %p168 = scmp.eq.s32.totalorder %s38, 0
      %p169 = por %p167, %p168
      %p170 = scmp.ne.s32.totalorder %s156, %s157
      %p171 = scmp.eq.s32.totalorder %s39, 1
      %p172 = por %p170, %p171
      %p174 = scmp.ne.s32.totalorder %s157, %s173
      %p175 = scmp.eq.s32.totalorder %s39, 0
      %p176 = por %p174, %p175
      %s177 = ssub.s32 %s33, %s40
      %p178 = scmp.eq.s32.totalorder %s177, 0
      %s180 = sadd.s32 %s179, 1
      %s181 = scalar_select %p178, %s179, %s180
      %p184 = pneg %p178
      %p185 = scmp.eq.s32.totalorder %s33, 1
      %p186 = por %p184, %p185
      %p187 = scmp.ne.s32.totalorder %s179, %s182
      %p188 = scmp.eq.s32.totalorder %s33, 0
      %p189 = por %p187, %p188
      %p190 = scmp.ne.s32.totalorder %s179, %s182
      %p191 = scmp.eq.s32.totalorder %s38, 1
      %p192 = por %p190, %p191
      %p193 = scmp.ne.s32.totalorder %s182, %s183
      %p194 = scmp.eq.s32.totalorder %s38, 0
      %p195 = por %p193, %p194
      %p196 = scmp.ne.s32.totalorder %s182, %s183
      %p197 = scmp.eq.s32.totalorder %s39, 1
      %p198 = por %p196, %p197
      %p200 = scmp.ne.s32.totalorder %s183, %s199
      %p201 = scmp.eq.s32.totalorder %s39, 0
      %p202 = por %p200, %p201
      %s203 = ssub.s32 %s33, %s40
      %p204 = scmp.eq.s32.totalorder %s203, 0
      %s206 = sadd.s32 %s205, 1
      %s207 = scalar_select %p204, %s205, %s206
      %p210 = pneg %p204
      %p211 = scmp.eq.s32.totalorder %s33, 1
      %p212 = por %p210, %p211
      %p213 = scmp.ne.s32.totalorder %s205, %s208
      %p214 = scmp.eq.s32.totalorder %s33, 0
      %p215 = por %p213, %p214
      %p216 = scmp.ne.s32.totalorder %s205, %s208
      %p217 = scmp.eq.s32.totalorder %s38, 1
      %p218 = por %p216, %p217
      %p219 = scmp.ne.s32.totalorder %s208, %s209
      %p220 = scmp.eq.s32.totalorder %s38, 0
      %p221 = por %p219, %p220
      %p222 = scmp.ne.s32.totalorder %s208, %s209
      %p223 = scmp.eq.s32.totalorder %s39, 1
      %p224 = por %p222, %p223
      %p226 = scmp.ne.s32.totalorder %s209, %s225
      %p227 = scmp.eq.s32.totalorder %s39, 0
      %p228 = por %p226, %p227
      %s229 = ssub.s32 %s33, %s40
      %p230 = scmp.eq.s32.totalorder %s229, 0
      %s232 = sadd.s32 %s231, 1
      %s233 = scalar_select %p230, %s231, %s232
      %p236 = pneg %p230
      %p237 = scmp.eq.s32.totalorder %s33, 1
      %p238 = por %p236, %p237
      %p239 = scmp.ne.s32.totalorder %s231, %s234
      %p240 = scmp.eq.s32.totalorder %s33, 0
      %p241 = por %p239, %p240
      %p242 = scmp.ne.s32.totalorder %s231, %s234
      %p243 = scmp.eq.s32.totalorder %s38, 1
      %p244 = por %p242, %p243
      %p245 = scmp.ne.s32.totalorder %s234, %s235
      %p246 = scmp.eq.s32.totalorder %s38, 0
      %p247 = por %p245, %p246
      %p248 = scmp.ne.s32.totalorder %s234, %s235
      %p249 = scmp.eq.s32.totalorder %s39, 1
      %p250 = por %p248, %p249
      %p252 = scmp.ne.s32.totalorder %s235, %s251
      %p253 = scmp.eq.s32.totalorder %s39, 0
      %p254 = por %p252, %p253
      %s255 = ssub.s32 %s33, %s40
      %p256 = scmp.eq.s32.totalorder %s255, 0
      %s258 = sadd.s32 %s257, 1
      %s259 = scalar_select %p256, %s257, %s258
      %p262 = pneg %p256
      %p263 = scmp.eq.s32.totalorder %s33, 1
      %p264 = por %p262, %p263
      %p265 = scmp.ne.s32.totalorder %s257, %s260
      %p266 = scmp.eq.s32.totalorder %s33, 0
      %p267 = por %p265, %p266
      %p268 = scmp.ne.s32.totalorder %s257, %s260
      %p269 = scmp.eq.s32.totalorder %s38, 1
      %p270 = por %p268, %p269
      %p271 = scmp.ne.s32.totalorder %s260, %s261
      %p272 = scmp.eq.s32.totalorder %s38, 0
      %p273 = por %p271, %p272
      %p274 = scmp.ne.s32.totalorder %s260, %s261
      %p275 = scmp.eq.s32.totalorder %s39, 1
      %p276 = por %p274, %p275
      %p278 = scmp.ne.s32.totalorder %s261, %s277
      %p279 = scmp.eq.s32.totalorder %s39, 0
      %p280 = por %p278, %p279
      %s281 = ssub.s32 %s33, %s40
      %p282 = scmp.eq.s32.totalorder %s281, 0
      %s284 = sadd.s32 %s283, 1
      %s285 = scalar_select %p282, %s283, %s284
      %p288 = pneg %p282
      %p289 = scmp.eq.s32.totalorder %s33, 1
      %p290 = por %p288, %p289
      %p291 = scmp.ne.s32.totalorder %s283, %s286
      %p292 = scmp.eq.s32.totalorder %s33, 0
      %p293 = por %p291, %p292
      %p294 = scmp.ne.s32.totalorder %s283, %s286
      %p295 = scmp.eq.s32.totalorder %s38, 1
      %p296 = por %p294, %p295
      %p297 = scmp.ne.s32.totalorder %s286, %s287
      %p298 = scmp.eq.s32.totalorder %s38, 0
      %p299 = por %p297, %p298
      %p300 = scmp.ne.s32.totalorder %s286, %s287
      %p301 = scmp.eq.s32.totalorder %s39, 1
      %p302 = por %p300, %p301
      %p304 = scmp.ne.s32.totalorder %s287, %s303
      %p305 = scmp.eq.s32.totalorder %s39, 0
      %p306 = por %p304, %p305
      %s307 = ssub.s32 %s33, %s40
      %p308 = scmp.eq.s32.totalorder %s307, 0
      %s310 = sadd.s32 %s309, 1
      %s311 = scalar_select %p308, %s309, %s310
      %p314 = pneg %p308
      %p315 = scmp.eq.s32.totalorder %s33, 1
      %p316 = por %p314, %p315
      %p317 = scmp.ne.s32.totalorder %s309, %s312
      %p318 = scmp.eq.s32.totalorder %s33, 0
      %p319 = por %p317, %p318
      %p320 = scmp.ne.s32.totalorder %s309, %s312
      %p321 = scmp.eq.s32.totalorder %s38, 1
      %p322 = por %p320, %p321
      %p323 = scmp.ne.s32.totalorder %s312, %s313
      %p324 = scmp.eq.s32.totalorder %s38, 0
      %p325 = por %p323, %p324
      %p326 = scmp.ne.s32.totalorder %s312, %s313
      %p327 = scmp.eq.s32.totalorder %s39, 1
      %p328 = por %p326, %p327
      %p330 = scmp.ne.s32.totalorder %s313, %s329
      %p331 = scmp.eq.s32.totalorder %s39, 0
      %p332 = por %p330, %p331
      %s333 = ssub.s32 %s33, %s40
      %p334 = scmp.eq.s32.totalorder %s333, 0
      %s336 = sadd.s32 %s335, 1
      %s337 = scalar_select %p334, %s335, %s336
      %p340 = pneg %p334
      %p341 = scmp.eq.s32.totalorder %s33, 1
      %p342 = por %p340, %p341
      %p343 = scmp.ne.s32.totalorder %s335, %s338
      %p344 = scmp.eq.s32.totalorder %s33, 0
      %p345 = por %p343, %p344
      %p346 = scmp.ne.s32.totalorder %s335, %s338
      %p347 = scmp.eq.s32.totalorder %s38, 1
      %p348 = por %p346, %p347
      %p349 = scmp.ne.s32.totalorder %s338, %s339
      %p350 = scmp.eq.s32.totalorder %s38, 0
      %p351 = por %p349, %p350
      %p352 = scmp.ne.s32.totalorder %s338, %s339
      %p353 = scmp.eq.s32.totalorder %s39, 1
      %p354 = por %p352, %p353
      %p356 = scmp.ne.s32.totalorder %s339, %s355
      %p357 = scmp.eq.s32.totalorder %s39, 0
      %p358 = por %p356, %p357
      %s359 = ssub.s32 %s33, %s40
      %p360 = scmp.eq.s32.totalorder %s359, 0
      %s362 = sadd.s32 %s361, 1
      %s363 = scalar_select %p360, %s361, %s362
      %p366 = pneg %p360
      %p367 = scmp.eq.s32.totalorder %s33, 1
      %p368 = por %p366, %p367
      %p369 = scmp.ne.s32.totalorder %s361, %s364
      %p370 = scmp.eq.s32.totalorder %s33, 0
      %p371 = por %p369, %p370
      %p372 = scmp.ne.s32.totalorder %s361, %s364
      %p373 = scmp.eq.s32.totalorder %s38, 1
      %p374 = por %p372, %p373
      %p375 = scmp.ne.s32.totalorder %s364, %s365
      %p376 = scmp.eq.s32.totalorder %s38, 0
      %p377 = por %p375, %p376
      %p378 = scmp.ne.s32.totalorder %s364, %s365
      %p379 = scmp.eq.s32.totalorder %s39, 1
      %p380 = por %p378, %p379
      %p382 = scmp.ne.s32.totalorder %s365, %s381
      %p383 = scmp.eq.s32.totalorder %s39, 0
      %p384 = por %p382, %p383
      %s385 = ssub.s32 %s33, %s40
      %p386 = scmp.eq.s32.totalorder %s385, 0
      %s388 = sadd.s32 %s387, 1
      %s389 = scalar_select %p386, %s387, %s388
      %p392 = pneg %p386
      %p393 = scmp.eq.s32.totalorder %s33, 1
      %p394 = por %p392, %p393
      %p395 = scmp.ne.s32.totalorder %s387, %s390
      %p396 = scmp.eq.s32.totalorder %s33, 0
      %p397 = por %p395, %p396
      %p398 = scmp.ne.s32.totalorder %s387, %s390
      %p399 = scmp.eq.s32.totalorder %s38, 1
      %p400 = por %p398, %p399
      %p401 = scmp.ne.s32.totalorder %s390, %s391
      %p402 = scmp.eq.s32.totalorder %s38, 0
      %p403 = por %p401, %p402
      %p404 = scmp.ne.s32.totalorder %s390, %s391
      %p405 = scmp.eq.s32.totalorder %s39, 1
      %p406 = por %p404, %p405
      %p408 = scmp.ne.s32.totalorder %s391, %s407
      %p409 = scmp.eq.s32.totalorder %s39, 0
      %p410 = por %p408, %p409
      %s411 = ssub.s32 %s33, %s40
      %p412 = scmp.eq.s32.totalorder %s411, 0
      %s414 = sadd.s32 %s413, 1
      %s415 = scalar_select %p412, %s413, %s414
      %p418 = pneg %p412
      %p419 = scmp.eq.s32.totalorder %s33, 1
      %p420 = por %p418, %p419
      %p421 = scmp.ne.s32.totalorder %s413, %s416
      %p422 = scmp.eq.s32.totalorder %s33, 0
      %p423 = por %p421, %p422
      %p424 = scmp.ne.s32.totalorder %s413, %s416
      %p425 = scmp.eq.s32.totalorder %s38, 1
      %p426 = por %p424, %p425
      %p427 = scmp.ne.s32.totalorder %s416, %s417
      %p428 = scmp.eq.s32.totalorder %s38, 0
      %p429 = por %p427, %p428
      %p430 = scmp.ne.s32.totalorder %s416, %s417
      %p431 = scmp.eq.s32.totalorder %s39, 1
      %p432 = por %p430, %p431
      %p434 = scmp.ne.s32.totalorder %s417, %s433
      %p435 = scmp.eq.s32.totalorder %s39, 0
      %p436 = por %p434, %p435
      %s437 = ssub.s32 %s33, %s40
      %p438 = scmp.eq.s32.totalorder %s437, 0
      %s440 = sadd.s32 %s439, 1
      %s441 = scalar_select %p438, %s439, %s440
      %p444 = pneg %p438
      %p445 = scmp.eq.s32.totalorder %s33, 1
      %p446 = por %p444, %p445
      %p447 = scmp.ne.s32.totalorder %s439, %s442
      %p448 = scmp.eq.s32.totalorder %s33, 0
      %p449 = por %p447, %p448
      %p450 = scmp.ne.s32.totalorder %s439, %s442
      %p451 = scmp.eq.s32.totalorder %s38, 1
      %p452 = por %p450, %p451
      %p453 = scmp.ne.s32.totalorder %s442, %s443
      %p454 = scmp.eq.s32.totalorder %s38, 0
      %p455 = por %p453, %p454
      %p456 = scmp.ne.s32.totalorder %s442, %s443
      %p457 = scmp.eq.s32.totalorder %s39, 1
      %p458 = por %p456, %p457
      %p460 = scmp.ne.s32.totalorder %s443, %s459
      %p461 = scmp.eq.s32.totalorder %s39, 0
      %p462 = por %p460, %p461
      %s463 = ssub.s32 %s33, %s40
      %p464 = scmp.eq.s32.totalorder %s463, 0
      %s466 = sadd.s32 %s465, 1
      %s467 = scalar_select %p464, %s465, %s466
      %p470 = pneg %p464
      %p471 = scmp.eq.s32.totalorder %s33, 1
      %p472 = por %p470, %p471
      %p473 = scmp.ne.s32.totalorder %s465, %s468
      %p474 = scmp.eq.s32.totalorder %s33, 0
      %p475 = por %p473, %p474
      %p476 = scmp.ne.s32.totalorder %s465, %s468
      %p477 = scmp.eq.s32.totalorder %s38, 1
      %p478 = por %p476, %p477
      %p479 = scmp.ne.s32.totalorder %s468, %s469
      %p480 = scmp.eq.s32.totalorder %s38, 0
      %p481 = por %p479, %p480
      %p482 = scmp.ne.s32.totalorder %s468, %s469
      %p483 = scmp.eq.s32.totalorder %s39, 1
      %p484 = por %p482, %p483
      %p486 = scmp.ne.s32.totalorder %s469, %s485
      %p487 = scmp.eq.s32.totalorder %s39, 0
      %p488 = por %p486, %p487
      %s489 = ssub.s32 %s33, %s40
      %p490 = scmp.eq.s32.totalorder %s489, 0
      %s492 = sadd.s32 %s491, 1
      %s493 = scalar_select %p490, %s491, %s492
      %p496 = pneg %p490
      %p497 = scmp.eq.s32.totalorder %s33, 1
      %p498 = por %p496, %p497
      %p499 = scmp.ne.s32.totalorder %s491, %s494
      %p500 = scmp.eq.s32.totalorder %s33, 0
      %p501 = por %p499, %p500
      %p502 = scmp.ne.s32.totalorder %s491, %s494
      %p503 = scmp.eq.s32.totalorder %s38, 1
      %p504 = por %p502, %p503
      %p505 = scmp.ne.s32.totalorder %s494, %s495
      %p506 = scmp.eq.s32.totalorder %s38, 0
      %p507 = por %p505, %p506
      %p508 = scmp.ne.s32.totalorder %s494, %s495
      %p509 = scmp.eq.s32.totalorder %s39, 1
      %p510 = por %p508, %p509
      %p512 = scmp.ne.s32.totalorder %s495, %s511
      %p513 = scmp.eq.s32.totalorder %s39, 0
      %p514 = por %p512, %p513
      %s515 = ssub.s32 %s33, %s40
      %p516 = scmp.eq.s32.totalorder %s515, 0
      %s518 = sadd.s32 %s517, 1
      %s519 = scalar_select %p516, %s517, %s518
      %p522 = pneg %p516
      %p523 = scmp.eq.s32.totalorder %s33, 1
      %p524 = por %p522, %p523
      %p525 = scmp.ne.s32.totalorder %s517, %s520
      %p526 = scmp.eq.s32.totalorder %s33, 0
      %p527 = por %p525, %p526
      %p528 = scmp.ne.s32.totalorder %s517, %s520
      %p529 = scmp.eq.s32.totalorder %s38, 1
      %p530 = por %p528, %p529
      %p531 = scmp.ne.s32.totalorder %s520, %s521
      %p532 = scmp.eq.s32.totalorder %s38, 0
      %p533 = por %p531, %p532
      %p534 = scmp.ne.s32.totalorder %s520, %s521
      %p535 = scmp.eq.s32.totalorder %s39, 1
      %p536 = por %p534, %p535
      %p538 = scmp.ne.s32.totalorder %s521, %s537
      %p539 = scmp.eq.s32.totalorder %s39, 0
      %p540 = por %p538, %p539
      %s541 = ssub.s32 %s33, %s40
      %p542 = scmp.eq.s32.totalorder %s541, 0
      %s544 = sadd.s32 %s543, 1
      %s545 = scalar_select %p542, %s543, %s544
      %p548 = pneg %p542
      %p549 = scmp.eq.s32.totalorder %s33, 1
      %p550 = por %p548, %p549
      %p551 = scmp.ne.s32.totalorder %s543, %s546
      %p552 = scmp.eq.s32.totalorder %s33, 0
      %p553 = por %p551, %p552
      %p554 = scmp.ne.s32.totalorder %s543, %s546
      %p555 = scmp.eq.s32.totalorder %s38, 1
      %p556 = por %p554, %p555
      %p557 = scmp.ne.s32.totalorder %s546, %s547
      %p558 = scmp.eq.s32.totalorder %s38, 0
      %p559 = por %p557, %p558
      %p560 = scmp.ne.s32.totalorder %s546, %s547
      %p561 = scmp.eq.s32.totalorder %s39, 1
      %p562 = por %p560, %p561
      %p564 = scmp.ne.s32.totalorder %s547, %s563
      %p565 = scmp.eq.s32.totalorder %s39, 0
      %p566 = por %p564, %p565
      %s567 = ssub.s32 %s33, %s40
      %p568 = scmp.eq.s32.totalorder %s567, 0
      %s570 = sadd.s32 %s569, 1
      %s571 = scalar_select %p568, %s569, %s570
      %p574 = pneg %p568
      %p575 = scmp.eq.s32.totalorder %s33, 1
      %p576 = por %p574, %p575
      %p577 = scmp.ne.s32.totalorder %s569, %s572
      %p578 = scmp.eq.s32.totalorder %s33, 0
      %p579 = por %p577, %p578
      %p580 = scmp.ne.s32.totalorder %s569, %s572
      %p581 = scmp.eq.s32.totalorder %s38, 1
      %p582 = por %p580, %p581
      %p583 = scmp.ne.s32.totalorder %s572, %s573
      %p584 = scmp.eq.s32.totalorder %s38, 0
      %p585 = por %p583, %p584
      %p586 = scmp.ne.s32.totalorder %s572, %s573
      %p587 = scmp.eq.s32.totalorder %s39, 1
      %p588 = por %p586, %p587
      %p590 = scmp.ne.s32.totalorder %s573, %s589
      %p591 = scmp.eq.s32.totalorder %s39, 0
      %p592 = por %p590, %p591
      %s594 = sadd.s32 %s593, 1
      %p597 = scmp.eq.s32.totalorder %s33, 1
      %p598 = scmp.ne.s32.totalorder %s593, %s595
      %p599 = scmp.eq.s32.totalorder %s33, 0
      %p600 = por %p598, %p599
      %p601 = scmp.ne.s32.totalorder %s593, %s595
      %p602 = scmp.eq.s32.totalorder %s38, 1
      %p603 = por %p601, %p602
      %p604 = scmp.ne.s32.totalorder %s595, %s596
      %p605 = scmp.eq.s32.totalorder %s38, 0
      %p606 = por %p604, %p605
      %p607 = scmp.ne.s32.totalorder %s595, %s596
      %p608 = scmp.eq.s32.totalorder %s39, 1
      %p609 = por %p607, %p608
      %p611 = scmp.ne.s32.totalorder %s596, %s610
      %p612 = scmp.eq.s32.totalorder %s39, 0
      %p613 = por %p611, %p612
      %s614 = ssub.s32 %s33, %s40
      %p615 = scmp.eq.s32.totalorder %s614, 0
      %s617 = sadd.s32 %s616, 1
      %s618 = scalar_select %p615, %s616, %s617
      %p621 = pneg %p615
      %p622 = scmp.eq.s32.totalorder %s33, 1
      %p623 = por %p621, %p622
      %p624 = scmp.ne.s32.totalorder %s616, %s619
      %p625 = scmp.eq.s32.totalorder %s33, 0
      %p626 = por %p624, %p625
      %p627 = scmp.ne.s32.totalorder %s616, %s619
      %p628 = scmp.eq.s32.totalorder %s38, 1
      %p629 = por %p627, %p628
      %p630 = scmp.ne.s32.totalorder %s619, %s620
      %p631 = scmp.eq.s32.totalorder %s38, 0
      %p632 = por %p630, %p631
      %p633 = scmp.ne.s32.totalorder %s619, %s620
      %p634 = scmp.eq.s32.totalorder %s39, 1
      %p635 = por %p633, %p634
      %p637 = scmp.ne.s32.totalorder %s620, %s636
      %p638 = scmp.eq.s32.totalorder %s39, 0
      %p639 = por %p637, %p638
      %p640 = scmp.le.s32.totalorder 1, %s33
      %p641 = scmp.lt.s32.totalorder %s33, 3
      %p642 = pnand %p640, %p641
      %p643 = pneg %p642
      // Predicated region
      $region9: #{transformer_model_decoder.1} parent=5 // pred_check
        _
      $region10: #{transformer_model_decoder.1} parent=5 // pred_check_branch
        %645 = sbr.rel (%p642) target = $region12
      $region11: #{transformer_model_decoder.1} parent=5 // pred_region
        %s646 = ssub.s32 %s33, 1
        // Predicated region
        $region13: #{transformer_model_decoder.1} parent=11 // pred_check
          %p647 = pneg %p54
        $region14: #{transformer_model_decoder.1} parent=11 // pred_check_branch
          %649 = sbr.rel (%p647) target = $region16
        $region15: #{transformer_model_decoder.1} parent=11 // pred_region
          _
        $region16: #{transformer_model_decoder.1} parent=11 // pred_fallthru
          _
        // Predicated region
        $region17: #{transformer_model_decoder.1} parent=11 // pred_check
          %p650 = pneg %p75
        $region18: #{transformer_model_decoder.1} parent=11 // pred_check_branch
          %652 = sbr.rel (%p650) target = $region20
        $region19: #{transformer_model_decoder.1} parent=11 // pred_region
          _
        $region20: #{transformer_model_decoder.1} parent=11 // pred_fallthru
          _
        // Predicated region
        $region21: #{transformer_model_decoder.1} parent=11 // pred_check
          %p653 = pneg %p96
        $region22: #{transformer_model_decoder.1} parent=11 // pred_check_branch
          %655 = sbr.rel (%p653) target = $region24
        $region23: #{transformer_model_decoder.1} parent=11 // pred_region
          _
        $region24: #{transformer_model_decoder.1} parent=11 // pred_fallthru
          _
        // Predicated region
        $region25: #{transformer_model_decoder.1} parent=11 // pred_check
          %p656 = pneg %p117
        $region26: #{transformer_model_decoder.1} parent=11 // pred_check_branch
          %658 = sbr.rel (%p656) target = $region28
        $region27: #{transformer_model_decoder.1} parent=11 // pred_region
          _
        $region28: #{transformer_model_decoder.1} parent=11 // pred_fallthru
          _
      $region12: #{transformer_model_decoder.1} parent=5 // pred_fallthru
        _
      %p659 = scmp.lt.s32.totalorder %s33, 2
      // Predicated region
      $region29: #{transformer_model_decoder.1} parent=5 // pred_check
        %p660 = pneg %p659
      $region30: #{transformer_model_decoder.1} parent=5 // pred_check_branch
        %662 = sbr.rel (%p660) target = $region32
      $region31: #{transformer_model_decoder.1} parent=5 // pred_region
        // Predicated region
        $region33: #{transformer_model_decoder.1} parent=31 // pred_check
          %p663 = pneg %p137
        $region34: #{transformer_model_decoder.1} parent=31 // pred_check_branch
          %665 = sbr.rel (%p663) target = $region36
        $region35: #{transformer_model_decoder.1} parent=31 // pred_region
          %p666 = scmp.lt.s32.totalorder %s33, 1
          %s667 = scalar_select %p666, %s33, 1
          %s668 = smul.addr %s667, 4
          %s669 = smul.addr %s668, 8
          %s670 = scalar_lea.vmem %s4, %s669
        $region36: #{transformer_model_decoder.1} parent=31 // pred_fallthru
          _
        // Predicated region
        $region37: #{transformer_model_decoder.1} parent=31 // pred_check
          %p671 = pneg %p163
        $region38: #{transformer_model_decoder.1} parent=31 // pred_check_branch
          %673 = sbr.rel (%p671) target = $region40
        $region39: #{transformer_model_decoder.1} parent=31 // pred_region
          %p674 = scmp.lt.s32.totalorder %s33, 1
          %s675 = scalar_select %p674, %s33, 1
          %s676 = scalar_lea.vmem %s5, %s675
        $region40: #{transformer_model_decoder.1} parent=31 // pred_fallthru
          _
        // Predicated region
        $region41: #{transformer_model_decoder.1} parent=31 // pred_check
          %p677 = pneg %p189
        $region42: #{transformer_model_decoder.1} parent=31 // pred_check_branch
          %679 = sbr.rel (%p677) target = $region44
        $region43: #{transformer_model_decoder.1} parent=31 // pred_region
          %p680 = scmp.lt.s32.totalorder %s33, 1
          %s681 = scalar_select %p680, %s33, 1
          %s682 = smul.addr %s681, 4
          %s683 = smul.addr %s682, 8
          %s684 = scalar_lea.vmem %s6, %s683
        $region44: #{transformer_model_decoder.1} parent=31 // pred_fallthru
          _
        // Predicated region
        $region45: #{transformer_model_decoder.1} parent=31 // pred_check
          %p685 = pneg %p215
        $region46: #{transformer_model_decoder.1} parent=31 // pred_check_branch
          %687 = sbr.rel (%p685) target = $region48
        $region47: #{transformer_model_decoder.1} parent=31 // pred_region
          %p688 = scmp.lt.s32.totalorder %s33, 1
          %s689 = scalar_select %p688, %s33, 1
          %s690 = scalar_lea.vmem %s7, %s689
        $region48: #{transformer_model_decoder.1} parent=31 // pred_fallthru
          _
        // Predicated region
        $region49: #{transformer_model_decoder.1} parent=31 // pred_check
          %p691 = pneg %p241
        $region50: #{transformer_model_decoder.1} parent=31 // pred_check_branch
          %693 = sbr.rel (%p691) target = $region52
        $region51: #{transformer_model_decoder.1} parent=31 // pred_region
          %p694 = scmp.lt.s32.totalorder %s33, 1
          %s695 = scalar_select %p694, %s33, 1
          %s696 = scalar_lea.vmem %s8, %s695
        $region52: #{transformer_model_decoder.1} parent=31 // pred_fallthru
          _
        // Predicated region
        $region53: #{transformer_model_decoder.1} parent=31 // pred_check
          %p697 = pneg %p267
        $region54: #{transformer_model_decoder.1} parent=31 // pred_check_branch
          %699 = sbr.rel (%p697) target = $region56
        $region55: #{transformer_model_decoder.1} parent=31 // pred_region
          %p700 = scmp.lt.s32.totalorder %s33, 1
          %s701 = scalar_select %p700, %s33, 1
          %s702 = scalar_lea.vmem %s9, %s701
        $region56: #{transformer_model_decoder.1} parent=31 // pred_fallthru
          _
        // Predicated region
        $region57: #{transformer_model_decoder.1} parent=31 // pred_check
          %p703 = pneg %p293
        $region58: #{transformer_model_decoder.1} parent=31 // pred_check_branch
          %705 = sbr.rel (%p703) target = $region60
        $region59: #{transformer_model_decoder.1} parent=31 // pred_region
          %p706 = scmp.lt.s32.totalorder %s33, 1
          %s707 = scalar_select %p706, %s33, 1
          %s708 = smul.addr %s707, 4
          %s709 = smul.addr %s708, 8
          %s710 = scalar_lea.vmem %s10, %s709
        $region60: #{transformer_model_decoder.1} parent=31 // pred_fallthru
          _
        // Predicated region
        $region61: #{transformer_model_decoder.1} parent=31 // pred_check
          %p711 = pneg %p319
        $region62: #{transformer_model_decoder.1} parent=31 // pred_check_branch
          %713 = sbr.rel (%p711) target = $region64
        $region63: #{transformer_model_decoder.1} parent=31 // pred_region
          %p714 = scmp.lt.s32.totalorder %s33, 1
          %s715 = scalar_select %p714, %s33, 1
          %s716 = scalar_lea.vmem %s11, %s715
        $region64: #{transformer_model_decoder.1} parent=31 // pred_fallthru
          _
        // Predicated region
        $region65: #{transformer_model_decoder.1} parent=31 // pred_check
          %p717 = pneg %p345
        $region66: #{transformer_model_decoder.1} parent=31 // pred_check_branch
          %719 = sbr.rel (%p717) target = $region68
        $region67: #{transformer_model_decoder.1} parent=31 // pred_region
          %p720 = scmp.lt.s32.totalorder %s33, 1
          %s721 = scalar_select %p720, %s33, 1
          %s722 = smul.addr %s721, 4
          %s723 = smul.addr %s722, 8
          %s724 = scalar_lea.vmem %s12, %s723
        $region68: #{transformer_model_decoder.1} parent=31 // pred_fallthru
          _
        // Predicated region
        $region69: #{transformer_model_decoder.1} parent=31 // pred_check
          %p725 = pneg %p371
        $region70: #{transformer_model_decoder.1} parent=31 // pred_check_branch
          %727 = sbr.rel (%p725) target = $region72
        $region71: #{transformer_model_decoder.1} parent=31 // pred_region
          %p728 = scmp.lt.s32.totalorder %s33, 1
          %s729 = scalar_select %p728, %s33, 1
          %s730 = scalar_lea.vmem %s13, %s729
        $region72: #{transformer_model_decoder.1} parent=31 // pred_fallthru
          _
        // Predicated region
        $region73: #{transformer_model_decoder.1} parent=31 // pred_check
          %p731 = pneg %p397
        $region74: #{transformer_model_decoder.1} parent=31 // pred_check_branch
          %733 = sbr.rel (%p731) target = $region76
        $region75: #{transformer_model_decoder.1} parent=31 // pred_region
          %p734 = scmp.lt.s32.totalorder %s33, 1
          %s735 = scalar_select %p734, %s33, 1
          %s736 = scalar_lea.vmem %s14, %s735
        $region76: #{transformer_model_decoder.1} parent=31 // pred_fallthru
          _
        // Predicated region
        $region77: #{transformer_model_decoder.1} parent=31 // pred_check
          %p737 = pneg %p423
        $region78: #{transformer_model_decoder.1} parent=31 // pred_check_branch
          %739 = sbr.rel (%p737) target = $region80
        $region79: #{transformer_model_decoder.1} parent=31 // pred_region
          %p740 = scmp.lt.s32.totalorder %s33, 1
          %s741 = scalar_select %p740, %s33, 1
          %s742 = scalar_lea.vmem %s15, %s741
        $region80: #{transformer_model_decoder.1} parent=31 // pred_fallthru
          _
        // Predicated region
        $region81: #{transformer_model_decoder.1} parent=31 // pred_check
          %p743 = pneg %p449
        $region82: #{transformer_model_decoder.1} parent=31 // pred_check_branch
          %745 = sbr.rel (%p743) target = $region84
        $region83: #{transformer_model_decoder.1} parent=31 // pred_region
          %p746 = scmp.lt.s32.totalorder %s33, 1
          %s747 = scalar_select %p746, %s33, 1
          %s748 = smul.addr %s747, 4
          %s749 = smul.addr %s748, 8
          %s750 = scalar_lea.vmem %s16, %s749
        $region84: #{transformer_model_decoder.1} parent=31 // pred_fallthru
          _
        // Predicated region
        $region85: #{transformer_model_decoder.1} parent=31 // pred_check
          %p751 = pneg %p475
        $region86: #{transformer_model_decoder.1} parent=31 // pred_check_branch
          %753 = sbr.rel (%p751) target = $region88
        $region87: #{transformer_model_decoder.1} parent=31 // pred_region
          %p754 = scmp.lt.s32.totalorder %s33, 1
          %s755 = scalar_select %p754, %s33, 1
          %s756 = scalar_lea.vmem %s17, %s755
        $region88: #{transformer_model_decoder.1} parent=31 // pred_fallthru
          _
        // Predicated region
        $region89: #{transformer_model_decoder.1} parent=31 // pred_check
          %p757 = pneg %p501
        $region90: #{transformer_model_decoder.1} parent=31 // pred_check_branch
          %759 = sbr.rel (%p757) target = $region92
        $region91: #{transformer_model_decoder.1} parent=31 // pred_region
          %p760 = scmp.lt.s32.totalorder %s33, 1
          %s761 = scalar_select %p760, %s33, 1
          %s762 = smul.addr %s761, 8
          %s763 = smul.addr %s762, 8
          %s764 = scalar_lea.vmem %s18, %s763
        $region92: #{transformer_model_decoder.1} parent=31 // pred_fallthru
          _
        // Predicated region
        $region93: #{transformer_model_decoder.1} parent=31 // pred_check
          %p765 = pneg %p527
        $region94: #{transformer_model_decoder.1} parent=31 // pred_check_branch
          %767 = sbr.rel (%p765) target = $region96
        $region95: #{transformer_model_decoder.1} parent=31 // pred_region
          %p768 = scmp.lt.s32.totalorder %s33, 1
          %s769 = scalar_select %p768, %s33, 1
          %s770 = scalar_lea.vmem %s19, %s769
        $region96: #{transformer_model_decoder.1} parent=31 // pred_fallthru
          _
        // Predicated region
        $region97: #{transformer_model_decoder.1} parent=31 // pred_check
          %p771 = pneg %p553
        $region98: #{transformer_model_decoder.1} parent=31 // pred_check_branch
          %773 = sbr.rel (%p771) target = $region100
        $region99: #{transformer_model_decoder.1} parent=31 // pred_region
          %p774 = scmp.lt.s32.totalorder %s33, 1
          %s775 = scalar_select %p774, %s33, 1
          %s776 = scalar_lea.vmem %s20, %s775
        $region100: #{transformer_model_decoder.1} parent=31 // pred_fallthru
          _
        // Predicated region
        $region101: #{transformer_model_decoder.1} parent=31 // pred_check
          %p777 = pneg %p579
        $region102: #{transformer_model_decoder.1} parent=31 // pred_check_branch
          %779 = sbr.rel (%p777) target = $region104
        $region103: #{transformer_model_decoder.1} parent=31 // pred_region
          %p780 = scmp.lt.s32.totalorder %s33, 1
          %s781 = scalar_select %p780, %s33, 1
          %s782 = scalar_lea.vmem %s21, %s781
        $region104: #{transformer_model_decoder.1} parent=31 // pred_fallthru
          _
      $region32: #{transformer_model_decoder.1} parent=5 // pred_fallthru
        _
      %p783 = scmp.le.s32.totalorder 1, %s33
      %p784 = scmp.lt.s32.totalorder %s33, 3
      %p785 = pnand %p783, %p784
      %p786 = pneg %p785
      // Predicated region
      $region105: #{transformer_model_decoder.1} parent=5 // pred_check
        _
      $region106: #{transformer_model_decoder.1} parent=5 // pred_check_branch
        %788 = sbr.rel (%p785) target = $region108
      $region107: #{transformer_model_decoder.1} parent=5 // pred_region
        %s789 = ssub.s32 %s33, 1
        %p790 = pneg %p54
        %p791 = pneg %p51
        %p792 = pneg %p75
        %p793 = pneg %p72
        %p794 = pneg %p96
        %p795 = pneg %p93
        %p796 = pneg %p117
        %p797 = pneg %p114
        %p798 = scmp.lt.s32.totalorder %s38, 1
        %s799 = scalar_select %p798, %s38, 1
        %s800 = smul.addr %s799, 4
        %s801 = smul.addr %s800, 8
        %s802 = scalar_lea.vmem %s4, %s801
        %p803 = pneg %p143
        %p804 = pneg %p140
        %p805 = scmp.lt.s32.totalorder %s38, 1
        %s806 = scalar_select %p805, %s38, 1
        %s807 = scalar_lea.vmem %s5, %s806
        %p808 = pneg %p169
        %p809 = pneg %p166
        %p810 = scmp.lt.s32.totalorder %s38, 1
        %s811 = scalar_select %p810, %s38, 1
        %s812 = smul.addr %s811, 4
        %s813 = smul.addr %s812, 8
        %s814 = scalar_lea.vmem %s6, %s813
        %p815 = pneg %p195
        %p816 = pneg %p192
        %p817 = scmp.lt.s32.totalorder %s38, 1
        %s818 = scalar_select %p817, %s38, 1
        %s819 = scalar_lea.vmem %s7, %s818
        %p820 = pneg %p221
        %p821 = pneg %p218
        %p822 = scmp.lt.s32.totalorder %s38, 1
        %s823 = scalar_select %p822, %s38, 1
        %s824 = scalar_lea.vmem %s8, %s823
        %p825 = pneg %p247
        %p826 = pneg %p244
        %p827 = scmp.lt.s32.totalorder %s38, 1
        %s828 = scalar_select %p827, %s38, 1
        %s829 = scalar_lea.vmem %s9, %s828
        %p830 = pneg %p273
        %p831 = pneg %p270
        %p832 = scmp.lt.s32.totalorder %s38, 1
        %s833 = scalar_select %p832, %s38, 1
        %s834 = smul.addr %s833, 4
        %s835 = smul.addr %s834, 8
        %s836 = scalar_lea.vmem %s10, %s835
        %p837 = pneg %p299
        %p838 = pneg %p296
        %p839 = scmp.lt.s32.totalorder %s38, 1
        %s840 = scalar_select %p839, %s38, 1
        %s841 = scalar_lea.vmem %s11, %s840
        %p842 = pneg %p325
        %p843 = pneg %p322
        %p844 = scmp.lt.s32.totalorder %s38, 1
        %s845 = scalar_select %p844, %s38, 1
        %s846 = smul.addr %s845, 4
        %s847 = smul.addr %s846, 8
        %s848 = scalar_lea.vmem %s12, %s847
        %p849 = pneg %p351
        %p850 = pneg %p348
        %p851 = scmp.lt.s32.totalorder %s38, 1
        %s852 = scalar_select %p851, %s38, 1
        %s853 = scalar_lea.vmem %s13, %s852
        %p854 = pneg %p377
        %p855 = pneg %p374
        %p856 = scmp.lt.s32.totalorder %s38, 1
        %s857 = scalar_select %p856, %s38, 1
        %s858 = scalar_lea.vmem %s14, %s857
        %p859 = pneg %p403
        %p860 = pneg %p400
        %p861 = scmp.lt.s32.totalorder %s38, 1
        %s862 = scalar_select %p861, %s38, 1
        %s863 = scalar_lea.vmem %s15, %s862
        %p864 = pneg %p429
        %p865 = pneg %p426
        %p866 = scmp.lt.s32.totalorder %s38, 1
        %s867 = scalar_select %p866, %s38, 1
        %s868 = smul.addr %s867, 4
        %s869 = smul.addr %s868, 8
        %s870 = scalar_lea.vmem %s16, %s869
        %p871 = pneg %p455
        %p872 = pneg %p452
        %p873 = scmp.lt.s32.totalorder %s38, 1
        %s874 = scalar_select %p873, %s38, 1
        %s875 = scalar_lea.vmem %s17, %s874
        %p876 = pneg %p481
        %p877 = pneg %p478
        %p878 = scmp.lt.s32.totalorder %s38, 1
        %s879 = scalar_select %p878, %s38, 1
        %s880 = smul.addr %s879, 8
        %s881 = smul.addr %s880, 8
        %s882 = scalar_lea.vmem %s18, %s881
        %p883 = pneg %p507
        %p884 = pneg %p504
        %p885 = scmp.lt.s32.totalorder %s38, 1
        %s886 = scalar_select %p885, %s38, 1
        %s887 = scalar_lea.vmem %s19, %s886
        %p888 = pneg %p533
        %p889 = pneg %p530
        %p890 = scmp.lt.s32.totalorder %s38, 1
        %s891 = scalar_select %p890, %s38, 1
        %s892 = scalar_lea.vmem %s20, %s891
        %p893 = pneg %p559
        %p894 = pneg %p556
        %p895 = scmp.lt.s32.totalorder %s38, 1
        %s896 = scalar_select %p895, %s38, 1
        %s897 = scalar_lea.vmem %s21, %s896
        %p898 = pneg %p585
        %p899 = pneg %p582
        %p900 = pneg %p606
        %p901 = pneg %p603
        %p902 = pneg %p632
        %p903 = pneg %p629
        %s904 = sand.u32 %s619, 1
        %s905 = scalar_lea.sflag [#allocation4], %s904
        %s906 = sand.u32 %s619, 1
        %s907 = smul.addr %s906, 16
        %s908 = scalar_lea.vmem [#allocation3], %s907
        %p909 = scmp.lt.s32.totalorder %s38, 1
        %s910 = scalar_select %p909, %s38, 1
        %s911 = smul.addr %s910, 4
        %s912 = smul.addr %s911, 8
        %s913 = scalar_lea.vmem %s4, %s912
        %p914 = scmp.lt.s32.totalorder %s38, 1
        %s915 = scalar_select %p914, %s38, 1
        %s916 = scalar_lea.vmem %s5, %s915
        %p917 = scmp.lt.s32.totalorder %s38, 1
        %s918 = scalar_select %p917, %s38, 1
        %s919 = smul.addr %s918, 4
        %s920 = smul.addr %s919, 8
        %s921 = scalar_lea.vmem %s6, %s920
        %p922 = scmp.lt.s32.totalorder %s38, 1
        %s923 = scalar_select %p922, %s38, 1
        %s924 = scalar_lea.vmem %s7, %s923
        %p925 = scmp.lt.s32.totalorder %s38, 1
        %s926 = scalar_select %p925, %s38, 1
        %s927 = scalar_lea.vmem %s8, %s926
        %p928 = scmp.lt.s32.totalorder %s38, 1
        %s929 = scalar_select %p928, %s38, 1
        %s930 = scalar_lea.vmem %s9, %s929
        %p931 = scmp.lt.s32.totalorder %s38, 1
        %s932 = scalar_select %p931, %s38, 1
        %s933 = smul.addr %s932, 4
        %s934 = smul.addr %s933, 8
        %s935 = scalar_lea.vmem %s10, %s934
        %p936 = scmp.lt.s32.totalorder %s38, 1
        %s937 = scalar_select %p936, %s38, 1
        %s938 = scalar_lea.vmem %s11, %s937
        %p939 = scmp.lt.s32.totalorder %s38, 1
        %s940 = scalar_select %p939, %s38, 1
        %s941 = smul.addr %s940, 4
        %s942 = smul.addr %s941, 8
        %s943 = scalar_lea.vmem %s12, %s942
        %p944 = scmp.lt.s32.totalorder %s38, 1
        %s945 = scalar_select %p944, %s38, 1
        %s946 = scalar_lea.vmem %s13, %s945
        %p947 = scmp.lt.s32.totalorder %s38, 1
        %s948 = scalar_select %p947, %s38, 1
        %s949 = scalar_lea.vmem %s14, %s948
        %p950 = scmp.lt.s32.totalorder %s38, 1
        %s951 = scalar_select %p950, %s38, 1
        %s952 = scalar_lea.vmem %s15, %s951
        %p953 = scmp.lt.s32.totalorder %s38, 1
        %s954 = scalar_select %p953, %s38, 1
        %s955 = smul.addr %s954, 4
        %s956 = smul.addr %s955, 8
        %s957 = scalar_lea.vmem %s16, %s956
        %p958 = scmp.lt.s32.totalorder %s38, 1
        %s959 = scalar_select %p958, %s38, 1
        %s960 = scalar_lea.vmem %s17, %s959
        %p961 = scmp.lt.s32.totalorder %s38, 1
        %s962 = scalar_select %p961, %s38, 1
        %s963 = smul.addr %s962, 8
        %s964 = smul.addr %s963, 8
        %s965 = scalar_lea.vmem %s18, %s964
        %p966 = scmp.lt.s32.totalorder %s38, 1
        %s967 = scalar_select %p966, %s38, 1
        %s968 = scalar_lea.vmem %s19, %s967
        %p969 = scmp.lt.s32.totalorder %s38, 1
        %s970 = scalar_select %p969, %s38, 1
        %s971 = scalar_lea.vmem %s20, %s970
        %p972 = scmp.lt.s32.totalorder %s38, 1
        %s973 = scalar_select %p972, %s38, 1
        %s974 = scalar_lea.vmem %s21, %s973
        %p975 = scmp.eq.s32.totalorder %s38, 0
        // Predicated region
        $region109: #{transformer_model_decoder.1} parent=107 // pred_check
          %p976 = pneg %p975
        $region110: #{transformer_model_decoder.1} parent=107 // pred_check_branch
          %978 = sbr.rel (%p976) target = $region112
        $region111: #{transformer_model_decoder.1} parent=107 // pred_region
          %v979 = vld [vmem:[%s0] sm:$0xff]
          %v980 = vld [vmem:[%s0 + $0x8] sm:$0xff]
          %vm981 = vcmask 261120
          %982 = vst.msk [vmem:[#allocation2] sm:$0xff] %vm981, %v979
          %983 = vst.msk [vmem:[#allocation2 + $0x8] sm:$0xff] %vm981, %v980
        $region112: #{transformer_model_decoder.1} parent=107 // pred_fallthru
          _
        %v984 = vld [vmem:[#allocation2] sm:$0xff]
        %v985 = vld [vmem:[#allocation2 + $0x8] sm:$0xff]
        %v986 = vld [vmem:[%s1] sm:$0xff]
        %v987 = vld [vmem:[%s1 + $0x8] sm:$0xff]
        %v988 = vld [vmem:[%s1 + $0x10] sm:$0xff]
        %v989 = vld [vmem:[%s2] sm:$0xff]
        %v990 = vld [vmem:[%s2 + $0x8] sm:$0xff]
        %v991 = vld [vmem:[%s3] sm:$0xff]
        %v992 = vld [vmem:[%s3 + $0x8] sm:$0xff]
        %v993 = vld [vmem:[%s913] sm:$0xff]
        %v994 = vld [vmem:[%s913 + $0x8] sm:$0xff]
        %v995 = vld [vmem:[%s913 + $0x10] sm:$0xff]
        %v996 = vld [vmem:[%s913 + $0x18] sm:$0xff]
        %v997 = vld [vmem:[%s916] sm:$0x1]
        %v999 = vlaneseq
        %v1000 = vshrl.u32 %v999, 7
        %v1001 = vsub.s32 0, %v1000
        %v1002 = vrot.slane %v997, %v1001
        %vm1004 = vcmask 261120
        %v1006 = vsel %vm1004, %v984, 0
        %v1009 = vsel %vm1004, %v985, 0
        %1011 = vmatprep.subr.mxu0 0.0
        %1012 = vmatpush1.msra.mxu0 %v993
        %1013 = vmatprep.subr.mxu0 0.0
        %1014 = vmatpush1.msra.mxu0 %v994
        %1015 = vmatprep.subr.mxu0 0.0
        %1016 = vmatpush1.msra.mxu0 %v995
        %1017 = vmatprep.subr.mxu0 0.0
        %1018 = vmatpush1.msra.mxu0 %v996
        %1019 = vmatprep.subr.mxu0 0.0
        %1020 = vmatpush1.msra.mxu0 0.0
        %1021 = vmatprep.subr.mxu0 0.0
        %1022 = vmatpush1.msra.mxu0 0.0
        %1023 = vmatprep.subr.mxu0 0.0
        %1024 = vmatpush1.msra.mxu0 0.0
        %1025 = vmatprep.subr.mxu0 0.0
        %1026 = vmatpush1.msra.mxu0 0.0
        %1027 = vmatprep.subr.mxu0 0.0
        %1028 = vmatpush1.msra.mxu0 0.0
        %1029 = vmatprep.subr.mxu0 0.0
        %1030 = vmatpush1.msra.mxu0 0.0
        %1031 = vmatprep.subr.mxu0 0.0
        %1032 = vmatpush1.msra.mxu0 0.0
        %1033 = vmatprep.subr.mxu0 0.0
        %1034 = vmatpush1.msra.mxu0 0.0
        %1035 = vmatprep.subr.mxu0 0.0
        %1036 = vmatpush1.msra.mxu0 0.0
        %1037 = vmatprep.subr.mxu0 0.0
        %1038 = vmatpush1.msra.mxu0 0.0
        %1039 = vmatprep.subr.mxu0 0.0
        %1040 = vmatpush1.msra.mxu0 0.0
        %1041 = vmatprep.subr.mxu0 0.0
        %1042 = vmatpush1.msra.mxu0 0.0
        %1043 = vmatprep.subr.mxu0 0.0
        %1044 = vmatpush1.msra.mxu0 0.0
        %1045 = vmatprep.subr.mxu0 0.0
        %1046 = vmatpush1.msra.mxu0 0.0
        %1047 = vmatprep.subr.mxu0 0.0
        %1048 = vmatpush1.msra.mxu0 0.0
        %1049 = vmatprep.subr.mxu0 0.0
        %1050 = vmatpush1.msra.mxu0 0.0
        %1051 = vmatprep.subr.mxu0 0.0
        %1052 = vmatpush1.msra.mxu0 0.0
        %1053 = vmatprep.subr.mxu0 0.0
        %1054 = vmatpush1.msra.mxu0 0.0
        %1055 = vmatprep.subr.mxu0 0.0
        %1056 = vmatpush1.msra.mxu0 0.0
        %1057 = vmatprep.subr.mxu0 0.0
        %1058 = vmatpush1.msra.mxu0 0.0
        %1059 = vmatprep.subr.mxu0 0.0
        %1060 = vmatpush1.msra.mxu0 0.0
        %1061 = vmatprep.subr.mxu0 0.0
        %1062 = vmatpush1.msra.mxu0 0.0
        %1063 = vmatprep.subr.mxu0 0.0
        %1064 = vmatpush1.msra.mxu0 0.0
        %1065 = vmatprep.subr.mxu0 0.0
        %1066 = vmatpush1.msra.mxu0 0.0
        %1067 = vmatprep.subr.mxu0 0.0
        %1068 = vmatpush1.msra.mxu0 0.0
        %1069 = vmatprep.subr.mxu0 0.0
        %1070 = vmatpush1.msra.mxu0 0.0
        %1071 = vmatprep.subr.mxu0 0.0
        %1072 = vmatpush1.msra.mxu0 0.0
        %1073 = vmatprep.subr.mxu0 0.0
        %1074 = vmatpush1.msra.mxu0 0.0
        %1075 = vmatprep.mubr.f32.mxu0 0.0
        %1076 = vmatmul.mubr.f32.gmra.mrb[0].mxu0 %v1006
        %v1077 = vpop.f32.mrb[0].mxu0
        %v1078 = vadd.f32 %v1002, %v1077
        %v1079 = vpop.f32.mrb[0].mxu0
        %1080 = vmatprep.mubr.f32.mxu0 0.0
        %1081 = vmatmul.mubr.f32.gmra.mrb[0].mxu0 %v1009
        %v1082 = vpop.f32.mrb[0].mxu0
        %v1083 = vadd.f32 %v1002, %v1082
        %v1084 = vpop.f32.mrb[0].mxu0
        %1085 = vdwg.mxu0
        %1088 = vrot.lane.b32.xlu0 %v1078, 96
        %v1089 = vpop.permute.xlu0 %1088
        %1090 = vrot.lane.b32.xlu0 %v1083, 96
        %v1091 = vpop.permute.xlu0 %1090
        %vm1092 = vcmask 64512
        %v1093 = vsel %vm1092, %v1078, 0
        %v1095 = vsel %vm1092, %v1083, 0
        %v1097 = vsel %vm1092, %v1089, 0
        %v1099 = vsel %vm1092, %v1091, 0
        %1101 = vmatprep.subr.mxu0 0.0
        %1102 = vmatpush1.xpose.msra.mxu0 %v1097
        %1103 = vmatprep.subr.mxu0 0.0
        %1104 = vmatpush1.xpose.msra.mxu0 %v1099
        %1105 = vmatprep.subr.mxu0 0.0
        %1106 = vmatpush1.xpose.msra.mxu0 0.0
        %1107 = vmatprep.subr.mxu0 0.0
        %1108 = vmatpush1.xpose.msra.mxu0 0.0
        %1109 = vmatprep.subr.mxu0 0.0
        %1110 = vmatpush1.xpose.msra.mxu0 0.0
        %1111 = vmatprep.subr.mxu0 0.0
        %1112 = vmatpush1.xpose.msra.mxu0 0.0
        %1113 = vmatprep.subr.mxu0 0.0
        %1114 = vmatpush1.xpose.msra.mxu0 0.0
        %1115 = vmatprep.subr.mxu0 0.0
        %1116 = vmatpush1.xpose.msra.mxu0 0.0
        %1117 = vmatprep.subr.mxu0 0.0
        %1118 = vmatpush1.xpose.msra.mxu0 0.0
        %1119 = vmatprep.subr.mxu0 0.0
        %1120 = vmatpush1.xpose.msra.mxu0 0.0
        %1121 = vmatprep.subr.mxu0 0.0
        %1122 = vmatpush1.xpose.msra.mxu0 0.0
        %1123 = vmatprep.subr.mxu0 0.0
        %1124 = vmatpush1.xpose.msra.mxu0 0.0
        %1125 = vmatprep.subr.mxu0 0.0
        %1126 = vmatpush1.xpose.msra.mxu0 0.0
        %1127 = vmatprep.subr.mxu0 0.0
        %1128 = vmatpush1.xpose.msra.mxu0 0.0
        %1129 = vmatprep.subr.mxu0 0.0
        %1130 = vmatpush1.xpose.msra.mxu0 0.0
        %1131 = vmatprep.subr.mxu0 0.0
        %1132 = vmatpush1.xpose.msra.mxu0 0.0
        %1133 = vmatprep.subr.mxu0 0.0
        %1134 = vmatpush1.xpose.msra.mxu0 0.0
        %1135 = vmatprep.subr.mxu0 0.0
        %1136 = vmatpush1.xpose.msra.mxu0 0.0
        %1137 = vmatprep.subr.mxu0 0.0
        %1138 = vmatpush1.xpose.msra.mxu0 0.0
        %1139 = vmatprep.subr.mxu0 0.0
        %1140 = vmatpush1.xpose.msra.mxu0 0.0
        %1141 = vmatprep.subr.mxu0 0.0
        %1142 = vmatpush1.xpose.msra.mxu0 0.0
        %1143 = vmatprep.subr.mxu0 0.0
        %1144 = vmatpush1.xpose.msra.mxu0 0.0
        %1145 = vmatprep.subr.mxu0 0.0
        %1146 = vmatpush1.xpose.msra.mxu0 0.0
        %1147 = vmatprep.subr.mxu0 0.0
        %1148 = vmatpush1.xpose.msra.mxu0 0.0
        %1149 = vmatprep.subr.mxu0 0.0
        %1150 = vmatpush1.xpose.msra.mxu0 0.0
        %1151 = vmatprep.subr.mxu0 0.0
        %1152 = vmatpush1.xpose.msra.mxu0 0.0
        %1153 = vmatprep.subr.mxu0 0.0
        %1154 = vmatpush1.xpose.msra.mxu0 0.0
        %1155 = vmatprep.subr.mxu0 0.0
        %1156 = vmatpush1.xpose.msra.mxu0 0.0
        %1157 = vmatprep.subr.mxu0 0.0
        %1158 = vmatpush1.xpose.msra.mxu0 0.0
        %1159 = vmatprep.subr.mxu0 0.0
        %1160 = vmatpush1.xpose.msra.mxu0 0.0
        %1161 = vmatprep.subr.mxu0 0.0
        %1162 = vmatpush1.xpose.msra.mxu0 0.0
        %1163 = vmatprep.subr.mxu0 0.0
        %1164 = vmatpush1.xpose.msra.mxu0 0.0
        %1165 = vmatprep.mubr.f32.mxu0 0.0
        %1166 = vmatmul.mubr.f32.gmra.mrb[0].mxu0 %v1093
        %v1167 = vpop.f32.mrb[0].mxu0
        %v1168 = vadd.f32 0.0, %v1167
        %v1169 = vpop.f32.mrb[0].mxu0
        %1170 = vmatprep.mubr.f32.mxu0 0.0
        %1171 = vmatmul.mubr.f32.gmra.mrb[0].mxu0 %v1095
        %v1172 = vpop.f32.mrb[0].mxu0
        %v1173 = vadd.f32 0.0, %v1172
        %v1174 = vpop.f32.mrb[0].mxu0
        %1175 = vdwg.mxu0
        %v1176 = vmul.f32 %v1168, 0.35355338
        %v1177 = vmul.f32 %v1173, 0.35355338
        %v1178 = vadd.f32 %v1176, %v989
        %v1179 = vadd.f32 %v1177, %v990
        %vm1180 = vcmask 130048
        %v1181 = vsel %vm1180, %v1178, -inf
        %1182 = vmax.xlane.f32.xlu0 %v1181
        %v1183 = vpop.xlane.xlu0 %1182
        %v1184 = vsel %vm1180, %v1179, -inf
        %1185 = vmax.xlane.f32.xlu0 %v1184
        %v1186 = vpop.xlane.xlu0 %1185
        %v1187 = vsub.f32 %v1178, %v1183
        %v1188 = vsub.f32 %v1179, %v1186
        %v1189 = vmul.f32 %v1187, 1.442695
        %v1190 = vpow.pop %v1189
        %v1191 = vmul.f32 %v1188, 1.442695
        %v1192 = vpow.pop %v1191
        %v1193 = vsel %vm1180, %v1190, 0.0
        %1194 = vadd.xlane.f32.xlu0 %v1193
        %v1195 = vpop.xlane.xlu0 %1194
        %v1196 = vsel %vm1180, %v1192, 0.0
        %1197 = vadd.xlane.f32.xlu0 %v1196
        %v1198 = vpop.xlane.xlu0 %1197
        %v1199 = vrcp.pop %v1195
        %v1200 = vmul.f32 %v1190, %v1199
        %v1201 = vrcp.pop %v1198
        %v1202 = vmul.f32 %v1192, %v1201
        %1203 = vrot.lane.b32.xlu0 %v1078, 64
        %v1204 = vpop.permute.xlu0 %1203
        %1205 = vrot.lane.b32.xlu0 %v1083, 64
        %v1206 = vpop.permute.xlu0 %1205
        %v1210 = vsel %vm1180, %v1200, 0
        %v1213 = vsel %vm1180, %v1202, 0
        %1215 = vmatprep.subr.mxu0 0.0
        %1216 = vmatpush1.msra.mxu0 %v1204
        %1217 = vmatprep.subr.mxu0 0.0
        %1218 = vmatpush1.msra.mxu0 %v1206
        %1219 = vmatprep.subr.mxu0 0.0
        %1220 = vmatpush1.msra.mxu0 0.0
        %1221 = vmatprep.subr.mxu0 0.0
        %1222 = vmatpush1.msra.mxu0 0.0
        %1223 = vmatprep.subr.mxu0 0.0
        %1224 = vmatpush1.msra.mxu0 0.0
        %1225 = vmatprep.subr.mxu0 0.0
        %1226 = vmatpush1.msra.mxu0 0.0
        %1227 = vmatprep.subr.mxu0 0.0
        %1228 = vmatpush1.msra.mxu0 0.0
        %1229 = vmatprep.subr.mxu0 0.0
        %1230 = vmatpush1.msra.mxu0 0.0
        %1231 = vmatprep.subr.mxu0 0.0
        %1232 = vmatpush1.msra.mxu0 0.0
        %1233 = vmatprep.subr.mxu0 0.0
        %1234 = vmatpush1.msra.mxu0 0.0
        %1235 = vmatprep.subr.mxu0 0.0
        %1236 = vmatpush1.msra.mxu0 0.0
        %1237 = vmatprep.subr.mxu0 0.0
        %1238 = vmatpush1.msra.mxu0 0.0
        %1239 = vmatprep.subr.mxu0 0.0
        %1240 = vmatpush1.msra.mxu0 0.0
        %1241 = vmatprep.subr.mxu0 0.0
        %1242 = vmatpush1.msra.mxu0 0.0
        %1243 = vmatprep.subr.mxu0 0.0
        %1244 = vmatpush1.msra.mxu0 0.0
        %1245 = vmatprep.subr.mxu0 0.0
        %1246 = vmatpush1.msra.mxu0 0.0
        %1247 = vmatprep.subr.mxu0 0.0
        %1248 = vmatpush1.msra.mxu0 0.0
        %1249 = vmatprep.subr.mxu0 0.0
        %1250 = vmatpush1.msra.mxu0 0.0
        %1251 = vmatprep.subr.mxu0 0.0
        %1252 = vmatpush1.msra.mxu0 0.0
        %1253 = vmatprep.subr.mxu0 0.0
        %1254 = vmatpush1.msra.mxu0 0.0
        %1255 = vmatprep.subr.mxu0 0.0
        %1256 = vmatpush1.msra.mxu0 0.0
        %1257 = vmatprep.subr.mxu0 0.0
        %1258 = vmatpush1.msra.mxu0 0.0
        %1259 = vmatprep.subr.mxu0 0.0
        %1260 = vmatpush1.msra.mxu0 0.0
        %1261 = vmatprep.subr.mxu0 0.0
        %1262 = vmatpush1.msra.mxu0 0.0
        %1263 = vmatprep.subr.mxu0 0.0
        %1264 = vmatpush1.msra.mxu0 0.0
        %1265 = vmatprep.subr.mxu0 0.0
        %1266 = vmatpush1.msra.mxu0 0.0
        %1267 = vmatprep.subr.mxu0 0.0
        %1268 = vmatpush1.msra.mxu0 0.0
        %1269 = vmatprep.subr.mxu0 0.0
        %1270 = vmatpush1.msra.mxu0 0.0
        %1271 = vmatprep.subr.mxu0 0.0
        %1272 = vmatpush1.msra.mxu0 0.0
        %1273 = vmatprep.subr.mxu0 0.0
        %1274 = vmatpush1.msra.mxu0 0.0
        %1275 = vmatprep.subr.mxu0 0.0
        %1276 = vmatpush1.msra.mxu0 0.0
        %1277 = vmatprep.subr.mxu0 0.0
        %1278 = vmatpush1.msra.mxu0 0.0
        %1279 = vmatprep.mubr.f32.mxu0 0.0
        %1280 = vmatmul.mubr.f32.gmra.mrb[0].mxu0 %v1210
        %v1281 = vpop.f32.mrb[0].mxu0
        %v1282 = vadd.f32 0.0, %v1281
        %v1283 = vpop.f32.mrb[0].mxu0
        %1284 = vmatprep.mubr.f32.mxu0 0.0
        %1285 = vmatmul.mubr.f32.gmra.mrb[0].mxu0 %v1213
        %v1286 = vpop.f32.mrb[0].mxu0
        %v1287 = vadd.f32 0.0, %v1286
        %v1288 = vpop.f32.mrb[0].mxu0
        %1289 = vdwg.mxu0
        %1290 = vrot.lane.b32.xlu0 %v1078, 120
        %v1291 = vpop.permute.xlu0 %1290
        %1292 = vrot.lane.b32.xlu0 %v1083, 120
        %v1293 = vpop.permute.xlu0 %1292
        %1294 = vrot.lane.b32.xlu0 %v1078, 88
        %v1295 = vpop.permute.xlu0 %1294
        %1296 = vrot.lane.b32.xlu0 %v1083, 88
        %v1297 = vpop.permute.xlu0 %1296
        %v1298 = vsel %vm1092, %v1291, 0
        %v1300 = vsel %vm1092, %v1293, 0
        %v1302 = vsel %vm1092, %v1295, 0
        %v1304 = vsel %vm1092, %v1297, 0
        %1306 = vmatprep.subr.mxu0 0.0
        %1307 = vmatpush1.xpose.msra.mxu0 %v1302
        %1308 = vmatprep.subr.mxu0 0.0
        %1309 = vmatpush1.xpose.msra.mxu0 %v1304
        %1310 = vmatprep.subr.mxu0 0.0
        %1311 = vmatpush1.xpose.msra.mxu0 0.0
        %1312 = vmatprep.subr.mxu0 0.0
        %1313 = vmatpush1.xpose.msra.mxu0 0.0
        %1314 = vmatprep.subr.mxu0 0.0
        %1315 = vmatpush1.xpose.msra.mxu0 0.0
        %1316 = vmatprep.subr.mxu0 0.0
        %1317 = vmatpush1.xpose.msra.mxu0 0.0
        %1318 = vmatprep.subr.mxu0 0.0
        %1319 = vmatpush1.xpose.msra.mxu0 0.0
        %1320 = vmatprep.subr.mxu0 0.0
        %1321 = vmatpush1.xpose.msra.mxu0 0.0
        %1322 = vmatprep.subr.mxu0 0.0
        %1323 = vmatpush1.xpose.msra.mxu0 0.0
        %1324 = vmatprep.subr.mxu0 0.0
        %1325 = vmatpush1.xpose.msra.mxu0 0.0
        %1326 = vmatprep.subr.mxu0 0.0
        %1327 = vmatpush1.xpose.msra.mxu0 0.0
        %1328 = vmatprep.subr.mxu0 0.0
        %1329 = vmatpush1.xpose.msra.mxu0 0.0
        %1330 = vmatprep.subr.mxu0 0.0
        %1331 = vmatpush1.xpose.msra.mxu0 0.0
        %1332 = vmatprep.subr.mxu0 0.0
        %1333 = vmatpush1.xpose.msra.mxu0 0.0
        %1334 = vmatprep.subr.mxu0 0.0
        %1335 = vmatpush1.xpose.msra.mxu0 0.0
        %1336 = vmatprep.subr.mxu0 0.0
        %1337 = vmatpush1.xpose.msra.mxu0 0.0
        %1338 = vmatprep.subr.mxu0 0.0
        %1339 = vmatpush1.xpose.msra.mxu0 0.0
        %1340 = vmatprep.subr.mxu0 0.0
        %1341 = vmatpush1.xpose.msra.mxu0 0.0
        %1342 = vmatprep.subr.mxu0 0.0
        %1343 = vmatpush1.xpose.msra.mxu0 0.0
        %1344 = vmatprep.subr.mxu0 0.0
        %1345 = vmatpush1.xpose.msra.mxu0 0.0
        %1346 = vmatprep.subr.mxu0 0.0
        %1347 = vmatpush1.xpose.msra.mxu0 0.0
        %1348 = vmatprep.subr.mxu0 0.0
        %1349 = vmatpush1.xpose.msra.mxu0 0.0
        %1350 = vmatprep.subr.mxu0 0.0
        %1351 = vmatpush1.xpose.msra.mxu0 0.0
        %1352 = vmatprep.subr.mxu0 0.0
        %1353 = vmatpush1.xpose.msra.mxu0 0.0
        %1354 = vmatprep.subr.mxu0 0.0
        %1355 = vmatpush1.xpose.msra.mxu0 0.0
        %1356 = vmatprep.subr.mxu0 0.0
        %1357 = vmatpush1.xpose.msra.mxu0 0.0
        %1358 = vmatprep.subr.mxu0 0.0
        %1359 = vmatpush1.xpose.msra.mxu0 0.0
        %1360 = vmatprep.subr.mxu0 0.0
        %1361 = vmatpush1.xpose.msra.mxu0 0.0
        %1362 = vmatprep.subr.mxu0 0.0
        %1363 = vmatpush1.xpose.msra.mxu0 0.0
        %1364 = vmatprep.subr.mxu0 0.0
        %1365 = vmatpush1.xpose.msra.mxu0 0.0
        %1366 = vmatprep.subr.mxu0 0.0
        %1367 = vmatpush1.xpose.msra.mxu0 0.0
        %1368 = vmatprep.subr.mxu0 0.0
        %1369 = vmatpush1.xpose.msra.mxu0 0.0
        %1370 = vmatprep.mubr.f32.mxu0 0.0
        %1371 = vmatmul.mubr.f32.gmra.mrb[0].mxu0 %v1298
        %v1372 = vpop.f32.mrb[0].mxu0
        %v1373 = vadd.f32 0.0, %v1372
        %v1374 = vpop.f32.mrb[0].mxu0
        %1375 = vmatprep.mubr.f32.mxu0 0.0
        %1376 = vmatmul.mubr.f32.gmra.mrb[0].mxu0 %v1300
        %v1377 = vpop.f32.mrb[0].mxu0
        %v1378 = vadd.f32 0.0, %v1377
        %v1379 = vpop.f32.mrb[0].mxu0
        %1380 = vdwg.mxu0
        %v1381 = vmul.f32 %v1373, 0.35355338
        %v1382 = vmul.f32 %v1378, 0.35355338
        %v1383 = vadd.f32 %v1381, %v989
        %v1384 = vadd.f32 %v1382, %v990
        %v1385 = vsel %vm1180, %v1383, -inf
        %1386 = vmax.xlane.f32.xlu0 %v1385
        %v1387 = vpop.xlane.xlu0 %1386
        %v1388 = vsel %vm1180, %v1384, -inf
        %1389 = vmax.xlane.f32.xlu0 %v1388
        %v1390 = vpop.xlane.xlu0 %1389
        %v1391 = vsub.f32 %v1383, %v1387
        %v1392 = vsub.f32 %v1384, %v1390
        %v1393 = vmul.f32 %v1391, 1.442695
        %v1394 = vpow.pop %v1393
        %v1395 = vmul.f32 %v1392, 1.442695
        %v1396 = vpow.pop %v1395
        %v1397 = vsel %vm1180, %v1394, 0.0
        %1398 = vadd.xlane.f32.xlu0 %v1397
        %v1399 = vpop.xlane.xlu0 %1398
        %v1400 = vsel %vm1180, %v1396, 0.0
        %1401 = vadd.xlane.f32.xlu0 %v1400
        %v1402 = vpop.xlane.xlu0 %1401
        %v1403 = vrcp.pop %v1399
        %v1404 = vmul.f32 %v1394, %v1403
        %v1405 = vrcp.pop %v1402
        %v1406 = vmul.f32 %v1396, %v1405
        %1407 = vrot.lane.b32.xlu0 %v1078, 56
        %v1408 = vpop.permute.xlu0 %1407
        %1409 = vrot.lane.b32.xlu0 %v1083, 56
        %v1410 = vpop.permute.xlu0 %1409
        %v1414 = vsel %vm1180, %v1404, 0
        %v1417 = vsel %vm1180, %v1406, 0
        %1419 = vmatprep.subr.mxu0 0.0
        %1420 = vmatpush1.msra.mxu0 %v1408
        %1421 = vmatprep.subr.mxu0 0.0
        %1422 = vmatpush1.msra.mxu0 %v1410
        %1423 = vmatprep.subr.mxu0 0.0
        %1424 = vmatpush1.msra.mxu0 0.0
        %1425 = vmatprep.subr.mxu0 0.0
        %1426 = vmatpush1.msra.mxu0 0.0
        %1427 = vmatprep.subr.mxu0 0.0
        %1428 = vmatpush1.msra.mxu0 0.0
        %1429 = vmatprep.subr.mxu0 0.0
        %1430 = vmatpush1.msra.mxu0 0.0
        %1431 = vmatprep.subr.mxu0 0.0
        %1432 = vmatpush1.msra.mxu0 0.0
        %1433 = vmatprep.subr.mxu0 0.0
        %1434 = vmatpush1.msra.mxu0 0.0
        %1435 = vmatprep.subr.mxu0 0.0
        %1436 = vmatpush1.msra.mxu0 0.0
        %1437 = vmatprep.subr.mxu0 0.0
        %1438 = vmatpush1.msra.mxu0 0.0
        %1439 = vmatprep.subr.mxu0 0.0
        %1440 = vmatpush1.msra.mxu0 0.0
        %1441 = vmatprep.subr.mxu0 0.0
        %1442 = vmatpush1.msra.mxu0 0.0
        %1443 = vmatprep.subr.mxu0 0.0
        %1444 = vmatpush1.msra.mxu0 0.0
        %1445 = vmatprep.subr.mxu0 0.0
        %1446 = vmatpush1.msra.mxu0 0.0
        %1447 = vmatprep.subr.mxu0 0.0
        %1448 = vmatpush1.msra.mxu0 0.0
        %1449 = vmatprep.subr.mxu0 0.0
        %1450 = vmatpush1.msra.mxu0 0.0
        %1451 = vmatprep.subr.mxu0 0.0
        %1452 = vmatpush1.msra.mxu0 0.0
        %1453 = vmatprep.subr.mxu0 0.0
        %1454 = vmatpush1.msra.mxu0 0.0
        %1455 = vmatprep.subr.mxu0 0.0
        %1456 = vmatpush1.msra.mxu0 0.0
        %1457 = vmatprep.subr.mxu0 0.0
        %1458 = vmatpush1.msra.mxu0 0.0
        %1459 = vmatprep.subr.mxu0 0.0
        %1460 = vmatpush1.msra.mxu0 0.0
        %1461 = vmatprep.subr.mxu0 0.0
        %1462 = vmatpush1.msra.mxu0 0.0
        %1463 = vmatprep.subr.mxu0 0.0
        %1464 = vmatpush1.msra.mxu0 0.0
        %1465 = vmatprep.subr.mxu0 0.0
        %1466 = vmatpush1.msra.mxu0 0.0
        %1467 = vmatprep.subr.mxu0 0.0
        %1468 = vmatpush1.msra.mxu0 0.0
        %1469 = vmatprep.subr.mxu0 0.0
        %1470 = vmatpush1.msra.mxu0 0.0
        %1471 = vmatprep.subr.mxu0 0.0
        %1472 = vmatpush1.msra.mxu0 0.0
        %1473 = vmatprep.subr.mxu0 0.0
        %1474 = vmatpush1.msra.mxu0 0.0
        %1475 = vmatprep.subr.mxu0 0.0
        %1476 = vmatpush1.msra.mxu0 0.0
        %1477 = vmatprep.subr.mxu0 0.0
        %1478 = vmatpush1.msra.mxu0 0.0
        %1479 = vmatprep.subr.mxu0 0.0
        %1480 = vmatpush1.msra.mxu0 0.0
        %1481 = vmatprep.subr.mxu0 0.0
        %1482 = vmatpush1.msra.mxu0 0.0
        %1483 = vmatprep.mubr.f32.mxu0 0.0
        %1484 = vmatmul.mubr.f32.gmra.mrb[0].mxu0 %v1414
        %v1485 = vpop.f32.mrb[0].mxu0
        %v1486 = vadd.f32 0.0, %v1485
        %v1487 = vpop.f32.mrb[0].mxu0
        %1488 = vmatprep.mubr.f32.mxu0 0.0
        %1489 = vmatmul.mubr.f32.gmra.mrb[0].mxu0 %v1417
        %v1490 = vpop.f32.mrb[0].mxu0
        %v1491 = vadd.f32 0.0, %v1490
        %v1492 = vpop.f32.mrb[0].mxu0
        %1493 = vdwg.mxu0
        %1494 = vrot.lane.b32.xlu0 %v1078, 112
        %v1495 = vpop.permute.xlu0 %1494
        %1496 = vrot.lane.b32.xlu0 %v1083, 112
        %v1497 = vpop.permute.xlu0 %1496
        %1498 = vrot.lane.b32.xlu0 %v1078, 80
        %v1499 = vpop.permute.xlu0 %1498
        %1500 = vrot.lane.b32.xlu0 %v1083, 80
        %v1501 = vpop.permute.xlu0 %1500
        %v1502 = vsel %vm1092, %v1495, 0
        %v1504 = vsel %vm1092, %v1497, 0
        %v1506 = vsel %vm1092, %v1499, 0
        %v1508 = vsel %vm1092, %v1501, 0
        %1510 = vmatprep.subr.mxu0 0.0
        %1511 = vmatpush1.xpose.msra.mxu0 %v1506
        %1512 = vmatprep.subr.mxu0 0.0
        %1513 = vmatpush1.xpose.msra.mxu0 %v1508
        %1514 = vmatprep.subr.mxu0 0.0
        %1515 = vmatpush1.xpose.msra.mxu0 0.0
        %1516 = vmatprep.subr.mxu0 0.0
        %1517 = vmatpush1.xpose.msra.mxu0 0.0
        %1518 = vmatprep.subr.mxu0 0.0
        %1519 = vmatpush1.xpose.msra.mxu0 0.0
        %1520 = vmatprep.subr.mxu0 0.0
        %1521 = vmatpush1.xpose.msra.mxu0 0.0
        %1522 = vmatprep.subr.mxu0 0.0
        %1523 = vmatpush1.xpose.msra.mxu0 0.0
        %1524 = vmatprep.subr.mxu0 0.0
        %1525 = vmatpush1.xpose.msra.mxu0 0.0
        %1526 = vmatprep.subr.mxu0 0.0
        %1527 = vmatpush1.xpose.msra.mxu0 0.0
        %1528 = vmatprep.subr.mxu0 0.0
        %1529 = vmatpush1.xpose.msra.mxu0 0.0
        %1530 = vmatprep.subr.mxu0 0.0
        %1531 = vmatpush1.xpose.msra.mxu0 0.0
        %1532 = vmatprep.subr.mxu0 0.0
        %1533 = vmatpush1.xpose.msra.mxu0 0.0
        %1534 = vmatprep.subr.mxu0 0.0
        %1535 = vmatpush1.xpose.msra.mxu0 0.0
        %1536 = vmatprep.subr.mxu0 0.0
        %1537 = vmatpush1.xpose.msra.mxu0 0.0
        %1538 = vmatprep.subr.mxu0 0.0
        %1539 = vmatpush1.xpose.msra.mxu0 0.0
        %1540 = vmatprep.subr.mxu0 0.0
        %1541 = vmatpush1.xpose.msra.mxu0 0.0
        %1542 = vmatprep.subr.mxu0 0.0
        %1543 = vmatpush1.xpose.msra.mxu0 0.0
        %1544 = vmatprep.subr.mxu0 0.0
        %1545 = vmatpush1.xpose.msra.mxu0 0.0
        %1546 = vmatprep.subr.mxu0 0.0
        %1547 = vmatpush1.xpose.msra.mxu0 0.0
        %1548 = vmatprep.subr.mxu0 0.0
        %1549 = vmatpush1.xpose.msra.mxu0 0.0
        %1550 = vmatprep.subr.mxu0 0.0
        %1551 = vmatpush1.xpose.msra.mxu0 0.0
        %1552 = vmatprep.subr.mxu0 0.0
        %1553 = vmatpush1.xpose.msra.mxu0 0.0
        %1554 = vmatprep.subr.mxu0 0.0
        %1555 = vmatpush1.xpose.msra.mxu0 0.0
        %1556 = vmatprep.subr.mxu0 0.0
        %1557 = vmatpush1.xpose.msra.mxu0 0.0
        %1558 = vmatprep.subr.mxu0 0.0
        %1559 = vmatpush1.xpose.msra.mxu0 0.0
        %1560 = vmatprep.subr.mxu0 0.0
        %1561 = vmatpush1.xpose.msra.mxu0 0.0
        %1562 = vmatprep.subr.mxu0 0.0
        %1563 = vmatpush1.xpose.msra.mxu0 0.0
        %1564 = vmatprep.subr.mxu0 0.0
        %1565 = vmatpush1.xpose.msra.mxu0 0.0
        %1566 = vmatprep.subr.mxu0 0.0
        %1567 = vmatpush1.xpose.msra.mxu0 0.0
        %1568 = vmatprep.subr.mxu0 0.0
        %1569 = vmatpush1.xpose.msra.mxu0 0.0
        %1570 = vmatprep.subr.mxu0 0.0
        %1571 = vmatpush1.xpose.msra.mxu0 0.0
        %1572 = vmatprep.subr.mxu0 0.0
        %1573 = vmatpush1.xpose.msra.mxu0 0.0
        %1574 = vmatprep.mubr.f32.mxu0 0.0
        %1575 = vmatmul.mubr.f32.gmra.mrb[0].mxu0 %v1502
        %v1576 = vpop.f32.mrb[0].mxu0
        %v1577 = vadd.f32 0.0, %v1576
        %v1578 = vpop.f32.mrb[0].mxu0
        %1579 = vmatprep.mubr.f32.mxu0 0.0
        %1580 = vmatmul.mubr.f32.gmra.mrb[0].mxu0 %v1504
        %v1581 = vpop.f32.mrb[0].mxu0
        %v1582 = vadd.f32 0.0, %v1581
        %v1583 = vpop.f32.mrb[0].mxu0
        %1584 = vdwg.mxu0
        %v1585 = vmul.f32 %v1577, 0.35355338
        %v1586 = vmul.f32 %v1582, 0.35355338
        %v1587 = vadd.f32 %v1585, %v989
        %v1588 = vadd.f32 %v1586, %v990
        %v1589 = vsel %vm1180, %v1587, -inf
        %1590 = vmax.xlane.f32.xlu0 %v1589
        %v1591 = vpop.xlane.xlu0 %1590
        %v1592 = vsel %vm1180, %v1588, -inf
        %1593 = vmax.xlane.f32.xlu0 %v1592
        %v1594 = vpop.xlane.xlu0 %1593
        %v1595 = vsub.f32 %v1587, %v1591
        %v1596 = vsub.f32 %v1588, %v1594
        %v1597 = vmul.f32 %v1595, 1.442695
        %v1598 = vpow.pop %v1597
        %v1599 = vmul.f32 %v1596, 1.442695
        %v1600 = vpow.pop %v1599
        %v1601 = vsel %vm1180, %v1598, 0.0
        %1602 = vadd.xlane.f32.xlu0 %v1601
        %v1603 = vpop.xlane.xlu0 %1602
        %v1604 = vsel %vm1180, %v1600, 0.0
        %1605 = vadd.xlane.f32.xlu0 %v1604
        %v1606 = vpop.xlane.xlu0 %1605
        %v1607 = vrcp.pop %v1603
        %v1608 = vmul.f32 %v1598, %v1607
        %v1609 = vrcp.pop %v1606
        %v1610 = vmul.f32 %v1600, %v1609
        %1611 = vrot.lane.b32.xlu0 %v1078, 48
        %v1612 = vpop.permute.xlu0 %1611
        %1613 = vrot.lane.b32.xlu0 %v1083, 48
        %v1614 = vpop.permute.xlu0 %1613
        %v1618 = vsel %vm1180, %v1608, 0
        %v1621 = vsel %vm1180, %v1610, 0
        %1623 = vmatprep.subr.mxu0 0.0
        %1624 = vmatpush1.msra.mxu0 %v1612
        %1625 = vmatprep.subr.mxu0 0.0
        %1626 = vmatpush1.msra.mxu0 %v1614
        %1627 = vmatprep.subr.mxu0 0.0
        %1628 = vmatpush1.msra.mxu0 0.0
        %1629 = vmatprep.subr.mxu0 0.0
        %1630 = vmatpush1.msra.mxu0 0.0
        %1631 = vmatprep.subr.mxu0 0.0
        %1632 = vmatpush1.msra.mxu0 0.0
        %1633 = vmatprep.subr.mxu0 0.0
        %1634 = vmatpush1.msra.mxu0 0.0
        %1635 = vmatprep.subr.mxu0 0.0
        %1636 = vmatpush1.msra.mxu0 0.0
        %1637 = vmatprep.subr.mxu0 0.0
        %1638 = vmatpush1.msra.mxu0 0.0
        %1639 = vmatprep.subr.mxu0 0.0
        %1640 = vmatpush1.msra.mxu0 0.0
        %1641 = vmatprep.subr.mxu0 0.0
        %1642 = vmatpush1.msra.mxu0 0.0
        %1643 = vmatprep.subr.mxu0 0.0
        %1644 = vmatpush1.msra.mxu0 0.0
        %1645 = vmatprep.subr.mxu0 0.0
        %1646 = vmatpush1.msra.mxu0 0.0
        %1647 = vmatprep.subr.mxu0 0.0
        %1648 = vmatpush1.msra.mxu0 0.0
        %1649 = vmatprep.subr.mxu0 0.0
        %1650 = vmatpush1.msra.mxu0 0.0
        %1651 = vmatprep.subr.mxu0 0.0
        %1652 = vmatpush1.msra.mxu0 0.0
        %1653 = vmatprep.subr.mxu0 0.0
        %1654 = vmatpush1.msra.mxu0 0.0
        %1655 = vmatprep.subr.mxu0 0.0
        %1656 = vmatpush1.msra.mxu0 0.0
        %1657 = vmatprep.subr.mxu0 0.0
        %1658 = vmatpush1.msra.mxu0 0.0
        %1659 = vmatprep.subr.mxu0 0.0
        %1660 = vmatpush1.msra.mxu0 0.0
        %1661 = vmatprep.subr.mxu0 0.0
        %1662 = vmatpush1.msra.mxu0 0.0
        %1663 = vmatprep.subr.mxu0 0.0
        %1664 = vmatpush1.msra.mxu0 0.0
        %1665 = vmatprep.subr.mxu0 0.0
        %1666 = vmatpush1.msra.mxu0 0.0
        %1667 = vmatprep.subr.mxu0 0.0
        %1668 = vmatpush1.msra.mxu0 0.0
        %1669 = vmatprep.subr.mxu0 0.0
        %1670 = vmatpush1.msra.mxu0 0.0
        %1671 = vmatprep.subr.mxu0 0.0
        %1672 = vmatpush1.msra.mxu0 0.0
        %1673 = vmatprep.subr.mxu0 0.0
        %1674 = vmatpush1.msra.mxu0 0.0
        %1675 = vmatprep.subr.mxu0 0.0
        %1676 = vmatpush1.msra.mxu0 0.0
        %1677 = vmatprep.subr.mxu0 0.0
        %1678 = vmatpush1.msra.mxu0 0.0
        %1679 = vmatprep.subr.mxu0 0.0
        %1680 = vmatpush1.msra.mxu0 0.0
        %1681 = vmatprep.subr.mxu0 0.0
        %1682 = vmatpush1.msra.mxu0 0.0
        %1683 = vmatprep.subr.mxu0 0.0
        %1684 = vmatpush1.msra.mxu0 0.0
        %1685 = vmatprep.subr.mxu0 0.0
        %1686 = vmatpush1.msra.mxu0 0.0
        %1687 = vmatprep.mubr.f32.mxu0 0.0
        %1688 = vmatmul.mubr.f32.gmra.mrb[0].mxu0 %v1618
        %v1689 = vpop.f32.mrb[0].mxu0
        %v1690 = vadd.f32 0.0, %v1689
        %v1691 = vpop.f32.mrb[0].mxu0
        %1692 = vmatprep.mubr.f32.mxu0 0.0
        %1693 = vmatmul.mubr.f32.gmra.mrb[0].mxu0 %v1621
        %v1694 = vpop.f32.mrb[0].mxu0
        %v1695 = vadd.f32 0.0, %v1694
        %v1696 = vpop.f32.mrb[0].mxu0
        %1697 = vdwg.mxu0
        %1698 = vrot.lane.b32.xlu0 %v1078, 104
        %v1699 = vpop.permute.xlu0 %1698
        %1700 = vrot.lane.b32.xlu0 %v1083, 104
        %v1701 = vpop.permute.xlu0 %1700
        %1702 = vrot.lane.b32.xlu0 %v1078, 72
        %v1703 = vpop.permute.xlu0 %1702
        %1704 = vrot.lane.b32.xlu0 %v1083, 72
        %v1705 = vpop.permute.xlu0 %1704
        %v1706 = vsel %vm1092, %v1699, 0
        %v1708 = vsel %vm1092, %v1701, 0
        %v1710 = vsel %vm1092, %v1703, 0
        %v1712 = vsel %vm1092, %v1705, 0
        %1714 = vmatprep.subr.mxu0 0.0
        %1715 = vmatpush1.xpose.msra.mxu0 %v1710
        %1716 = vmatprep.subr.mxu0 0.0
        %1717 = vmatpush1.xpose.msra.mxu0 %v1712
        %1718 = vmatprep.subr.mxu0 0.0
        %1719 = vmatpush1.xpose.msra.mxu0 0.0
        %1720 = vmatprep.subr.mxu0 0.0
        %1721 = vmatpush1.xpose.msra.mxu0 0.0
        %1722 = vmatprep.subr.mxu0 0.0
        %1723 = vmatpush1.xpose.msra.mxu0 0.0
        %1724 = vmatprep.subr.mxu0 0.0
        %1725 = vmatpush1.xpose.msra.mxu0 0.0
        %1726 = vmatprep.subr.mxu0 0.0
        %1727 = vmatpush1.xpose.msra.mxu0 0.0
        %1728 = vmatprep.subr.mxu0 0.0
        %1729 = vmatpush1.xpose.msra.mxu0 0.0
        %1730 = vmatprep.subr.mxu0 0.0
        %1731 = vmatpush1.xpose.msra.mxu0 0.0
        %1732 = vmatprep.subr.mxu0 0.0
        %1733 = vmatpush1.xpose.msra.mxu0 0.0
        %1734 = vmatprep.subr.mxu0 0.0
        %1735 = vmatpush1.xpose.msra.mxu0 0.0
        %1736 = vmatprep.subr.mxu0 0.0
        %1737 = vmatpush1.xpose.msra.mxu0 0.0
        %1738 = vmatprep.subr.mxu0 0.0
        %1739 = vmatpush1.xpose.msra.mxu0 0.0
        %1740 = vmatprep.subr.mxu0 0.0
        %1741 = vmatpush1.xpose.msra.mxu0 0.0
        %1742 = vmatprep.subr.mxu0 0.0
        %1743 = vmatpush1.xpose.msra.mxu0 0.0
        %1744 = vmatprep.subr.mxu0 0.0
        %1745 = vmatpush1.xpose.msra.mxu0 0.0
        %1746 = vmatprep.subr.mxu0 0.0
        %1747 = vmatpush1.xpose.msra.mxu0 0.0
        %1748 = vmatprep.subr.mxu0 0.0
        %1749 = vmatpush1.xpose.msra.mxu0 0.0
        %1750 = vmatprep.subr.mxu0 0.0
        %1751 = vmatpush1.xpose.msra.mxu0 0.0
        %1752 = vmatprep.subr.mxu0 0.0
        %1753 = vmatpush1.xpose.msra.mxu0 0.0
        %1754 = vmatprep.subr.mxu0 0.0
        %1755 = vmatpush1.xpose.msra.mxu0 0.0
        %1756 = vmatprep.subr.mxu0 0.0
        %1757 = vmatpush1.xpose.msra.mxu0 0.0
        %1758 = vmatprep.subr.mxu0 0.0
        %1759 = vmatpush1.xpose.msra.mxu0 0.0
        %1760 = vmatprep.subr.mxu0 0.0
        %1761 = vmatpush1.xpose.msra.mxu0 0.0
        %1762 = vmatprep.subr.mxu0 0.0
        %1763 = vmatpush1.xpose.msra.mxu0 0.0
        %1764 = vmatprep.subr.mxu0 0.0
        %1765 = vmatpush1.xpose.msra.mxu0 0.0
        %1766 = vmatprep.subr.mxu0 0.0
        %1767 = vmatpush1.xpose.msra.mxu0 0.0
        %1768 = vmatprep.subr.mxu0 0.0
        %1769 = vmatpush1.xpose.msra.mxu0 0.0
        %1770 = vmatprep.subr.mxu0 0.0
        %1771 = vmatpush1.xpose.msra.mxu0 0.0
        %1772 = vmatprep.subr.mxu0 0.0
        %1773 = vmatpush1.xpose.msra.mxu0 0.0
        %1774 = vmatprep.subr.mxu0 0.0
        %1775 = vmatpush1.xpose.msra.mxu0 0.0
        %1776 = vmatprep.subr.mxu0 0.0
        %1777 = vmatpush1.xpose.msra.mxu0 0.0
        %1778 = vmatprep.mubr.f32.mxu0 0.0
        %1779 = vmatmul.mubr.f32.gmra.mrb[0].mxu0 %v1706
        %v1780 = vpop.f32.mrb[0].mxu0
        %v1781 = vadd.f32 0.0, %v1780
        %v1782 = vpop.f32.mrb[0].mxu0
        %1783 = vmatprep.mubr.f32.mxu0 0.0
        %1784 = vmatmul.mubr.f32.gmra.mrb[0].mxu0 %v1708
        %v1785 = vpop.f32.mrb[0].mxu0
        %v1786 = vadd.f32 0.0, %v1785
        %v1787 = vpop.f32.mrb[0].mxu0
        %1788 = vdwg.mxu0
        %v1789 = vmul.f32 %v1781, 0.35355338
        %v1790 = vmul.f32 %v1786, 0.35355338
        %v1791 = vadd.f32 %v1789, %v989
        %v1792 = vadd.f32 %v1790, %v990
        %v1793 = vsel %vm1180, %v1791, -inf
        %1794 = vmax.xlane.f32.xlu0 %v1793
        %v1795 = vpop.xlane.xlu0 %1794
        %v1796 = vsel %vm1180, %v1792, -inf
        %1797 = vmax.xlane.f32.xlu0 %v1796
        %v1798 = vpop.xlane.xlu0 %1797
        %v1799 = vsub.f32 %v1791, %v1795
        %v1800 = vsub.f32 %v1792, %v1798
        %v1801 = vmul.f32 %v1799, 1.442695
        %v1802 = vpow.pop %v1801
        %v1803 = vmul.f32 %v1800, 1.442695
        %v1804 = vpow.pop %v1803
        %v1805 = vsel %vm1180, %v1802, 0.0
        %1806 = vadd.xlane.f32.xlu0 %v1805
        %v1807 = vpop.xlane.xlu0 %1806
        %v1808 = vsel %vm1180, %v1804, 0.0
        %1809 = vadd.xlane.f32.xlu0 %v1808
        %v1810 = vpop.xlane.xlu0 %1809
        %v1811 = vrcp.pop %v1807
        %v1812 = vmul.f32 %v1802, %v1811
        %v1813 = vrcp.pop %v1810
        %v1814 = vmul.f32 %v1804, %v1813
        %1815 = vrot.lane.b32.xlu0 %v1078, 40
        %v1816 = vpop.permute.xlu0 %1815
        %1817 = vrot.lane.b32.xlu0 %v1083, 40
        %v1818 = vpop.permute.xlu0 %1817
        %v1822 = vsel %vm1180, %v1812, 0
        %v1825 = vsel %vm1180, %v1814, 0
        %1827 = vmatprep.subr.mxu0 0.0
        %1828 = vmatpush1.msra.mxu0 %v1816
        %1829 = vmatprep.subr.mxu0 0.0
        %1830 = vmatpush1.msra.mxu0 %v1818
        %1831 = vmatprep.subr.mxu0 0.0
        %1832 = vmatpush1.msra.mxu0 0.0
        %1833 = vmatprep.subr.mxu0 0.0
        %1834 = vmatpush1.msra.mxu0 0.0
        %1835 = vmatprep.subr.mxu0 0.0
        %1836 = vmatpush1.msra.mxu0 0.0
        %1837 = vmatprep.subr.mxu0 0.0
        %1838 = vmatpush1.msra.mxu0 0.0
        %1839 = vmatprep.subr.mxu0 0.0
        %1840 = vmatpush1.msra.mxu0 0.0
        %1841 = vmatprep.subr.mxu0 0.0
        %1842 = vmatpush1.msra.mxu0 0.0
        %1843 = vmatprep.subr.mxu0 0.0
        %1844 = vmatpush1.msra.mxu0 0.0
        %1845 = vmatprep.subr.mxu0 0.0
        %1846 = vmatpush1.msra.mxu0 0.0
        %1847 = vmatprep.subr.mxu0 0.0
        %1848 = vmatpush1.msra.mxu0 0.0
        %1849 = vmatprep.subr.mxu0 0.0
        %1850 = vmatpush1.msra.mxu0 0.0
        %1851 = vmatprep.subr.mxu0 0.0
        %1852 = vmatpush1.msra.mxu0 0.0
        %1853 = vmatprep.subr.mxu0 0.0
        %1854 = vmatpush1.msra.mxu0 0.0
        %1855 = vmatprep.subr.mxu0 0.0
        %1856 = vmatpush1.msra.mxu0 0.0
        %1857 = vmatprep.subr.mxu0 0.0
        %1858 = vmatpush1.msra.mxu0 0.0
        %1859 = vmatprep.subr.mxu0 0.0
        %1860 = vmatpush1.msra.mxu0 0.0
        %1861 = vmatprep.subr.mxu0 0.0
        %1862 = vmatpush1.msra.mxu0 0.0
        %1863 = vmatprep.subr.mxu0 0.0
        %1864 = vmatpush1.msra.mxu0 0.0
        %1865 = vmatprep.subr.mxu0 0.0
        %1866 = vmatpush1.msra.mxu0 0.0
        %1867 = vmatprep.subr.mxu0 0.0
        %1868 = vmatpush1.msra.mxu0 0.0
        %1869 = vmatprep.subr.mxu0 0.0
        %1870 = vmatpush1.msra.mxu0 0.0
        %1871 = vmatprep.subr.mxu0 0.0
        %1872 = vmatpush1.msra.mxu0 0.0
        %1873 = vmatprep.subr.mxu0 0.0
        %1874 = vmatpush1.msra.mxu0 0.0
        %1875 = vmatprep.subr.mxu0 0.0
        %1876 = vmatpush1.msra.mxu0 0.0
        %1877 = vmatprep.subr.mxu0 0.0
        %1878 = vmatpush1.msra.mxu0 0.0
        %1879 = vmatprep.subr.mxu0 0.0
        %1880 = vmatpush1.msra.mxu0 0.0
        %1881 = vmatprep.subr.mxu0 0.0
        %1882 = vmatpush1.msra.mxu0 0.0
        %1883 = vmatprep.subr.mxu0 0.0
        %1884 = vmatpush1.msra.mxu0 0.0
        %1885 = vmatprep.subr.mxu0 0.0
        %1886 = vmatpush1.msra.mxu0 0.0
        %1887 = vmatprep.subr.mxu0 0.0
        %1888 = vmatpush1.msra.mxu0 0.0
        %1889 = vmatprep.subr.mxu0 0.0
        %1890 = vmatpush1.msra.mxu0 0.0
        %1891 = vmatprep.mubr.f32.mxu0 0.0
        %1892 = vmatmul.mubr.f32.gmra.mrb[0].mxu0 %v1822
        %v1893 = vpop.f32.mrb[0].mxu0
        %v1894 = vadd.f32 0.0, %v1893
        %v1895 = vpop.f32.mrb[0].mxu0
        %1896 = vmatprep.mubr.f32.mxu0 0.0
        %1897 = vmatmul.mubr.f32.gmra.mrb[0].mxu0 %v1825
        %v1898 = vpop.f32.mrb[0].mxu0
        %v1899 = vadd.f32 0.0, %v1898
        %v1900 = vpop.f32.mrb[0].mxu0
        %1901 = vdwg.mxu0
        %1904 = vrot.lane.b32.xlu0 %v1486, 8
        %v1905 = vpop.permute.xlu0 %1904
        %1906 = vrot.lane.b32.xlu0 %v1491, 8
        %v1907 = vpop.permute.xlu0 %1906
        %1912 = vrot.lane.b32.xlu0 %v1690, 16
        %v1913 = vpop.permute.xlu0 %1912
        %1914 = vrot.lane.b32.xlu0 %v1695, 16
        %v1915 = vpop.permute.xlu0 %1914
        %1920 = vrot.lane.b32.xlu0 %v1894, 24
        %v1921 = vpop.permute.xlu0 %1920
        %1922 = vrot.lane.b32.xlu0 %v1899, 24
        %v1923 = vpop.permute.xlu0 %1922
        %v1926 = vsel %vm1092, %v1282, %v1905
        %v1927 = vsel %vm1092, %v1287, %v1907
        %v1928 = vsel %vm1180, %v1926, %v1913
        %v1929 = vsel %vm1180, %v1927, %v1915
        %vm1930 = vcmask 195584
        %v1931 = vsel %vm1930, %v1928, %v1921
        %v1932 = vsel %vm1930, %v1929, %v1923
        %v1933 = vld [vmem:[%s921] sm:$0xff]
        %v1934 = vld [vmem:[%s921 + $0x8] sm:$0xff]
        %v1935 = vld [vmem:[%s921 + $0x10] sm:$0xff]
        %v1936 = vld [vmem:[%s921 + $0x18] sm:$0xff]
        %v1937 = vld [vmem:[%s924] sm:$0x1]
        %v1939 = vlaneseq
        %v1940 = vshrl.u32 %v1939, 7
        %v1941 = vsub.s32 0, %v1940
        %v1942 = vrot.slane %v1937, %v1941
        %v1945 = vsel %vm1004, %v1931, 0
        %v1948 = vsel %vm1004, %v1932, 0
        %1950 = vmatprep.subr.mxu0 0.0
        %1951 = vmatpush1.msra.mxu0 %v1933
        %1952 = vmatprep.subr.mxu0 0.0
        %1953 = vmatpush1.msra.mxu0 %v1934
        %1954 = vmatprep.subr.mxu0 0.0
        %1955 = vmatpush1.msra.mxu0 %v1935
        %1956 = vmatprep.subr.mxu0 0.0
        %1957 = vmatpush1.msra.mxu0 %v1936
        %1958 = vmatprep.subr.mxu0 0.0
        %1959 = vmatpush1.msra.mxu0 0.0
        %1960 = vmatprep.subr.mxu0 0.0
        %1961 = vmatpush1.msra.mxu0 0.0
        %1962 = vmatprep.subr.mxu0 0.0
        %1963 = vmatpush1.msra.mxu0 0.0
        %1964 = vmatprep.subr.mxu0 0.0
        %1965 = vmatpush1.msra.mxu0 0.0
        %1966 = vmatprep.subr.mxu0 0.0
        %1967 = vmatpush1.msra.mxu0 0.0
        %1968 = vmatprep.subr.mxu0 0.0
        %1969 = vmatpush1.msra.mxu0 0.0
        %1970 = vmatprep.subr.mxu0 0.0
        %1971 = vmatpush1.msra.mxu0 0.0
        %1972 = vmatprep.subr.mxu0 0.0
        %1973 = vmatpush1.msra.mxu0 0.0
        %1974 = vmatprep.subr.mxu0 0.0
        %1975 = vmatpush1.msra.mxu0 0.0
        %1976 = vmatprep.subr.mxu0 0.0
        %1977 = vmatpush1.msra.mxu0 0.0
        %1978 = vmatprep.subr.mxu0 0.0
        %1979 = vmatpush1.msra.mxu0 0.0
        %1980 = vmatprep.subr.mxu0 0.0
        %1981 = vmatpush1.msra.mxu0 0.0
        %1982 = vmatprep.subr.mxu0 0.0
        %1983 = vmatpush1.msra.mxu0 0.0
        %1984 = vmatprep.subr.mxu0 0.0
        %1985 = vmatpush1.msra.mxu0 0.0
        %1986 = vmatprep.subr.mxu0 0.0
        %1987 = vmatpush1.msra.mxu0 0.0
        %1988 = vmatprep.subr.mxu0 0.0
        %1989 = vmatpush1.msra.mxu0 0.0
        %1990 = vmatprep.subr.mxu0 0.0
        %1991 = vmatpush1.msra.mxu0 0.0
        %1992 = vmatprep.subr.mxu0 0.0
        %1993 = vmatpush1.msra.mxu0 0.0
        %1994 = vmatprep.subr.mxu0 0.0
        %1995 = vmatpush1.msra.mxu0 0.0
        %1996 = vmatprep.subr.mxu0 0.0
        %1997 = vmatpush1.msra.mxu0 0.0
        %1998 = vmatprep.subr.mxu0 0.0
        %1999 = vmatpush1.msra.mxu0 0.0
        %2000 = vmatprep.subr.mxu0 0.0
        %2001 = vmatpush1.msra.mxu0 0.0
        %2002 = vmatprep.subr.mxu0 0.0
        %2003 = vmatpush1.msra.mxu0 0.0
        %2004 = vmatprep.subr.mxu0 0.0
        %2005 = vmatpush1.msra.mxu0 0.0
        %2006 = vmatprep.subr.mxu0 0.0
        %2007 = vmatpush1.msra.mxu0 0.0
        %2008 = vmatprep.subr.mxu0 0.0
        %2009 = vmatpush1.msra.mxu0 0.0
        %2010 = vmatprep.subr.mxu0 0.0
        %2011 = vmatpush1.msra.mxu0 0.0
        %2012 = vmatprep.subr.mxu0 0.0
        %2013 = vmatpush1.msra.mxu0 0.0
        %2014 = vmatprep.mubr.f32.mxu0 0.0
        %2015 = vmatmul.mubr.f32.gmra.mrb[0].mxu0 %v1945
        %v2016 = vpop.f32.mrb[0].mxu0
        %v2017 = vadd.f32 %v1942, %v2016
        %v2018 = vpop.f32.mrb[0].mxu0
        %2019 = vmatprep.mubr.f32.mxu0 0.0
        %2020 = vmatmul.mubr.f32.gmra.mrb[0].mxu0 %v1948
        %v2021 = vpop.f32.mrb[0].mxu0
        %v2022 = vadd.f32 %v1942, %v2021
        %v2023 = vpop.f32.mrb[0].mxu0
        %2024 = vdwg.mxu0
        %v2025 = vadd.f32 %v984, %v2017
        %v2026 = vadd.f32 %v985, %v2022
        %v2027 = vsel %vm1004, %v2025, 0.0
        %2028 = vadd.xlane.f32.xlu0 %v2027
        %v2029 = vpop.xlane.xlu0 %2028
        %v2030 = vsel %vm1004, %v2026, 0.0
        %2031 = vadd.xlane.f32.xlu0 %v2030
        %v2032 = vpop.xlane.xlu0 %2031
        %v2033 = vrcp.pop 32.0
        %v2034 = vmul.f32 %v2029, %v2033
        %v2035 = vmul.f32 %v2032, %v2033
        %v2036 = vsub.f32 %v2025, %v2034
        %v2037 = vsub.f32 %v2026, %v2035
        %v2038 = vmul.f32 %v2036, %v2036
        %v2039 = vmul.f32 %v2037, %v2037
        %v2040 = vsel %vm1004, %v2038, 0.0
        %2041 = vadd.xlane.f32.xlu0 %v2040
        %v2042 = vpop.xlane.xlu0 %2041
        %v2043 = vsel %vm1004, %v2039, 0.0
        %2044 = vadd.xlane.f32.xlu0 %v2043
        %v2045 = vpop.xlane.xlu0 %2044
        %v2046 = vmul.f32 %v2042, %v2033
        %v2047 = vmul.f32 %v2045, %v2033
        %v2048 = vadd.f32 %v2046, 1e-05
        %v2049 = vadd.f32 %v2047, 1e-05
        %v2050 = vrsqrt.pop %v2048
        %v2051 = vrsqrt.pop %v2049
        %v2052 = vmul.f32 %v2036, %v2050
        %v2053 = vmul.f32 %v2037, %v2051
        %v2054 = vld [vmem:[%s927] sm:$0x1]
        %v2056 = vlaneseq
        %v2057 = vshrl.u32 %v2056, 7
        %v2058 = vsub.s32 0, %v2057
        %v2059 = vrot.slane %v2054, %v2058
        %v2061 = vmul.f32 %v2052, %v2059
        %v2062 = vmul.f32 %v2053, %v2059
        %v2063 = vld [vmem:[%s930] sm:$0x1]
        %v2065 = vlaneseq
        %v2066 = vshrl.u32 %v2065, 7
        %v2067 = vsub.s32 0, %v2066
        %v2068 = vrot.slane %v2063, %v2067
        %v2070 = vadd.f32 %v2061, %v2068
        %v2071 = vadd.f32 %v2062, %v2068
        %v2072 = vld [vmem:[%s935] sm:$0xff]
        %v2073 = vld [vmem:[%s935 + $0x8] sm:$0xff]
        %v2074 = vld [vmem:[%s935 + $0x10] sm:$0xff]
        %v2075 = vld [vmem:[%s935 + $0x18] sm:$0xff]
        %v2076 = vld [vmem:[%s938] sm:$0x1]
        %v2078 = vlaneseq
        %v2079 = vshrl.u32 %v2078, 7
        %v2080 = vsub.s32 0, %v2079
        %v2081 = vrot.slane %v2076, %v2080
        %v2084 = vsel %vm1004, %v2070, 0
        %v2087 = vsel %vm1004, %v2071, 0
        %2089 = vmatprep.subr.mxu0 0.0
        %2090 = vmatpush1.msra.mxu0 %v2072
        %2091 = vmatprep.subr.mxu0 0.0
        %2092 = vmatpush1.msra.mxu0 %v2073
        %2093 = vmatprep.subr.mxu0 0.0
        %2094 = vmatpush1.msra.mxu0 %v2074
        %2095 = vmatprep.subr.mxu0 0.0
        %2096 = vmatpush1.msra.mxu0 %v2075
        %2097 = vmatprep.subr.mxu0 0.0
        %2098 = vmatpush1.msra.mxu0 0.0
        %2099 = vmatprep.subr.mxu0 0.0
        %2100 = vmatpush1.msra.mxu0 0.0
        %2101 = vmatprep.subr.mxu0 0.0
        %2102 = vmatpush1.msra.mxu0 0.0
        %2103 = vmatprep.subr.mxu0 0.0
        %2104 = vmatpush1.msra.mxu0 0.0
        %2105 = vmatprep.subr.mxu0 0.0
        %2106 = vmatpush1.msra.mxu0 0.0
        %2107 = vmatprep.subr.mxu0 0.0
        %2108 = vmatpush1.msra.mxu0 0.0
        %2109 = vmatprep.subr.mxu0 0.0
        %2110 = vmatpush1.msra.mxu0 0.0
        %2111 = vmatprep.subr.mxu0 0.0
        %2112 = vmatpush1.msra.mxu0 0.0
        %2113 = vmatprep.subr.mxu0 0.0
        %2114 = vmatpush1.msra.mxu0 0.0
        %2115 = vmatprep.subr.mxu0 0.0
        %2116 = vmatpush1.msra.mxu0 0.0
        %2117 = vmatprep.subr.mxu0 0.0
        %2118 = vmatpush1.msra.mxu0 0.0
        %2119 = vmatprep.subr.mxu0 0.0
        %2120 = vmatpush1.msra.mxu0 0.0
        %2121 = vmatprep.subr.mxu0 0.0
        %2122 = vmatpush1.msra.mxu0 0.0
        %2123 = vmatprep.subr.mxu0 0.0
        %2124 = vmatpush1.msra.mxu0 0.0
        %2125 = vmatprep.subr.mxu0 0.0
        %2126 = vmatpush1.msra.mxu0 0.0
        %2127 = vmatprep.subr.mxu0 0.0
        %2128 = vmatpush1.msra.mxu0 0.0
        %2129 = vmatprep.subr.mxu0 0.0
        %2130 = vmatpush1.msra.mxu0 0.0
        %2131 = vmatprep.subr.mxu0 0.0
        %2132 = vmatpush1.msra.mxu0 0.0
        %2133 = vmatprep.subr.mxu0 0.0
        %2134 = vmatpush1.msra.mxu0 0.0
        %2135 = vmatprep.subr.mxu0 0.0
        %2136 = vmatpush1.msra.mxu0 0.0
        %2137 = vmatprep.subr.mxu0 0.0
        %2138 = vmatpush1.msra.mxu0 0.0
        %2139 = vmatprep.subr.mxu0 0.0
        %2140 = vmatpush1.msra.mxu0 0.0
        %2141 = vmatprep.subr.mxu0 0.0
        %2142 = vmatpush1.msra.mxu0 0.0
        %2143 = vmatprep.subr.mxu0 0.0
        %2144 = vmatpush1.msra.mxu0 0.0
        %2145 = vmatprep.subr.mxu0 0.0
        %2146 = vmatpush1.msra.mxu0 0.0
        %2147 = vmatprep.subr.mxu0 0.0
        %2148 = vmatpush1.msra.mxu0 0.0
        %2149 = vmatprep.subr.mxu0 0.0
        %2150 = vmatpush1.msra.mxu0 0.0
        %2151 = vmatprep.subr.mxu0 0.0
        %2152 = vmatpush1.msra.mxu0 0.0
        %2153 = vmatprep.mubr.f32.mxu0 0.0
        %2154 = vmatmul.mubr.f32.gmra.mrb[0].mxu0 %v2084
        %v2155 = vpop.f32.mrb[0].mxu0
        %v2156 = vadd.f32 %v2081, %v2155
        %v2157 = vpop.f32.mrb[0].mxu0
        %2158 = vmatprep.mubr.f32.mxu0 0.0
        %2159 = vmatmul.mubr.f32.gmra.mrb[0].mxu0 %v2087
        %v2160 = vpop.f32.mrb[0].mxu0
        %v2161 = vadd.f32 %v2081, %v2160
        %v2162 = vpop.f32.mrb[0].mxu0
        %2163 = vdwg.mxu0
        %2168 = vrot.lane.b32.xlu0 %v2072, 96
        %v2169 = vpop.permute.xlu0 %2168
        %2170 = vrot.lane.b32.xlu0 %v2073, 96
        %v2171 = vpop.permute.xlu0 %2170
        %2172 = vrot.lane.b32.xlu0 %v2074, 96
        %v2173 = vpop.permute.xlu0 %2172
        %2174 = vrot.lane.b32.xlu0 %v2075, 96
        %v2175 = vpop.permute.xlu0 %2174
        %2180 = vrot.lane.b32.xlu0 %v2081, 96
        %v2181 = vpop.permute.xlu0 %2180
        %v2184 = vsel %vm1004, %v986, 0
        %v2187 = vsel %vm1004, %v987, 0
        %v2190 = vsel %vm1004, %v988, 0
        %2192 = vmatprep.subr.mxu0 0.0
        %2193 = vmatpush1.msra.mxu0 %v2169
        %2194 = vmatprep.subr.mxu0 0.0
        %2195 = vmatpush1.msra.mxu0 %v2171
        %2196 = vmatprep.subr.mxu0 0.0
        %2197 = vmatpush1.msra.mxu0 %v2173
        %2198 = vmatprep.subr.mxu0 0.0
        %2199 = vmatpush1.msra.mxu0 %v2175
        %2200 = vmatprep.subr.mxu0 0.0
        %2201 = vmatpush1.msra.mxu0 0.0
        %2202 = vmatprep.subr.mxu0 0.0
        %2203 = vmatpush1.msra.mxu0 0.0
        %2204 = vmatprep.subr.mxu0 0.0
        %2205 = vmatpush1.msra.mxu0 0.0
        %2206 = vmatprep.subr.mxu0 0.0
        %2207 = vmatpush1.msra.mxu0 0.0
        %2208 = vmatprep.subr.mxu0 0.0
        %2209 = vmatpush1.msra.mxu0 0.0
        %2210 = vmatprep.subr.mxu0 0.0
        %2211 = vmatpush1.msra.mxu0 0.0
        %2212 = vmatprep.subr.mxu0 0.0
        %2213 = vmatpush1.msra.mxu0 0.0
        %2214 = vmatprep.subr.mxu0 0.0
        %2215 = vmatpush1.msra.mxu0 0.0
        %2216 = vmatprep.subr.mxu0 0.0
        %2217 = vmatpush1.msra.mxu0 0.0
        %2218 = vmatprep.subr.mxu0 0.0
        %2219 = vmatpush1.msra.mxu0 0.0
        %2220 = vmatprep.subr.mxu0 0.0
        %2221 = vmatpush1.msra.mxu0 0.0
        %2222 = vmatprep.subr.mxu0 0.0
        %2223 = vmatpush1.msra.mxu0 0.0
        %2224 = vmatprep.subr.mxu0 0.0
        %2225 = vmatpush1.msra.mxu0 0.0
        %2226 = vmatprep.subr.mxu0 0.0
        %2227 = vmatpush1.msra.mxu0 0.0
        %2228 = vmatprep.subr.mxu0 0.0
        %2229 = vmatpush1.msra.mxu0 0.0
        %2230 = vmatprep.subr.mxu0 0.0
        %2231 = vmatpush1.msra.mxu0 0.0
        %2232 = vmatprep.subr.mxu0 0.0
        %2233 = vmatpush1.msra.mxu0 0.0
        %2234 = vmatprep.subr.mxu0 0.0
        %2235 = vmatpush1.msra.mxu0 0.0
        %2236 = vmatprep.subr.mxu0 0.0
        %2237 = vmatpush1.msra.mxu0 0.0
        %2238 = vmatprep.subr.mxu0 0.0
        %2239 = vmatpush1.msra.mxu0 0.0
        %2240 = vmatprep.subr.mxu0 0.0
        %2241 = vmatpush1.msra.mxu0 0.0
        %2242 = vmatprep.subr.mxu0 0.0
        %2243 = vmatpush1.msra.mxu0 0.0
        %2244 = vmatprep.subr.mxu0 0.0
        %2245 = vmatpush1.msra.mxu0 0.0
        %2246 = vmatprep.subr.mxu0 0.0
        %2247 = vmatpush1.msra.mxu0 0.0
        %2248 = vmatprep.subr.mxu0 0.0
        %2249 = vmatpush1.msra.mxu0 0.0
        %2250 = vmatprep.subr.mxu0 0.0
        %2251 = vmatpush1.msra.mxu0 0.0
        %2252 = vmatprep.subr.mxu0 0.0
        %2253 = vmatpush1.msra.mxu0 0.0
        %2254 = vmatprep.subr.mxu0 0.0
        %2255 = vmatpush1.msra.mxu0 0.0
        %2256 = vmatprep.mubr.f32.mxu0 0.0
        %2257 = vmatmul.mubr.f32.gmra.mrb[0].mxu0 %v2184
        %v2258 = vpop.f32.mrb[0].mxu0
        %v2259 = vadd.f32 %v2181, %v2258
        %v2260 = vpop.f32.mrb[0].mxu0
        %2261 = vmatprep.mubr.f32.mxu0 0.0
        %2262 = vmatmul.mubr.f32.gmra.mrb[0].mxu0 %v2187
        %v2263 = vpop.f32.mrb[0].mxu0
        %v2264 = vadd.f32 %v2181, %v2263
        %v2265 = vpop.f32.mrb[0].mxu0
        %2266 = vmatprep.mubr.f32.mxu0 0.0
        %2267 = vmatmul.mubr.f32.gmra.mrb[0].mxu0 %v2190
        %v2268 = vpop.f32.mrb[0].mxu0
        %v2269 = vadd.f32 %v2181, %v2268
        %v2270 = vpop.f32.mrb[0].mxu0
        %2271 = vdwg.mxu0
        %v2273 = vsel %vm1092, %v2156, 0
        %v2276 = vsel %vm1092, %v2161, 0
        %v2279 = vsel %vm1092, %v2259, 0
        %v2282 = vsel %vm1092, %v2264, 0
        %v2285 = vsel %vm1092, %v2269, 0
        %2287 = vmatprep.subr.mxu0 0.0
        %2288 = vmatpush1.xpose.msra.mxu0 %v2279
        %2289 = vmatprep.subr.mxu0 0.0
        %2290 = vmatpush1.xpose.msra.mxu0 %v2282
        %2291 = vmatprep.subr.mxu0 0.0
        %2292 = vmatpush1.xpose.msra.mxu0 %v2285
        %2293 = vmatprep.subr.mxu0 0.0
        %2294 = vmatpush1.xpose.msra.mxu0 0.0
        %2295 = vmatprep.subr.mxu0 0.0
        %2296 = vmatpush1.xpose.msra.mxu0 0.0
        %2297 = vmatprep.subr.mxu0 0.0
        %2298 = vmatpush1.xpose.msra.mxu0 0.0
        %2299 = vmatprep.subr.mxu0 0.0
        %2300 = vmatpush1.xpose.msra.mxu0 0.0
        %2301 = vmatprep.subr.mxu0 0.0
        %2302 = vmatpush1.xpose.msra.mxu0 0.0
        %2303 = vmatprep.subr.mxu0 0.0
        %2304 = vmatpush1.xpose.msra.mxu0 0.0
        %2305 = vmatprep.subr.mxu0 0.0
        %2306 = vmatpush1.xpose.msra.mxu0 0.0
        %2307 = vmatprep.subr.mxu0 0.0
        %2308 = vmatpush1.xpose.msra.mxu0 0.0
        %2309 = vmatprep.subr.mxu0 0.0
        %2310 = vmatpush1.xpose.msra.mxu0 0.0
        %2311 = vmatprep.subr.mxu0 0.0
        %2312 = vmatpush1.xpose.msra.mxu0 0.0
        %2313 = vmatprep.subr.mxu0 0.0
        %2314 = vmatpush1.xpose.msra.mxu0 0.0
        %2315 = vmatprep.subr.mxu0 0.0
        %2316 = vmatpush1.xpose.msra.mxu0 0.0
        %2317 = vmatprep.subr.mxu0 0.0
        %2318 = vmatpush1.xpose.msra.mxu0 0.0
        %2319 = vmatprep.subr.mxu0 0.0
        %2320 = vmatpush1.xpose.msra.mxu0 0.0
        %2321 = vmatprep.subr.mxu0 0.0
        %2322 = vmatpush1.xpose.msra.mxu0 0.0
        %2323 = vmatprep.subr.mxu0 0.0
        %2324 = vmatpush1.xpose.msra.mxu0 0.0
        %2325 = vmatprep.subr.mxu0 0.0
        %2326 = vmatpush1.xpose.msra.mxu0 0.0
        %2327 = vmatprep.subr.mxu0 0.0
        %2328 = vmatpush1.xpose.msra.mxu0 0.0
        %2329 = vmatprep.subr.mxu0 0.0
        %2330 = vmatpush1.xpose.msra.mxu0 0.0
        %2331 = vmatprep.subr.mxu0 0.0
        %2332 = vmatpush1.xpose.msra.mxu0 0.0
        %2333 = vmatprep.subr.mxu0 0.0
        %2334 = vmatpush1.xpose.msra.mxu0 0.0
        %2335 = vmatprep.subr.mxu0 0.0
        %2336 = vmatpush1.xpose.msra.mxu0 0.0
        %2337 = vmatprep.subr.mxu0 0.0
        %2338 = vmatpush1.xpose.msra.mxu0 0.0
        %2339 = vmatprep.subr.mxu0 0.0
        %2340 = vmatpush1.xpose.msra.mxu0 0.0
        %2341 = vmatprep.subr.mxu0 0.0
        %2342 = vmatpush1.xpose.msra.mxu0 0.0
        %2343 = vmatprep.subr.mxu0 0.0
        %2344 = vmatpush1.xpose.msra.mxu0 0.0
        %2345 = vmatprep.subr.mxu0 0.0
        %2346 = vmatpush1.xpose.msra.mxu0 0.0
        %2347 = vmatprep.subr.mxu0 0.0
        %2348 = vmatpush1.xpose.msra.mxu0 0.0
        %2349 = vmatprep.subr.mxu0 0.0
        %2350 = vmatpush1.xpose.msra.mxu0 0.0
        %2351 = vmatprep.mubr.f32.mxu0 0.0
        %2352 = vmatmul.mubr.f32.gmra.mrb[0].mxu0 %v2273
        %v2353 = vpop.f32.mrb[0].mxu0
        %v2354 = vadd.f32 0.0, %v2353
        %v2355 = vpop.f32.mrb[0].mxu0
        %2356 = vmatprep.mubr.f32.mxu0 0.0
        %2357 = vmatmul.mubr.f32.gmra.mrb[0].mxu0 %v2276
        %v2358 = vpop.f32.mrb[0].mxu0
        %v2359 = vadd.f32 0.0, %v2358
        %v2360 = vpop.f32.mrb[0].mxu0
        %2361 = vdwg.mxu0
        %v2362 = vmul.f32 %v2354, 0.35355338
        %v2363 = vmul.f32 %v2359, 0.35355338
        %v2364 = vadd.f32 %v2362, %v991
        %v2365 = vadd.f32 %v2363, %v992
        %v2366 = vsel %vm1930, %v2364, -inf
        %2367 = vmax.xlane.f32.xlu0 %v2366
        %v2368 = vpop.xlane.xlu0 %2367
        %v2369 = vsel %vm1930, %v2365, -inf
        %2370 = vmax.xlane.f32.xlu0 %v2369
        %v2371 = vpop.xlane.xlu0 %2370
        %v2372 = vsub.f32 %v2364, %v2368
        %v2373 = vsub.f32 %v2365, %v2371
        %v2374 = vmul.f32 %v2372, 1.442695
        %v2375 = vpow.pop %v2374
        %v2376 = vmul.f32 %v2373, 1.442695
        %v2377 = vpow.pop %v2376
        %v2378 = vsel %vm1930, %v2375, 0.0
        %2379 = vadd.xlane.f32.xlu0 %v2378
        %v2380 = vpop.xlane.xlu0 %2379
        %v2381 = vsel %vm1930, %v2377, 0.0
        %2382 = vadd.xlane.f32.xlu0 %v2381
        %v2383 = vpop.xlane.xlu0 %2382
        %v2384 = vrcp.pop %v2380
        %v2385 = vmul.f32 %v2375, %v2384
        %v2386 = vrcp.pop %v2383
        %v2387 = vmul.f32 %v2377, %v2386
        %2388 = vrot.lane.b32.xlu0 %v2259, 96
        %v2389 = vpop.permute.xlu0 %2388
        %2390 = vrot.lane.b32.xlu0 %v2264, 96
        %v2391 = vpop.permute.xlu0 %2390
        %2392 = vrot.lane.b32.xlu0 %v2269, 96
        %v2393 = vpop.permute.xlu0 %2392
        %v2398 = vsel %vm1930, %v2385, 0
        %v2401 = vsel %vm1930, %v2387, 0
        %2403 = vmatprep.subr.mxu0 0.0
        %2404 = vmatpush1.msra.mxu0 %v2389
        %2405 = vmatprep.subr.mxu0 0.0
        %2406 = vmatpush1.msra.mxu0 %v2391
        %2407 = vmatprep.subr.mxu0 0.0
        %2408 = vmatpush1.msra.mxu0 %v2393
        %2409 = vmatprep.subr.mxu0 0.0
        %2410 = vmatpush1.msra.mxu0 0.0
        %2411 = vmatprep.subr.mxu0 0.0
        %2412 = vmatpush1.msra.mxu0 0.0
        %2413 = vmatprep.subr.mxu0 0.0
        %2414 = vmatpush1.msra.mxu0 0.0
        %2415 = vmatprep.subr.mxu0 0.0
        %2416 = vmatpush1.msra.mxu0 0.0
        %2417 = vmatprep.subr.mxu0 0.0
        %2418 = vmatpush1.msra.mxu0 0.0
        %2419 = vmatprep.subr.mxu0 0.0
        %2420 = vmatpush1.msra.mxu0 0.0
        %2421 = vmatprep.subr.mxu0 0.0
        %2422 = vmatpush1.msra.mxu0 0.0
        %2423 = vmatprep.subr.mxu0 0.0
        %2424 = vmatpush1.msra.mxu0 0.0
        %2425 = vmatprep.subr.mxu0 0.0
        %2426 = vmatpush1.msra.mxu0 0.0
        %2427 = vmatprep.subr.mxu0 0.0
        %2428 = vmatpush1.msra.mxu0 0.0
        %2429 = vmatprep.subr.mxu0 0.0
        %2430 = vmatpush1.msra.mxu0 0.0
        %2431 = vmatprep.subr.mxu0 0.0
        %2432 = vmatpush1.msra.mxu0 0.0
        %2433 = vmatprep.subr.mxu0 0.0
        %2434 = vmatpush1.msra.mxu0 0.0
        %2435 = vmatprep.subr.mxu0 0.0
        %2436 = vmatpush1.msra.mxu0 0.0
        %2437 = vmatprep.subr.mxu0 0.0
        %2438 = vmatpush1.msra.mxu0 0.0
        %2439 = vmatprep.subr.mxu0 0.0
        %2440 = vmatpush1.msra.mxu0 0.0
        %2441 = vmatprep.subr.mxu0 0.0
        %2442 = vmatpush1.msra.mxu0 0.0
        %2443 = vmatprep.subr.mxu0 0.0
        %2444 = vmatpush1.msra.mxu0 0.0
        %2445 = vmatprep.subr.mxu0 0.0
        %2446 = vmatpush1.msra.mxu0 0.0
        %2447 = vmatprep.subr.mxu0 0.0
        %2448 = vmatpush1.msra.mxu0 0.0
        %2449 = vmatprep.subr.mxu0 0.0
        %2450 = vmatpush1.msra.mxu0 0.0
        %2451 = vmatprep.subr.mxu0 0.0
        %2452 = vmatpush1.msra.mxu0 0.0
        %2453 = vmatprep.subr.mxu0 0.0
        %2454 = vmatpush1.msra.mxu0 0.0
        %2455 = vmatprep.subr.mxu0 0.0
        %2456 = vmatpush1.msra.mxu0 0.0
        %2457 = vmatprep.subr.mxu0 0.0
        %2458 = vmatpush1.msra.mxu0 0.0
        %2459 = vmatprep.subr.mxu0 0.0
        %2460 = vmatpush1.msra.mxu0 0.0
        %2461 = vmatprep.subr.mxu0 0.0
        %2462 = vmatpush1.msra.mxu0 0.0
        %2463 = vmatprep.subr.mxu0 0.0
        %2464 = vmatpush1.msra.mxu0 0.0
        %2465 = vmatprep.subr.mxu0 0.0
        %2466 = vmatpush1.msra.mxu0 0.0
        %2467 = vmatprep.mubr.f32.mxu0 0.0
        %2468 = vmatmul.mubr.f32.gmra.mrb[0].mxu0 %v2398
        %v2469 = vpop.f32.mrb[0].mxu0
        %v2470 = vadd.f32 0.0, %v2469
        %v2471 = vpop.f32.mrb[0].mxu0
        %2472 = vmatprep.mubr.f32.mxu0 0.0
        %2473 = vmatmul.mubr.f32.gmra.mrb[0].mxu0 %v2401
        %v2474 = vpop.f32.mrb[0].mxu0
        %v2475 = vadd.f32 0.0, %v2474
        %v2476 = vpop.f32.mrb[0].mxu0
        %2477 = vdwg.mxu0
        %2478 = vrot.lane.b32.xlu0 %v2156, 120
        %v2479 = vpop.permute.xlu0 %2478
        %2480 = vrot.lane.b32.xlu0 %v2161, 120
        %v2481 = vpop.permute.xlu0 %2480
        %2482 = vrot.lane.b32.xlu0 %v2259, 120
        %v2483 = vpop.permute.xlu0 %2482
        %2484 = vrot.lane.b32.xlu0 %v2264, 120
        %v2485 = vpop.permute.xlu0 %2484
        %2486 = vrot.lane.b32.xlu0 %v2269, 120
        %v2487 = vpop.permute.xlu0 %2486
        %v2488 = vsel %vm1092, %v2479, 0
        %v2490 = vsel %vm1092, %v2481, 0
        %v2492 = vsel %vm1092, %v2483, 0
        %v2494 = vsel %vm1092, %v2485, 0
        %v2496 = vsel %vm1092, %v2487, 0
        %2498 = vmatprep.subr.mxu0 0.0
        %2499 = vmatpush1.xpose.msra.mxu0 %v2492
        %2500 = vmatprep.subr.mxu0 0.0
        %2501 = vmatpush1.xpose.msra.mxu0 %v2494
        %2502 = vmatprep.subr.mxu0 0.0
        %2503 = vmatpush1.xpose.msra.mxu0 %v2496
        %2504 = vmatprep.subr.mxu0 0.0
        %2505 = vmatpush1.xpose.msra.mxu0 0.0
        %2506 = vmatprep.subr.mxu0 0.0
        %2507 = vmatpush1.xpose.msra.mxu0 0.0
        %2508 = vmatprep.subr.mxu0 0.0
        %2509 = vmatpush1.xpose.msra.mxu0 0.0
        %2510 = vmatprep.subr.mxu0 0.0
        %2511 = vmatpush1.xpose.msra.mxu0 0.0
        %2512 = vmatprep.subr.mxu0 0.0
        %2513 = vmatpush1.xpose.msra.mxu0 0.0
        %2514 = vmatprep.subr.mxu0 0.0
        %2515 = vmatpush1.xpose.msra.mxu0 0.0
        %2516 = vmatprep.subr.mxu0 0.0
        %2517 = vmatpush1.xpose.msra.mxu0 0.0
        %2518 = vmatprep.subr.mxu0 0.0
        %2519 = vmatpush1.xpose.msra.mxu0 0.0
        %2520 = vmatprep.subr.mxu0 0.0
        %2521 = vmatpush1.xpose.msra.mxu0 0.0
        %2522 = vmatprep.subr.mxu0 0.0
        %2523 = vmatpush1.xpose.msra.mxu0 0.0
        %2524 = vmatprep.subr.mxu0 0.0
        %2525 = vmatpush1.xpose.msra.mxu0 0.0
        %2526 = vmatprep.subr.mxu0 0.0
        %2527 = vmatpush1.xpose.msra.mxu0 0.0
        %2528 = vmatprep.subr.mxu0 0.0
        %2529 = vmatpush1.xpose.msra.mxu0 0.0
        %2530 = vmatprep.subr.mxu0 0.0
        %2531 = vmatpush1.xpose.msra.mxu0 0.0
        %2532 = vmatprep.subr.mxu0 0.0
        %2533 = vmatpush1.xpose.msra.mxu0 0.0
        %2534 = vmatprep.subr.mxu0 0.0
        %2535 = vmatpush1.xpose.msra.mxu0 0.0
        %2536 = vmatprep.subr.mxu0 0.0
        %2537 = vmatpush1.xpose.msra.mxu0 0.0
        %2538 = vmatprep.subr.mxu0 0.0
        %2539 = vmatpush1.xpose.msra.mxu0 0.0
        %2540 = vmatprep.subr.mxu0 0.0
        %2541 = vmatpush1.xpose.msra.mxu0 0.0
        %2542 = vmatprep.subr.mxu0 0.0
        %2543 = vmatpush1.xpose.msra.mxu0 0.0
        %2544 = vmatprep.subr.mxu0 0.0
        %2545 = vmatpush1.xpose.msra.mxu0 0.0
        %2546 = vmatprep.subr.mxu0 0.0
        %2547 = vmatpush1.xpose.msra.mxu0 0.0
        %2548 = vmatprep.subr.mxu0 0.0
        %2549 = vmatpush1.xpose.msra.mxu0 0.0
        %2550 = vmatprep.subr.mxu0 0.0
        %2551 = vmatpush1.xpose.msra.mxu0 0.0
        %2552 = vmatprep.subr.mxu0 0.0
        %2553 = vmatpush1.xpose.msra.mxu0 0.0
        %2554 = vmatprep.subr.mxu0 0.0
        %2555 = vmatpush1.xpose.msra.mxu0 0.0
        %2556 = vmatprep.subr.mxu0 0.0
        %2557 = vmatpush1.xpose.msra.mxu0 0.0
        %2558 = vmatprep.subr.mxu0 0.0
        %2559 = vmatpush1.xpose.msra.mxu0 0.0
        %2560 = vmatprep.subr.mxu0 0.0
        %2561 = vmatpush1.xpose.msra.mxu0 0.0
        %2562 = vmatprep.mubr.f32.mxu0 0.0
        %2563 = vmatmul.mubr.f32.gmra.mrb[0].mxu0 %v2488
        %v2564 = vpop.f32.mrb[0].mxu0
        %v2565 = vadd.f32 0.0, %v2564
        %v2566 = vpop.f32.mrb[0].mxu0
        %2567 = vmatprep.mubr.f32.mxu0 0.0
        %2568 = vmatmul.mubr.f32.gmra.mrb[0].mxu0 %v2490
        %v2569 = vpop.f32.mrb[0].mxu0
        %v2570 = vadd.f32 0.0, %v2569
        %v2571 = vpop.f32.mrb[0].mxu0
        %2572 = vdwg.mxu0
        %v2573 = vmul.f32 %v2565, 0.35355338
        %v2574 = vmul.f32 %v2570, 0.35355338
        %v2575 = vadd.f32 %v2573, %v991
        %v2576 = vadd.f32 %v2574, %v992
        %v2577 = vsel %vm1930, %v2575, -inf
        %2578 = vmax.xlane.f32.xlu0 %v2577
        %v2579 = vpop.xlane.xlu0 %2578
        %v2580 = vsel %vm1930, %v2576, -inf
        %2581 = vmax.xlane.f32.xlu0 %v2580
        %v2582 = vpop.xlane.xlu0 %2581
        %v2583 = vsub.f32 %v2575, %v2579
        %v2584 = vsub.f32 %v2576, %v2582
        %v2585 = vmul.f32 %v2583, 1.442695
        %v2586 = vpow.pop %v2585
        %v2587 = vmul.f32 %v2584, 1.442695
        %v2588 = vpow.pop %v2587
        %v2589 = vsel %vm1930, %v2586, 0.0
        %2590 = vadd.xlane.f32.xlu0 %v2589
        %v2591 = vpop.xlane.xlu0 %2590
        %v2592 = vsel %vm1930, %v2588, 0.0
        %2593 = vadd.xlane.f32.xlu0 %v2592
        %v2594 = vpop.xlane.xlu0 %2593
        %v2595 = vrcp.pop %v2591
        %v2596 = vmul.f32 %v2586, %v2595
        %v2597 = vrcp.pop %v2594
        %v2598 = vmul.f32 %v2588, %v2597
        %2599 = vrot.lane.b32.xlu0 %v2259, 88
        %v2600 = vpop.permute.xlu0 %2599
        %2601 = vrot.lane.b32.xlu0 %v2264, 88
        %v2602 = vpop.permute.xlu0 %2601
        %2603 = vrot.lane.b32.xlu0 %v2269, 88
        %v2604 = vpop.permute.xlu0 %2603
        %v2609 = vsel %vm1930, %v2596, 0
        %v2612 = vsel %vm1930, %v2598, 0
        %2614 = vmatprep.subr.mxu0 0.0
        %2615 = vmatpush1.msra.mxu0 %v2600
        %2616 = vmatprep.subr.mxu0 0.0
        %2617 = vmatpush1.msra.mxu0 %v2602
        %2618 = vmatprep.subr.mxu0 0.0
        %2619 = vmatpush1.msra.mxu0 %v2604
        %2620 = vmatprep.subr.mxu0 0.0
        %2621 = vmatpush1.msra.mxu0 0.0
        %2622 = vmatprep.subr.mxu0 0.0
        %2623 = vmatpush1.msra.mxu0 0.0
        %2624 = vmatprep.subr.mxu0 0.0
        %2625 = vmatpush1.msra.mxu0 0.0
        %2626 = vmatprep.subr.mxu0 0.0
        %2627 = vmatpush1.msra.mxu0 0.0
        %2628 = vmatprep.subr.mxu0 0.0
        %2629 = vmatpush1.msra.mxu0 0.0
        %2630 = vmatprep.subr.mxu0 0.0
        %2631 = vmatpush1.msra.mxu0 0.0
        %2632 = vmatprep.subr.mxu0 0.0
        %2633 = vmatpush1.msra.mxu0 0.0
        %2634 = vmatprep.subr.mxu0 0.0
        %2635 = vmatpush1.msra.mxu0 0.0
        %2636 = vmatprep.subr.mxu0 0.0
        %2637 = vmatpush1.msra.mxu0 0.0
        %2638 = vmatprep.subr.mxu0 0.0
        %2639 = vmatpush1.msra.mxu0 0.0
        %2640 = vmatprep.subr.mxu0 0.0
        %2641 = vmatpush1.msra.mxu0 0.0
        %2642 = vmatprep.subr.mxu0 0.0
        %2643 = vmatpush1.msra.mxu0 0.0
        %2644 = vmatprep.subr.mxu0 0.0
        %2645 = vmatpush1.msra.mxu0 0.0
        %2646 = vmatprep.subr.mxu0 0.0
        %2647 = vmatpush1.msra.mxu0 0.0
        %2648 = vmatprep.subr.mxu0 0.0
        %2649 = vmatpush1.msra.mxu0 0.0
        %2650 = vmatprep.subr.mxu0 0.0
        %2651 = vmatpush1.msra.mxu0 0.0
        %2652 = vmatprep.subr.mxu0 0.0
        %2653 = vmatpush1.msra.mxu0 0.0
        %2654 = vmatprep.subr.mxu0 0.0
        %2655 = vmatpush1.msra.mxu0 0.0
        %2656 = vmatprep.subr.mxu0 0.0
        %2657 = vmatpush1.msra.mxu0 0.0
        %2658 = vmatprep.subr.mxu0 0.0
        %2659 = vmatpush1.msra.mxu0 0.0
        %2660 = vmatprep.subr.mxu0 0.0
        %2661 = vmatpush1.msra.mxu0 0.0
        %2662 = vmatprep.subr.mxu0 0.0
        %2663 = vmatpush1.msra.mxu0 0.0
        %2664 = vmatprep.subr.mxu0 0.0
        %2665 = vmatpush1.msra.mxu0 0.0
        %2666 = vmatprep.subr.mxu0 0.0
        %2667 = vmatpush1.msra.mxu0 0.0
        %2668 = vmatprep.subr.mxu0 0.0
        %2669 = vmatpush1.msra.mxu0 0.0
        %2670 = vmatprep.subr.mxu0 0.0
        %2671 = vmatpush1.msra.mxu0 0.0
        %2672 = vmatprep.subr.mxu0 0.0
        %2673 = vmatpush1.msra.mxu0 0.0
        %2674 = vmatprep.subr.mxu0 0.0
        %2675 = vmatpush1.msra.mxu0 0.0
        %2676 = vmatprep.subr.mxu0 0.0
        %2677 = vmatpush1.msra.mxu0 0.0
        %2678 = vmatprep.mubr.f32.mxu0 0.0
        %2679 = vmatmul.mubr.f32.gmra.mrb[0].mxu0 %v2609
        %v2680 = vpop.f32.mrb[0].mxu0
        %v2681 = vadd.f32 0.0, %v2680
        %v2682 = vpop.f32.mrb[0].mxu0
        %2683 = vmatprep.mubr.f32.mxu0 0.0
        %2684 = vmatmul.mubr.f32.gmra.mrb[0].mxu0 %v2612
        %v2685 = vpop.f32.mrb[0].mxu0
        %v2686 = vadd.f32 0.0, %v2685
        %v2687 = vpop.f32.mrb[0].mxu0
        %2688 = vdwg.mxu0
        %v2689 = vadd.f32 %v2385, %v2596
        %v2690 = vadd.f32 %v2387, %v2598
        %2691 = vrot.lane.b32.xlu0 %v2156, 112
        %v2692 = vpop.permute.xlu0 %2691
        %2693 = vrot.lane.b32.xlu0 %v2161, 112
        %v2694 = vpop.permute.xlu0 %2693
        %2695 = vrot.lane.b32.xlu0 %v2259, 112
        %v2696 = vpop.permute.xlu0 %2695
        %2697 = vrot.lane.b32.xlu0 %v2264, 112
        %v2698 = vpop.permute.xlu0 %2697
        %2699 = vrot.lane.b32.xlu0 %v2269, 112
        %v2700 = vpop.permute.xlu0 %2699
        %v2701 = vsel %vm1092, %v2692, 0
        %v2703 = vsel %vm1092, %v2694, 0
        %v2705 = vsel %vm1092, %v2696, 0
        %v2707 = vsel %vm1092, %v2698, 0
        %v2709 = vsel %vm1092, %v2700, 0
        %2711 = vmatprep.subr.mxu0 0.0
        %2712 = vmatpush1.xpose.msra.mxu0 %v2705
        %2713 = vmatprep.subr.mxu0 0.0
        %2714 = vmatpush1.xpose.msra.mxu0 %v2707
        %2715 = vmatprep.subr.mxu0 0.0
        %2716 = vmatpush1.xpose.msra.mxu0 %v2709
        %2717 = vmatprep.subr.mxu0 0.0
        %2718 = vmatpush1.xpose.msra.mxu0 0.0
        %2719 = vmatprep.subr.mxu0 0.0
        %2720 = vmatpush1.xpose.msra.mxu0 0.0
        %2721 = vmatprep.subr.mxu0 0.0
        %2722 = vmatpush1.xpose.msra.mxu0 0.0
        %2723 = vmatprep.subr.mxu0 0.0
        %2724 = vmatpush1.xpose.msra.mxu0 0.0
        %2725 = vmatprep.subr.mxu0 0.0
        %2726 = vmatpush1.xpose.msra.mxu0 0.0
        %2727 = vmatprep.subr.mxu0 0.0
        %2728 = vmatpush1.xpose.msra.mxu0 0.0
        %2729 = vmatprep.subr.mxu0 0.0
        %2730 = vmatpush1.xpose.msra.mxu0 0.0
        %2731 = vmatprep.subr.mxu0 0.0
        %2732 = vmatpush1.xpose.msra.mxu0 0.0
        %2733 = vmatprep.subr.mxu0 0.0
        %2734 = vmatpush1.xpose.msra.mxu0 0.0
        %2735 = vmatprep.subr.mxu0 0.0
        %2736 = vmatpush1.xpose.msra.mxu0 0.0
        %2737 = vmatprep.subr.mxu0 0.0
        %2738 = vmatpush1.xpose.msra.mxu0 0.0
        %2739 = vmatprep.subr.mxu0 0.0
        %2740 = vmatpush1.xpose.msra.mxu0 0.0
        %2741 = vmatprep.subr.mxu0 0.0
        %2742 = vmatpush1.xpose.msra.mxu0 0.0
        %2743 = vmatprep.subr.mxu0 0.0
        %2744 = vmatpush1.xpose.msra.mxu0 0.0
        %2745 = vmatprep.subr.mxu0 0.0
        %2746 = vmatpush1.xpose.msra.mxu0 0.0
        %2747 = vmatprep.subr.mxu0 0.0
        %2748 = vmatpush1.xpose.msra.mxu0 0.0
        %2749 = vmatprep.subr.mxu0 0.0
        %2750 = vmatpush1.xpose.msra.mxu0 0.0
        %2751 = vmatprep.subr.mxu0 0.0
        %2752 = vmatpush1.xpose.msra.mxu0 0.0
        %2753 = vmatprep.subr.mxu0 0.0
        %2754 = vmatpush1.xpose.msra.mxu0 0.0
        %2755 = vmatprep.subr.mxu0 0.0
        %2756 = vmatpush1.xpose.msra.mxu0 0.0
        %2757 = vmatprep.subr.mxu0 0.0
        %2758 = vmatpush1.xpose.msra.mxu0 0.0
        %2759 = vmatprep.subr.mxu0 0.0
        %2760 = vmatpush1.xpose.msra.mxu0 0.0
        %2761 = vmatprep.subr.mxu0 0.0
        %2762 = vmatpush1.xpose.msra.mxu0 0.0
        %2763 = vmatprep.subr.mxu0 0.0
        %2764 = vmatpush1.xpose.msra.mxu0 0.0
        %2765 = vmatprep.subr.mxu0 0.0
        %2766 = vmatpush1.xpose.msra.mxu0 0.0
        %2767 = vmatprep.subr.mxu0 0.0
        %2768 = vmatpush1.xpose.msra.mxu0 0.0
        %2769 = vmatprep.subr.mxu0 0.0
        %2770 = vmatpush1.xpose.msra.mxu0 0.0
        %2771 = vmatprep.subr.mxu0 0.0
        %2772 = vmatpush1.xpose.msra.mxu0 0.0
        %2773 = vmatprep.subr.mxu0 0.0
        %2774 = vmatpush1.xpose.msra.mxu0 0.0
        %2775 = vmatprep.mubr.f32.mxu0 0.0
        %2776 = vmatmul.mubr.f32.gmra.mrb[0].mxu0 %v2701
        %v2777 = vpop.f32.mrb[0].mxu0
        %v2778 = vadd.f32 0.0, %v2777
        %v2779 = vpop.f32.mrb[0].mxu0
        %2780 = vmatprep.mubr.f32.mxu0 0.0
        %2781 = vmatmul.mubr.f32.gmra.mrb[0].mxu0 %v2703
        %v2782 = vpop.f32.mrb[0].mxu0
        %v2783 = vadd.f32 0.0, %v2782
        %v2784 = vpop.f32.mrb[0].mxu0
        %2785 = vdwg.mxu0
        %v2786 = vmul.f32 %v2778, 0.35355338
        %v2787 = vmul.f32 %v2783, 0.35355338
        %v2788 = vadd.f32 %v2786, %v991
        %v2789 = vadd.f32 %v2787, %v992
        %v2790 = vsel %vm1930, %v2788, -inf
        %2791 = vmax.xlane.f32.xlu0 %v2790
        %v2792 = vpop.xlane.xlu0 %2791
        %v2793 = vsel %vm1930, %v2789, -inf
        %2794 = vmax.xlane.f32.xlu0 %v2793
        %v2795 = vpop.xlane.xlu0 %2794
        %v2796 = vsub.f32 %v2788, %v2792
        %v2797 = vsub.f32 %v2789, %v2795
        %v2798 = vmul.f32 %v2796, 1.442695
        %v2799 = vpow.pop %v2798
        %v2800 = vmul.f32 %v2797, 1.442695
        %v2801 = vpow.pop %v2800
        %v2802 = vsel %vm1930, %v2799, 0.0
        %2803 = vadd.xlane.f32.xlu0 %v2802
        %v2804 = vpop.xlane.xlu0 %2803
        %v2805 = vsel %vm1930, %v2801, 0.0
        %2806 = vadd.xlane.f32.xlu0 %v2805
        %v2807 = vpop.xlane.xlu0 %2806
        %v2808 = vrcp.pop %v2804
        %v2809 = vmul.f32 %v2799, %v2808
        %v2810 = vrcp.pop %v2807
        %v2811 = vmul.f32 %v2801, %v2810
        %2812 = vrot.lane.b32.xlu0 %v2259, 80
        %v2813 = vpop.permute.xlu0 %2812
        %2814 = vrot.lane.b32.xlu0 %v2264, 80
        %v2815 = vpop.permute.xlu0 %2814
        %2816 = vrot.lane.b32.xlu0 %v2269, 80
        %v2817 = vpop.permute.xlu0 %2816
        %v2822 = vsel %vm1930, %v2809, 0
        %v2825 = vsel %vm1930, %v2811, 0
        %2827 = vmatprep.subr.mxu0 0.0
        %2828 = vmatpush1.msra.mxu0 %v2813
        %2829 = vmatprep.subr.mxu0 0.0
        %2830 = vmatpush1.msra.mxu0 %v2815
        %2831 = vmatprep.subr.mxu0 0.0
        %2832 = vmatpush1.msra.mxu0 %v2817
        %2833 = vmatprep.subr.mxu0 0.0
        %2834 = vmatpush1.msra.mxu0 0.0
        %2835 = vmatprep.subr.mxu0 0.0
        %2836 = vmatpush1.msra.mxu0 0.0
        %2837 = vmatprep.subr.mxu0 0.0
        %2838 = vmatpush1.msra.mxu0 0.0
        %2839 = vmatprep.subr.mxu0 0.0
        %2840 = vmatpush1.msra.mxu0 0.0
        %2841 = vmatprep.subr.mxu0 0.0
        %2842 = vmatpush1.msra.mxu0 0.0
        %2843 = vmatprep.subr.mxu0 0.0
        %2844 = vmatpush1.msra.mxu0 0.0
        %2845 = vmatprep.subr.mxu0 0.0
        %2846 = vmatpush1.msra.mxu0 0.0
        %2847 = vmatprep.subr.mxu0 0.0
        %2848 = vmatpush1.msra.mxu0 0.0
        %2849 = vmatprep.subr.mxu0 0.0
        %2850 = vmatpush1.msra.mxu0 0.0
        %2851 = vmatprep.subr.mxu0 0.0
        %2852 = vmatpush1.msra.mxu0 0.0
        %2853 = vmatprep.subr.mxu0 0.0
        %2854 = vmatpush1.msra.mxu0 0.0
        %2855 = vmatprep.subr.mxu0 0.0
        %2856 = vmatpush1.msra.mxu0 0.0
        %2857 = vmatprep.subr.mxu0 0.0
        %2858 = vmatpush1.msra.mxu0 0.0
        %2859 = vmatprep.subr.mxu0 0.0
        %2860 = vmatpush1.msra.mxu0 0.0
        %2861 = vmatprep.subr.mxu0 0.0
        %2862 = vmatpush1.msra.mxu0 0.0
        %2863 = vmatprep.subr.mxu0 0.0
        %2864 = vmatpush1.msra.mxu0 0.0
        %2865 = vmatprep.subr.mxu0 0.0
        %2866 = vmatpush1.msra.mxu0 0.0
        %2867 = vmatprep.subr.mxu0 0.0
        %2868 = vmatpush1.msra.mxu0 0.0
        %2869 = vmatprep.subr.mxu0 0.0
        %2870 = vmatpush1.msra.mxu0 0.0
        %2871 = vmatprep.subr.mxu0 0.0
        %2872 = vmatpush1.msra.mxu0 0.0
        %2873 = vmatprep.subr.mxu0 0.0
        %2874 = vmatpush1.msra.mxu0 0.0
        %2875 = vmatprep.subr.mxu0 0.0
        %2876 = vmatpush1.msra.mxu0 0.0
        %2877 = vmatprep.subr.mxu0 0.0
        %2878 = vmatpush1.msra.mxu0 0.0
        %2879 = vmatprep.subr.mxu0 0.0
        %2880 = vmatpush1.msra.mxu0 0.0
        %2881 = vmatprep.subr.mxu0 0.0
        %2882 = vmatpush1.msra.mxu0 0.0
        %2883 = vmatprep.subr.mxu0 0.0
        %2884 = vmatpush1.msra.mxu0 0.0
        %2885 = vmatprep.subr.mxu0 0.0
        %2886 = vmatpush1.msra.mxu0 0.0
        %2887 = vmatprep.subr.mxu0 0.0
        %2888 = vmatpush1.msra.mxu0 0.0
        %2889 = vmatprep.subr.mxu0 0.0
        %2890 = vmatpush1.msra.mxu0 0.0
        %2891 = vmatprep.mubr.f32.mxu0 0.0
        %2892 = vmatmul.mubr.f32.gmra.mrb[0].mxu0 %v2822
        %v2893 = vpop.f32.mrb[0].mxu0
        %v2894 = vadd.f32 0.0, %v2893
        %v2895 = vpop.f32.mrb[0].mxu0
        %2896 = vmatprep.mubr.f32.mxu0 0.0
        %2897 = vmatmul.mubr.f32.gmra.mrb[0].mxu0 %v2825
        %v2898 = vpop.f32.mrb[0].mxu0
        %v2899 = vadd.f32 0.0, %v2898
        %v2900 = vpop.f32.mrb[0].mxu0
        %2901 = vdwg.mxu0
        %v2902 = vadd.f32 %v2689, %v2809
        %v2903 = vadd.f32 %v2690, %v2811
        %2904 = vrot.lane.b32.xlu0 %v2156, 104
        %v2905 = vpop.permute.xlu0 %2904
        %2906 = vrot.lane.b32.xlu0 %v2161, 104
        %v2907 = vpop.permute.xlu0 %2906
        %2908 = vrot.lane.b32.xlu0 %v2259, 104
        %v2909 = vpop.permute.xlu0 %2908
        %2910 = vrot.lane.b32.xlu0 %v2264, 104
        %v2911 = vpop.permute.xlu0 %2910
        %2912 = vrot.lane.b32.xlu0 %v2269, 104
        %v2913 = vpop.permute.xlu0 %2912
        %v2914 = vsel %vm1092, %v2905, 0
        %v2916 = vsel %vm1092, %v2907, 0
        %v2918 = vsel %vm1092, %v2909, 0
        %v2920 = vsel %vm1092, %v2911, 0
        %v2922 = vsel %vm1092, %v2913, 0
        %2924 = vmatprep.subr.mxu0 0.0
        %2925 = vmatpush1.xpose.msra.mxu0 %v2918
        %2926 = vmatprep.subr.mxu0 0.0
        %2927 = vmatpush1.xpose.msra.mxu0 %v2920
        %2928 = vmatprep.subr.mxu0 0.0
        %2929 = vmatpush1.xpose.msra.mxu0 %v2922
        %2930 = vmatprep.subr.mxu0 0.0
        %2931 = vmatpush1.xpose.msra.mxu0 0.0
        %2932 = vmatprep.subr.mxu0 0.0
        %2933 = vmatpush1.xpose.msra.mxu0 0.0
        %2934 = vmatprep.subr.mxu0 0.0
        %2935 = vmatpush1.xpose.msra.mxu0 0.0
        %2936 = vmatprep.subr.mxu0 0.0
        %2937 = vmatpush1.xpose.msra.mxu0 0.0
        %2938 = vmatprep.subr.mxu0 0.0
        %2939 = vmatpush1.xpose.msra.mxu0 0.0
        %2940 = vmatprep.subr.mxu0 0.0
        %2941 = vmatpush1.xpose.msra.mxu0 0.0
        %2942 = vmatprep.subr.mxu0 0.0
        %2943 = vmatpush1.xpose.msra.mxu0 0.0
        %2944 = vmatprep.subr.mxu0 0.0
        %2945 = vmatpush1.xpose.msra.mxu0 0.0
        %2946 = vmatprep.subr.mxu0 0.0
        %2947 = vmatpush1.xpose.msra.mxu0 0.0
        %2948 = vmatprep.subr.mxu0 0.0
        %2949 = vmatpush1.xpose.msra.mxu0 0.0
        %2950 = vmatprep.subr.mxu0 0.0
        %2951 = vmatpush1.xpose.msra.mxu0 0.0
        %2952 = vmatprep.subr.mxu0 0.0
        %2953 = vmatpush1.xpose.msra.mxu0 0.0
        %2954 = vmatprep.subr.mxu0 0.0
        %2955 = vmatpush1.xpose.msra.mxu0 0.0
        %2956 = vmatprep.subr.mxu0 0.0
        %2957 = vmatpush1.xpose.msra.mxu0 0.0
        %2958 = vmatprep.subr.mxu0 0.0
        %2959 = vmatpush1.xpose.msra.mxu0 0.0
        %2960 = vmatprep.subr.mxu0 0.0
        %2961 = vmatpush1.xpose.msra.mxu0 0.0
        %2962 = vmatprep.subr.mxu0 0.0
        %2963 = vmatpush1.xpose.msra.mxu0 0.0
        %2964 = vmatprep.subr.mxu0 0.0
        %2965 = vmatpush1.xpose.msra.mxu0 0.0
        %2966 = vmatprep.subr.mxu0 0.0
        %2967 = vmatpush1.xpose.msra.mxu0 0.0
        %2968 = vmatprep.subr.mxu0 0.0
        %2969 = vmatpush1.xpose.msra.mxu0 0.0
        %2970 = vmatprep.subr.mxu0 0.0
        %2971 = vmatpush1.xpose.msra.mxu0 0.0
        %2972 = vmatprep.subr.mxu0 0.0
        %2973 = vmatpush1.xpose.msra.mxu0 0.0
        %2974 = vmatprep.subr.mxu0 0.0
        %2975 = vmatpush1.xpose.msra.mxu0 0.0
        %2976 = vmatprep.subr.mxu0 0.0
        %2977 = vmatpush1.xpose.msra.mxu0 0.0
        %2978 = vmatprep.subr.mxu0 0.0
        %2979 = vmatpush1.xpose.msra.mxu0 0.0
        %2980 = vmatprep.subr.mxu0 0.0
        %2981 = vmatpush1.xpose.msra.mxu0 0.0
        %2982 = vmatprep.subr.mxu0 0.0
        %2983 = vmatpush1.xpose.msra.mxu0 0.0
        %2984 = vmatprep.subr.mxu0 0.0
        %2985 = vmatpush1.xpose.msra.mxu0 0.0
        %2986 = vmatprep.subr.mxu0 0.0
        %2987 = vmatpush1.xpose.msra.mxu0 0.0
        %2988 = vmatprep.mubr.f32.mxu0 0.0
        %2989 = vmatmul.mubr.f32.gmra.mrb[0].mxu0 %v2914
        %v2990 = vpop.f32.mrb[0].mxu0
        %v2991 = vadd.f32 0.0, %v2990
        %v2992 = vpop.f32.mrb[0].mxu0
        %2993 = vmatprep.mubr.f32.mxu0 0.0
        %2994 = vmatmul.mubr.f32.gmra.mrb[0].mxu0 %v2916
        %v2995 = vpop.f32.mrb[0].mxu0
        %v2996 = vadd.f32 0.0, %v2995
        %v2997 = vpop.f32.mrb[0].mxu0
        %2998 = vdwg.mxu0
        %v2999 = vmul.f32 %v2991, 0.35355338
        %v3000 = vmul.f32 %v2996, 0.35355338
        %v3001 = vadd.f32 %v2999, %v991
        %v3002 = vadd.f32 %v3000, %v992
        %v3003 = vsel %vm1930, %v3001, -inf
        %3004 = vmax.xlane.f32.xlu0 %v3003
        %v3005 = vpop.xlane.xlu0 %3004
        %v3006 = vsel %vm1930, %v3002, -inf
        %3007 = vmax.xlane.f32.xlu0 %v3006
        %v3008 = vpop.xlane.xlu0 %3007
        %v3009 = vsub.f32 %v3001, %v3005
        %v3010 = vsub.f32 %v3002, %v3008
        %v3011 = vmul.f32 %v3009, 1.442695
        %v3012 = vpow.pop %v3011
        %v3013 = vmul.f32 %v3010, 1.442695
        %v3014 = vpow.pop %v3013
        %v3015 = vsel %vm1930, %v3012, 0.0
        %3016 = vadd.xlane.f32.xlu0 %v3015
        %v3017 = vpop.xlane.xlu0 %3016
        %v3018 = vsel %vm1930, %v3014, 0.0
        %3019 = vadd.xlane.f32.xlu0 %v3018
        %v3020 = vpop.xlane.xlu0 %3019
        %v3021 = vrcp.pop %v3017
        %v3022 = vmul.f32 %v3012, %v3021
        %v3023 = vrcp.pop %v3020
        %v3024 = vmul.f32 %v3014, %v3023
        %3025 = vrot.lane.b32.xlu0 %v2259, 72
        %v3026 = vpop.permute.xlu0 %3025
        %3027 = vrot.lane.b32.xlu0 %v2264, 72
        %v3028 = vpop.permute.xlu0 %3027
        %3029 = vrot.lane.b32.xlu0 %v2269, 72
        %v3030 = vpop.permute.xlu0 %3029
        %v3035 = vsel %vm1930, %v3022, 0
        %v3038 = vsel %vm1930, %v3024, 0
        %3040 = vmatprep.subr.mxu0 0.0
        %3041 = vmatpush1.msra.mxu0 %v3026
        %3042 = vmatprep.subr.mxu0 0.0
        %3043 = vmatpush1.msra.mxu0 %v3028
        %3044 = vmatprep.subr.mxu0 0.0
        %3045 = vmatpush1.msra.mxu0 %v3030
        %3046 = vmatprep.subr.mxu0 0.0
        %3047 = vmatpush1.msra.mxu0 0.0
        %3048 = vmatprep.subr.mxu0 0.0
        %3049 = vmatpush1.msra.mxu0 0.0
        %3050 = vmatprep.subr.mxu0 0.0
        %3051 = vmatpush1.msra.mxu0 0.0
        %3052 = vmatprep.subr.mxu0 0.0
        %3053 = vmatpush1.msra.mxu0 0.0
        %3054 = vmatprep.subr.mxu0 0.0
        %3055 = vmatpush1.msra.mxu0 0.0
        %3056 = vmatprep.subr.mxu0 0.0
        %3057 = vmatpush1.msra.mxu0 0.0
        %3058 = vmatprep.subr.mxu0 0.0
        %3059 = vmatpush1.msra.mxu0 0.0
        %3060 = vmatprep.subr.mxu0 0.0
        %3061 = vmatpush1.msra.mxu0 0.0
        %3062 = vmatprep.subr.mxu0 0.0
        %3063 = vmatpush1.msra.mxu0 0.0
        %3064 = vmatprep.subr.mxu0 0.0
        %3065 = vmatpush1.msra.mxu0 0.0
        %3066 = vmatprep.subr.mxu0 0.0
        %3067 = vmatpush1.msra.mxu0 0.0
        %3068 = vmatprep.subr.mxu0 0.0
        %3069 = vmatpush1.msra.mxu0 0.0
        %3070 = vmatprep.subr.mxu0 0.0
        %3071 = vmatpush1.msra.mxu0 0.0
        %3072 = vmatprep.subr.mxu0 0.0
        %3073 = vmatpush1.msra.mxu0 0.0
        %3074 = vmatprep.subr.mxu0 0.0
        %3075 = vmatpush1.msra.mxu0 0.0
        %3076 = vmatprep.subr.mxu0 0.0
        %3077 = vmatpush1.msra.mxu0 0.0
        %3078 = vmatprep.subr.mxu0 0.0
        %3079 = vmatpush1.msra.mxu0 0.0
        %3080 = vmatprep.subr.mxu0 0.0
        %3081 = vmatpush1.msra.mxu0 0.0
        %3082 = vmatprep.subr.mxu0 0.0
        %3083 = vmatpush1.msra.mxu0 0.0
        %3084 = vmatprep.subr.mxu0 0.0
        %3085 = vmatpush1.msra.mxu0 0.0
        %3086 = vmatprep.subr.mxu0 0.0
        %3087 = vmatpush1.msra.mxu0 0.0
        %3088 = vmatprep.subr.mxu0 0.0
        %3089 = vmatpush1.msra.mxu0 0.0
        %3090 = vmatprep.subr.mxu0 0.0
        %3091 = vmatpush1.msra.mxu0 0.0
        %3092 = vmatprep.subr.mxu0 0.0
        %3093 = vmatpush1.msra.mxu0 0.0
        %3094 = vmatprep.subr.mxu0 0.0
        %3095 = vmatpush1.msra.mxu0 0.0
        %3096 = vmatprep.subr.mxu0 0.0
        %3097 = vmatpush1.msra.mxu0 0.0
        %3098 = vmatprep.subr.mxu0 0.0
        %3099 = vmatpush1.msra.mxu0 0.0
        %3100 = vmatprep.subr.mxu0 0.0
        %3101 = vmatpush1.msra.mxu0 0.0
        %3102 = vmatprep.subr.mxu0 0.0
        %3103 = vmatpush1.msra.mxu0 0.0
        %3104 = vmatprep.mubr.f32.mxu0 0.0
        %3105 = vmatmul.mubr.f32.gmra.mrb[0].mxu0 %v3035
        %v3106 = vpop.f32.mrb[0].mxu0
        %v3107 = vadd.f32 0.0, %v3106
        %v3108 = vpop.f32.mrb[0].mxu0
        %3109 = vmatprep.mubr.f32.mxu0 0.0
        %3110 = vmatmul.mubr.f32.gmra.mrb[0].mxu0 %v3038
        %v3111 = vpop.f32.mrb[0].mxu0
        %v3112 = vadd.f32 0.0, %v3111
        %v3113 = vpop.f32.mrb[0].mxu0
        %3114 = vdwg.mxu0
        %v3115 = vadd.f32 %v2902, %v3022
        %v3116 = vadd.f32 %v2903, %v3024
        %3119 = vrot.lane.b32.xlu0 %v2681, 8
        %v3120 = vpop.permute.xlu0 %3119
        %3121 = vrot.lane.b32.xlu0 %v2686, 8
        %v3122 = vpop.permute.xlu0 %3121
        %3127 = vrot.lane.b32.xlu0 %v2894, 16
        %v3128 = vpop.permute.xlu0 %3127
        %3129 = vrot.lane.b32.xlu0 %v2899, 16
        %v3130 = vpop.permute.xlu0 %3129
        %3135 = vrot.lane.b32.xlu0 %v3107, 24
        %v3136 = vpop.permute.xlu0 %3135
        %3137 = vrot.lane.b32.xlu0 %v3112, 24
        %v3138 = vpop.permute.xlu0 %3137
        %v3141 = vsel %vm1092, %v2470, %v3120
        %v3142 = vsel %vm1092, %v2475, %v3122
        %v3143 = vsel %vm1180, %v3141, %v3128
        %v3144 = vsel %vm1180, %v3142, %v3130
        %v3145 = vsel %vm1930, %v3143, %v3136
        %v3146 = vsel %vm1930, %v3144, %v3138
        %v3147 = vmul.f32 %v3115, 0.25
        %v3148 = vmul.f32 %v3116, 0.25
        %v3149 = vld [vmem:[%s943] sm:$0xff]
        %v3150 = vld [vmem:[%s943 + $0x8] sm:$0xff]
        %v3151 = vld [vmem:[%s943 + $0x10] sm:$0xff]
        %v3152 = vld [vmem:[%s943 + $0x18] sm:$0xff]
        %v3153 = vld [vmem:[%s946] sm:$0x1]
        %v3155 = vlaneseq
        %v3156 = vshrl.u32 %v3155, 7
        %v3157 = vsub.s32 0, %v3156
        %v3158 = vrot.slane %v3153, %v3157
        %v3161 = vsel %vm1004, %v3145, 0
        %v3164 = vsel %vm1004, %v3146, 0
        %3166 = vmatprep.subr.mxu0 0.0
        %3167 = vmatpush1.msra.mxu0 %v3149
        %3168 = vmatprep.subr.mxu0 0.0
        %3169 = vmatpush1.msra.mxu0 %v3150
        %3170 = vmatprep.subr.mxu0 0.0
        %3171 = vmatpush1.msra.mxu0 %v3151
        %3172 = vmatprep.subr.mxu0 0.0
        %3173 = vmatpush1.msra.mxu0 %v3152
        %3174 = vmatprep.subr.mxu0 0.0
        %3175 = vmatpush1.msra.mxu0 0.0
        %3176 = vmatprep.subr.mxu0 0.0
        %3177 = vmatpush1.msra.mxu0 0.0
        %3178 = vmatprep.subr.mxu0 0.0
        %3179 = vmatpush1.msra.mxu0 0.0
        %3180 = vmatprep.subr.mxu0 0.0
        %3181 = vmatpush1.msra.mxu0 0.0
        %3182 = vmatprep.subr.mxu0 0.0
        %3183 = vmatpush1.msra.mxu0 0.0
        %3184 = vmatprep.subr.mxu0 0.0
        %3185 = vmatpush1.msra.mxu0 0.0
        %3186 = vmatprep.subr.mxu0 0.0
        %3187 = vmatpush1.msra.mxu0 0.0
        %3188 = vmatprep.subr.mxu0 0.0
        %3189 = vmatpush1.msra.mxu0 0.0
        %3190 = vmatprep.subr.mxu0 0.0
        %3191 = vmatpush1.msra.mxu0 0.0
        %3192 = vmatprep.subr.mxu0 0.0
        %3193 = vmatpush1.msra.mxu0 0.0
        %3194 = vmatprep.subr.mxu0 0.0
        %3195 = vmatpush1.msra.mxu0 0.0
        %3196 = vmatprep.subr.mxu0 0.0
        %3197 = vmatpush1.msra.mxu0 0.0
        %3198 = vmatprep.subr.mxu0 0.0
        %3199 = vmatpush1.msra.mxu0 0.0
        %3200 = vmatprep.subr.mxu0 0.0
        %3201 = vmatpush1.msra.mxu0 0.0
        %3202 = vmatprep.subr.mxu0 0.0
        %3203 = vmatpush1.msra.mxu0 0.0
        %3204 = vmatprep.subr.mxu0 0.0
        %3205 = vmatpush1.msra.mxu0 0.0
        %3206 = vmatprep.subr.mxu0 0.0
        %3207 = vmatpush1.msra.mxu0 0.0
        %3208 = vmatprep.subr.mxu0 0.0
        %3209 = vmatpush1.msra.mxu0 0.0
        %3210 = vmatprep.subr.mxu0 0.0
        %3211 = vmatpush1.msra.mxu0 0.0
        %3212 = vmatprep.subr.mxu0 0.0
        %3213 = vmatpush1.msra.mxu0 0.0
        %3214 = vmatprep.subr.mxu0 0.0
        %3215 = vmatpush1.msra.mxu0 0.0
        %3216 = vmatprep.subr.mxu0 0.0
        %3217 = vmatpush1.msra.mxu0 0.0
        %3218 = vmatprep.subr.mxu0 0.0
        %3219 = vmatpush1.msra.mxu0 0.0
        %3220 = vmatprep.subr.mxu0 0.0
        %3221 = vmatpush1.msra.mxu0 0.0
        %3222 = vmatprep.subr.mxu0 0.0
        %3223 = vmatpush1.msra.mxu0 0.0
        %3224 = vmatprep.subr.mxu0 0.0
        %3225 = vmatpush1.msra.mxu0 0.0
        %3226 = vmatprep.subr.mxu0 0.0
        %3227 = vmatpush1.msra.mxu0 0.0
        %3228 = vmatprep.subr.mxu0 0.0
        %3229 = vmatpush1.msra.mxu0 0.0
        %3230 = vmatprep.mubr.f32.mxu0 0.0
        %3231 = vmatmul.mubr.f32.gmra.mrb[0].mxu0 %v3161
        %v3232 = vpop.f32.mrb[0].mxu0
        %v3233 = vadd.f32 %v3158, %v3232
        %v3234 = vpop.f32.mrb[0].mxu0
        %3235 = vmatprep.mubr.f32.mxu0 0.0
        %3236 = vmatmul.mubr.f32.gmra.mrb[0].mxu0 %v3164
        %v3237 = vpop.f32.mrb[0].mxu0
        %v3238 = vadd.f32 %v3158, %v3237
        %v3239 = vpop.f32.mrb[0].mxu0
        %3240 = vdwg.mxu0
        %v3241 = vadd.f32 %v2070, %v3233
        %v3242 = vadd.f32 %v2071, %v3238
        %v3243 = vsel %vm1004, %v3241, 0.0
        %3244 = vadd.xlane.f32.xlu0 %v3243
        %v3245 = vpop.xlane.xlu0 %3244
        %v3246 = vsel %vm1004, %v3242, 0.0
        %3247 = vadd.xlane.f32.xlu0 %v3246
        %v3248 = vpop.xlane.xlu0 %3247
        %v3249 = vmul.f32 %v3245, %v2033
        %v3250 = vmul.f32 %v3248, %v2033
        %v3251 = vsub.f32 %v3241, %v3249
        %v3252 = vsub.f32 %v3242, %v3250
        %v3253 = vmul.f32 %v3251, %v3251
        %v3254 = vmul.f32 %v3252, %v3252
        %v3255 = vsel %vm1004, %v3253, 0.0
        %3256 = vadd.xlane.f32.xlu0 %v3255
        %v3257 = vpop.xlane.xlu0 %3256
        %v3258 = vsel %vm1004, %v3254, 0.0
        %3259 = vadd.xlane.f32.xlu0 %v3258
        %v3260 = vpop.xlane.xlu0 %3259
        %v3261 = vmul.f32 %v3257, %v2033
        %v3262 = vmul.f32 %v3260, %v2033
        %v3263 = vadd.f32 %v3261, 1e-05
        %v3264 = vadd.f32 %v3262, 1e-05
        %v3265 = vrsqrt.pop %v3263
        %v3266 = vrsqrt.pop %v3264
        %v3267 = vmul.f32 %v3251, %v3265
        %v3268 = vmul.f32 %v3252, %v3266
        %v3269 = vld [vmem:[%s949] sm:$0x1]
        %v3271 = vlaneseq
        %v3272 = vshrl.u32 %v3271, 7
        %v3273 = vsub.s32 0, %v3272
        %v3274 = vrot.slane %v3269, %v3273
        %v3276 = vmul.f32 %v3267, %v3274
        %v3277 = vmul.f32 %v3268, %v3274
        %v3278 = vld [vmem:[%s952] sm:$0x1]
        %v3280 = vlaneseq
        %v3281 = vshrl.u32 %v3280, 7
        %v3282 = vsub.s32 0, %v3281
        %v3283 = vrot.slane %v3278, %v3282
        %v3285 = vadd.f32 %v3276, %v3283
        %v3286 = vadd.f32 %v3277, %v3283
        %vm3287 = vcmask 97280
        %3288 = vst.msk [vmem:[%s908] sm:$0xff] %vm3287, %v3147
        %3290 = vrot.lane.b32.xlu0 %v3148, 116
        %v3291 = vpop.permute.xlu0 %3290
        %s3293 = scalar_lea.vmem %s908, 8 [#allocation3]
        %3294 = vst.msk [vmem:[%s3293] sm:$0xff] %vm3287, %v3291
        %v3295 = vld [vmem:[%s957] sm:$0xff]
        %v3296 = vld [vmem:[%s957 + $0x8] sm:$0xff]
        %v3297 = vld [vmem:[%s957 + $0x10] sm:$0xff]
        %v3298 = vld [vmem:[%s957 + $0x18] sm:$0xff]
        %v3299 = vld [vmem:[%s960] sm:$0x1]
        %v3301 = vlaneseq
        %v3302 = vshrl.u32 %v3301, 7
        %v3303 = vsub.s32 0, %v3302
        %v3304 = vrot.slane %v3299, %v3303
        %v3307 = vsel %vm1004, %v3285, 0
        %v3310 = vsel %vm1004, %v3286, 0
        %3312 = vmatprep.subr.mxu0 0.0
        %3313 = vmatpush1.msra.mxu0 %v3295
        %3314 = vmatprep.subr.mxu0 0.0
        %3315 = vmatpush1.msra.mxu0 %v3296
        %3316 = vmatprep.subr.mxu0 0.0
        %3317 = vmatpush1.msra.mxu0 %v3297
        %3318 = vmatprep.subr.mxu0 0.0
        %3319 = vmatpush1.msra.mxu0 %v3298
        %3320 = vmatprep.subr.mxu0 0.0
        %3321 = vmatpush1.msra.mxu0 0.0
        %3322 = vmatprep.subr.mxu0 0.0
        %3323 = vmatpush1.msra.mxu0 0.0
        %3324 = vmatprep.subr.mxu0 0.0
        %3325 = vmatpush1.msra.mxu0 0.0
        %3326 = vmatprep.subr.mxu0 0.0
        %3327 = vmatpush1.msra.mxu0 0.0
        %3328 = vmatprep.subr.mxu0 0.0
        %3329 = vmatpush1.msra.mxu0 0.0
        %3330 = vmatprep.subr.mxu0 0.0
        %3331 = vmatpush1.msra.mxu0 0.0
        %3332 = vmatprep.subr.mxu0 0.0
        %3333 = vmatpush1.msra.mxu0 0.0
        %3334 = vmatprep.subr.mxu0 0.0
        %3335 = vmatpush1.msra.mxu0 0.0
        %3336 = vmatprep.subr.mxu0 0.0
        %3337 = vmatpush1.msra.mxu0 0.0
        %3338 = vmatprep.subr.mxu0 0.0
        %3339 = vmatpush1.msra.mxu0 0.0
        %3340 = vmatprep.subr.mxu0 0.0
        %3341 = vmatpush1.msra.mxu0 0.0
        %3342 = vmatprep.subr.mxu0 0.0
        %3343 = vmatpush1.msra.mxu0 0.0
        %3344 = vmatprep.subr.mxu0 0.0
        %3345 = vmatpush1.msra.mxu0 0.0
        %3346 = vmatprep.subr.mxu0 0.0
        %3347 = vmatpush1.msra.mxu0 0.0
        %3348 = vmatprep.subr.mxu0 0.0
        %3349 = vmatpush1.msra.mxu0 0.0
        %3350 = vmatprep.subr.mxu0 0.0
        %3351 = vmatpush1.msra.mxu0 0.0
        %3352 = vmatprep.subr.mxu0 0.0
        %3353 = vmatpush1.msra.mxu0 0.0
        %3354 = vmatprep.subr.mxu0 0.0
        %3355 = vmatpush1.msra.mxu0 0.0
        %3356 = vmatprep.subr.mxu0 0.0
        %3357 = vmatpush1.msra.mxu0 0.0
        %3358 = vmatprep.subr.mxu0 0.0
        %3359 = vmatpush1.msra.mxu0 0.0
        %3360 = vmatprep.subr.mxu0 0.0
        %3361 = vmatpush1.msra.mxu0 0.0
        %3362 = vmatprep.subr.mxu0 0.0
        %3363 = vmatpush1.msra.mxu0 0.0
        %3364 = vmatprep.subr.mxu0 0.0
        %3365 = vmatpush1.msra.mxu0 0.0
        %3366 = vmatprep.subr.mxu0 0.0
        %3367 = vmatpush1.msra.mxu0 0.0
        %3368 = vmatprep.subr.mxu0 0.0
        %3369 = vmatpush1.msra.mxu0 0.0
        %3370 = vmatprep.subr.mxu0 0.0
        %3371 = vmatpush1.msra.mxu0 0.0
        %3372 = vmatprep.subr.mxu0 0.0
        %3373 = vmatpush1.msra.mxu0 0.0
        %3374 = vmatprep.subr.mxu0 0.0
        %3375 = vmatpush1.msra.mxu0 0.0
        %3376 = vmatprep.mubr.f32.mxu0 0.0
        %3377 = vmatmul.mubr.f32.gmra.mrb[0].mxu0 %v3307
        %v3378 = vpop.f32.mrb[0].mxu0
        %v3379 = vadd.f32 %v3304, %v3378
        %v3380 = vpop.f32.mrb[0].mxu0
        %3381 = vmatprep.mubr.f32.mxu0 0.0
        %3382 = vmatmul.mubr.f32.gmra.mrb[0].mxu0 %v3310
        %v3383 = vpop.f32.mrb[0].mxu0
        %v3384 = vadd.f32 %v3304, %v3383
        %v3385 = vpop.f32.mrb[0].mxu0
        %3386 = vdwg.mxu0
        %v3387 = vmax.f32 %v3379, 0.0
        %v3388 = vmax.f32 %v3384, 0.0
        %v3389 = vld [vmem:[%s965] sm:$0xff]
        %v3390 = vld [vmem:[%s965 + $0x8] sm:$0xff]
        %v3391 = vld [vmem:[%s965 + $0x10] sm:$0xff]
        %v3392 = vld [vmem:[%s965 + $0x18] sm:$0xff]
        %v3393 = vld [vmem:[%s965 + $0x20] sm:$0xff]
        %v3394 = vld [vmem:[%s965 + $0x28] sm:$0xff]
        %v3395 = vld [vmem:[%s965 + $0x30] sm:$0xff]
        %v3396 = vld [vmem:[%s965 + $0x38] sm:$0xff]
        %v3397 = vld [vmem:[%s968] sm:$0x1]
        %v3399 = vlaneseq
        %v3400 = vshrl.u32 %v3399, 7
        %v3401 = vsub.s32 0, %v3400
        %v3402 = vrot.slane %v3397, %v3401
        %vm3404 = vcmask 523264
        %v3406 = vsel %vm3404, %v3387, 0
        %v3409 = vsel %vm3404, %v3388, 0
        %3411 = vmatprep.subr.mxu0 0.0
        %3412 = vmatpush1.msra.mxu0 %v3389
        %3413 = vmatprep.subr.mxu0 0.0
        %3414 = vmatpush1.msra.mxu0 %v3390
        %3415 = vmatprep.subr.mxu0 0.0
        %3416 = vmatpush1.msra.mxu0 %v3391
        %3417 = vmatprep.subr.mxu0 0.0
        %3418 = vmatpush1.msra.mxu0 %v3392
        %3419 = vmatprep.subr.mxu0 0.0
        %3420 = vmatpush1.msra.mxu0 %v3393
        %3421 = vmatprep.subr.mxu0 0.0
        %3422 = vmatpush1.msra.mxu0 %v3394
        %3423 = vmatprep.subr.mxu0 0.0
        %3424 = vmatpush1.msra.mxu0 %v3395
        %3425 = vmatprep.subr.mxu0 0.0
        %3426 = vmatpush1.msra.mxu0 %v3396
        %3427 = vmatprep.subr.mxu0 0.0
        %3428 = vmatpush1.msra.mxu0 0.0
        %3429 = vmatprep.subr.mxu0 0.0
        %3430 = vmatpush1.msra.mxu0 0.0
        %3431 = vmatprep.subr.mxu0 0.0
        %3432 = vmatpush1.msra.mxu0 0.0
        %3433 = vmatprep.subr.mxu0 0.0
        %3434 = vmatpush1.msra.mxu0 0.0
        %3435 = vmatprep.subr.mxu0 0.0
        %3436 = vmatpush1.msra.mxu0 0.0
        %3437 = vmatprep.subr.mxu0 0.0
        %3438 = vmatpush1.msra.mxu0 0.0
        %3439 = vmatprep.subr.mxu0 0.0
        %3440 = vmatpush1.msra.mxu0 0.0
        %3441 = vmatprep.subr.mxu0 0.0
        %3442 = vmatpush1.msra.mxu0 0.0
        %3443 = vmatprep.subr.mxu0 0.0
        %3444 = vmatpush1.msra.mxu0 0.0
        %3445 = vmatprep.subr.mxu0 0.0
        %3446 = vmatpush1.msra.mxu0 0.0
        %3447 = vmatprep.subr.mxu0 0.0
        %3448 = vmatpush1.msra.mxu0 0.0
        %3449 = vmatprep.subr.mxu0 0.0
        %3450 = vmatpush1.msra.mxu0 0.0
        %3451 = vmatprep.subr.mxu0 0.0
        %3452 = vmatpush1.msra.mxu0 0.0
        %3453 = vmatprep.subr.mxu0 0.0
        %3454 = vmatpush1.msra.mxu0 0.0
        %3455 = vmatprep.subr.mxu0 0.0
        %3456 = vmatpush1.msra.mxu0 0.0
        %3457 = vmatprep.subr.mxu0 0.0
        %3458 = vmatpush1.msra.mxu0 0.0
        %3459 = vmatprep.subr.mxu0 0.0
        %3460 = vmatpush1.msra.mxu0 0.0
        %3461 = vmatprep.subr.mxu0 0.0
        %3462 = vmatpush1.msra.mxu0 0.0
        %3463 = vmatprep.subr.mxu0 0.0
        %3464 = vmatpush1.msra.mxu0 0.0
        %3465 = vmatprep.subr.mxu0 0.0
        %3466 = vmatpush1.msra.mxu0 0.0
        %3467 = vmatprep.subr.mxu0 0.0
        %3468 = vmatpush1.msra.mxu0 0.0
        %3469 = vmatprep.subr.mxu0 0.0
        %3470 = vmatpush1.msra.mxu0 0.0
        %3471 = vmatprep.subr.mxu0 0.0
        %3472 = vmatpush1.msra.mxu0 0.0
        %3473 = vmatprep.subr.mxu0 0.0
        %3474 = vmatpush1.msra.mxu0 0.0
        %3475 = vmatprep.mubr.f32.mxu0 0.0
        %3476 = vmatmul.mubr.f32.gmra.mrb[0].mxu0 %v3406
        %v3477 = vpop.f32.mrb[0].mxu0
        %v3478 = vadd.f32 %v3402, %v3477
        %v3479 = vpop.f32.mrb[0].mxu0
        %3480 = vmatprep.mubr.f32.mxu0 0.0
        %3481 = vmatmul.mubr.f32.gmra.mrb[0].mxu0 %v3409
        %v3482 = vpop.f32.mrb[0].mxu0
        %v3483 = vadd.f32 %v3402, %v3482
        %v3484 = vpop.f32.mrb[0].mxu0
        %3485 = vdwg.mxu0
        %v3486 = vadd.f32 %v3285, %v3478
        %v3487 = vadd.f32 %v3286, %v3483
        %v3488 = vsel %vm1004, %v3486, 0.0
        %3489 = vadd.xlane.f32.xlu0 %v3488
        %v3490 = vpop.xlane.xlu0 %3489
        %v3491 = vsel %vm1004, %v3487, 0.0
        %3492 = vadd.xlane.f32.xlu0 %v3491
        %v3493 = vpop.xlane.xlu0 %3492
        %v3494 = vmul.f32 %v3490, %v2033
        %v3495 = vmul.f32 %v3493, %v2033
        %v3496 = vsub.f32 %v3486, %v3494
        %v3497 = vsub.f32 %v3487, %v3495
        %v3498 = vmul.f32 %v3496, %v3496
        %v3499 = vmul.f32 %v3497, %v3497
        %v3500 = vsel %vm1004, %v3498, 0.0
        %3501 = vadd.xlane.f32.xlu0 %v3500
        %v3502 = vpop.xlane.xlu0 %3501
        %v3503 = vsel %vm1004, %v3499, 0.0
        %3504 = vadd.xlane.f32.xlu0 %v3503
        %v3505 = vpop.xlane.xlu0 %3504
        %v3506 = vmul.f32 %v3502, %v2033
        %v3507 = vmul.f32 %v3505, %v2033
        %v3508 = vadd.f32 %v3506, 1e-05
        %v3509 = vadd.f32 %v3507, 1e-05
        %v3510 = vrsqrt.pop %v3508
        %v3511 = vrsqrt.pop %v3509
        %v3512 = vmul.f32 %v3496, %v3510
        %v3513 = vmul.f32 %v3497, %v3511
        %v3514 = vld [vmem:[%s971] sm:$0x1]
        %v3516 = vlaneseq
        %v3517 = vshrl.u32 %v3516, 7
        %v3518 = vsub.s32 0, %v3517
        %v3519 = vrot.slane %v3514, %v3518
        %v3521 = vmul.f32 %v3512, %v3519
        %v3522 = vmul.f32 %v3513, %v3519
        %v3523 = vld [vmem:[%s974] sm:$0x1]
        %v3525 = vlaneseq
        %v3526 = vshrl.u32 %v3525, 7
        %v3527 = vsub.s32 0, %v3526
        %v3528 = vrot.slane %v3523, %v3527
        %v3530 = vadd.f32 %v3521, %v3528
        %v3531 = vadd.f32 %v3522, %v3528
        %3532 = vst.msk [vmem:[#allocation2] sm:$0xff] %vm1004, %v3530
        %3533 = vst.msk [vmem:[#allocation2 + $0x8] sm:$0xff] %vm1004, %v3531
        %3534 = vst.msk [vmem:[%s22] sm:$0xff] %vm1004, %v3530
        %3535 = vst.msk [vmem:[%s22 + $0x8] sm:$0xff] %vm1004, %v3531
        %s3536 = sand.u32 %s619, 1
        %s3537 = scalar_lea.sflag [#allocation4], %s3536
        %s3538 = sand.u32 %s619, 1
        %s3539 = smul.addr %s3538, 16
        %s3540 = scalar_lea.vmem [#allocation3], %s3539
        // Predicated region
        $region113: #{transformer_model_decoder.1} parent=107 // pred_check
          %p3541 = pneg %p603
        $region114: #{transformer_model_decoder.1} parent=107 // pred_check_branch
          %3543 = sbr.rel (%p3541) target = $region116
        $region115: #{transformer_model_decoder.1} parent=107 // pred_region
          _
        $region116: #{transformer_model_decoder.1} parent=107 // pred_fallthru
          _
        // Predicated region
        $region117: #{transformer_model_decoder.1} parent=107 // pred_check
          %p3544 = pneg %p629
        $region118: #{transformer_model_decoder.1} parent=107 // pred_check_branch
          %3546 = sbr.rel (%p3544) target = $region120
        $region119: #{transformer_model_decoder.1} parent=107 // pred_region
          %s3548 = ssub.s32 256, 256
          %3549 = vsyncadd %s3537, %s3548
          %s3550 = smul.addr %s38, 2
          %s3551 = smul.addr %s3550, 128
          %s3552 = scalar_lea.hbm %s23, %s3551
          %s3553 = sshll.u32 %s3540, 4
          %s3554 = int_to_ptr.vmem [resolvable:$true] %s3553
          %3559 = dma.vmem_to_hbm [thread:$0]  %s3554, 256, %s3552, %s3537, 128, 128, 8
        $region120: #{transformer_model_decoder.1} parent=107 // pred_fallthru
          _
        // Predicated region
        $region121: #{transformer_model_decoder.1} parent=107 // pred_check
          %p3560 = pneg %p603
        $region122: #{transformer_model_decoder.1} parent=107 // pred_check_branch
          %3562 = sbr.rel (%p3560) target = $region124
        $region123: #{transformer_model_decoder.1} parent=107 // pred_region
          _
        $region124: #{transformer_model_decoder.1} parent=107 // pred_fallthru
          _
      $region108: #{transformer_model_decoder.1} parent=5 // pred_fallthru
        _
      %p3563 = scmp.le.s32.totalorder 2, %s33
      // Predicated region
      $region125: #{transformer_model_decoder.1} parent=5 // pred_check
        %p3564 = pneg %p3563
      $region126: #{transformer_model_decoder.1} parent=5 // pred_check_branch
        %3566 = sbr.rel (%p3564) target = $region128
      $region127: #{transformer_model_decoder.1} parent=5 // pred_region
        %s3567 = ssub.s32 %s33, 2
        // Predicated region
        $region129: #{transformer_model_decoder.1} parent=127 // pred_check
          %p3568 = pneg %p635
        $region130: #{transformer_model_decoder.1} parent=127 // pred_check_branch
          %3570 = sbr.rel (%p3568) target = $region132
        $region131: #{transformer_model_decoder.1} parent=127 // pred_region
          %s3571 = sand.u32 %s620, 1
          %s3572 = scalar_lea.sflag [#allocation4], %s3571
          %s3573 = sand.u32 %s620, 1
          %s3574 = smul.addr %s3573, 16
          %s3575 = scalar_lea.vmem [#allocation3], %s3574
          %3576 = dma.done %s3572, 256
        $region132: #{transformer_model_decoder.1} parent=127 // pred_fallthru
          _
      $region128: #{transformer_model_decoder.1} parent=5 // pred_fallthru
        _
    $region6: #{transformer_model_decoder.1} parent=1 // loop_footer
      %s37 = sadd.s32 1, %s33
    $region7: #{transformer_model_decoder.1} parent=1 // loop_footer_branch
      %32 = sbr.rel target = $region3
    $region8: #{transformer_model_decoder.1} parent=1 // loop_exit
      _
    %3577 = vsyncpa [#allocation4], 1
    %s3578 = scalar_lea.sflag [#allocation4], 1
    %3579 = vsyncpa %s3578, 1

</llo_original>
